<compile_context>
chip_gen: v5e
topology: v5e:2x2
jax: 0.10.0
libtpu: 0.0.40
codegen_flags: <defaults>
</compile_context>

<pallas_src>
import functools

import jax
import jax.numpy as jnp
from jax.experimental import pallas as pl
from jax.experimental.pallas import tpu as pltpu


# ----------------------------------------------------------------------------
# Config / synthetic parameter init (stand-in for the HF teacher / student)
# ----------------------------------------------------------------------------
class Config:
    batch = 2
    teacher_seq = 8
    student_seq = 8
    teacher_dim = 64
    student_dim = 32
    n_layers = 2                    # teacher_num_layers == student_num_layers
    num_kv_heads = 2
    teacher_kv_dim = 32             # -> teacher head_dim 16
    student_kv_dim = 16             # -> student head_dim 8
    vocab = 128
    max_pos = 32
    mlp_mult = 4


def get_kept_layers(teacher_layers, student_layers):
    # Evenly-spaced layer selection (identity when counts match).
    return [int(round(i * (teacher_layers - 1) / max(student_layers - 1, 1)))
            for i in range(student_layers)]


def init_params(key, cfg):
    def nrm(k, shape):
        return jax.random.normal(k, shape, jnp.float32) * 0.02

    keys = iter(jax.random.split(key, 256))
    p = {}
    p['teacher_embed'] = nrm(next(keys), (cfg.vocab, cfg.teacher_dim))
    p['teacher_layers'] = []
    for _ in range(cfg.n_layers):
        p['teacher_layers'].append({
            'wk': nrm(next(keys), (cfg.teacher_dim, cfg.teacher_kv_dim)),
            'bk': jnp.zeros((cfg.teacher_kv_dim,), jnp.float32),
            'wv': nrm(next(keys), (cfg.teacher_dim, cfg.teacher_kv_dim)),
            'bv': jnp.zeros((cfg.teacher_kv_dim,), jnp.float32),
            'w1': nrm(next(keys), (cfg.teacher_dim, cfg.mlp_mult * cfg.teacher_dim)),
            'b1': jnp.zeros((cfg.mlp_mult * cfg.teacher_dim,), jnp.float32),
            'w2': nrm(next(keys), (cfg.mlp_mult * cfg.teacher_dim, cfg.teacher_dim)),
            'b2': jnp.zeros((cfg.teacher_dim,), jnp.float32),
        })
    # embedding_proj: nn.Linear(teacher_kv_dim, student_kv_dim) per student layer
    p['embedding_proj'] = []
    for _ in range(cfg.n_layers):
        p['embedding_proj'].append({
            'w': nrm(next(keys), (cfg.teacher_kv_dim, cfg.student_kv_dim)),
            'b': jnp.zeros((cfg.student_kv_dim,), jnp.float32),
        })
    p['student_embed'] = nrm(next(keys), (cfg.vocab, cfg.student_dim))
    p['student_pos_embed'] = nrm(next(keys), (cfg.max_pos, cfg.student_dim))
    p['student_layers'] = []
    for _ in range(cfg.n_layers):
        p['student_layers'].append({
            'wq': nrm(next(keys), (cfg.student_dim, cfg.student_kv_dim)),
            'bq': jnp.zeros((cfg.student_kv_dim,), jnp.float32),
            'wk': nrm(next(keys), (cfg.student_dim, cfg.student_kv_dim)),
            'bk': jnp.zeros((cfg.student_kv_dim,), jnp.float32),
            'wv': nrm(next(keys), (cfg.student_dim, cfg.student_kv_dim)),
            'bv': jnp.zeros((cfg.student_kv_dim,), jnp.float32),
            'wo': nrm(next(keys), (cfg.student_kv_dim, cfg.student_dim)),
            'bo': jnp.zeros((cfg.student_dim,), jnp.float32),
            'w1': nrm(next(keys), (cfg.student_dim, cfg.mlp_mult * cfg.student_dim)),
            'b1': jnp.zeros((cfg.mlp_mult * cfg.student_dim,), jnp.float32),
            'w2': nrm(next(keys), (cfg.mlp_mult * cfg.student_dim, cfg.student_dim)),
            'b2': jnp.zeros((cfg.student_dim,), jnp.float32),
        })
    p['lm_head_w'] = nrm(next(keys), (cfg.student_dim, cfg.vocab))
    p['lm_head_b'] = jnp.zeros((cfg.vocab,), jnp.float32)
    return p


def pack_params(params, cfg):
    """One-time weight packing:
      * fold the teacher K/V Linear with the per-student-layer embedding_proj Linear
        (exact, both affine) and fuse K|V into a single (Dt, 2*KV) matmul per layer;
      * fuse student Q|K|V into one (Ds, 3*KV) matmul with the softmax scale folded
        into the Q columns;
      * stack per-layer weights; matmul operands in bf16, biases in f32."""
    kept = tuple(get_kept_layers(cfg.n_layers, cfg.n_layers))
    bf = jnp.bfloat16
    tl = params['teacher_layers']
    ep = params['embedding_proj']
    sl = params['student_layers']
    head_dim = cfg.student_kv_dim // cfg.num_kv_heads
    scale = 1.0 / float(head_dim) ** 0.5

    t_wkv, t_bkv = [], []
    for si, t in enumerate(kept):
        P, pb = ep[si]['w'], ep[si]['b']
        wk_f, bk_f = tl[t]['wk'] @ P, tl[t]['bk'] @ P + pb
        wv_f, bv_f = tl[t]['wv'] @ P, tl[t]['bv'] @ P + pb
        t_wkv.append(jnp.concatenate([wk_f, wv_f], axis=1))
        t_bkv.append(jnp.concatenate([bk_f, bv_f]))

    s_wqkv, s_bqkv = [], []
    for l in sl:
        s_wqkv.append(jnp.concatenate([l['wq'] * scale, l['wk'], l['wv']], axis=1))
        s_bqkv.append(jnp.concatenate([l['bq'] * scale, l['bk'], l['bv']]))

    packed = {
        'kept': kept,
        'teacher_embed': params['teacher_embed'],
        'student_embed': params['student_embed'],
        'student_pos_embed': params['student_pos_embed'],
        # teacher (folded + fused KV proj indexed by student layer; MLP by teacher layer)
        't_wkv': jnp.stack(t_wkv).astype(bf),
        't_bkv': jnp.stack(t_bkv)[:, None, :],
        't_w1': jnp.stack([l['w1'] for l in tl]).astype(bf),
        't_b1': jnp.stack([l['b1'] for l in tl])[:, None, :],
        't_w2': jnp.stack([l['w2'] for l in tl]).astype(bf),
        't_b2': jnp.stack([l['b2'] for l in tl])[:, None, :],
        # student (fused QKV, scale folded into Q)
        's_wqkv': jnp.stack(s_wqkv).astype(bf),
        's_bqkv': jnp.stack(s_bqkv)[:, None, :],
        's_wo': jnp.stack([l['wo'] for l in sl]).astype(bf),
        's_bo': jnp.stack([l['bo'] for l in sl])[:, None, :],
        's_w1': jnp.stack([l['w1'] for l in sl]).astype(bf),
        's_b1': jnp.stack([l['b1'] for l in sl])[:, None, :],
        's_w2': jnp.stack([l['w2'] for l in sl]).astype(bf),
        's_b2': jnp.stack([l['b2'] for l in sl])[:, None, :],
        'lm_w': params['lm_head_w'].astype(bf),
        'lm_b': params['lm_head_b'][None, :],
    }
    return packed


def _const_spec(arr):
    nd = arr.ndim

    def idx(i):
        return (0,) * nd

    return pl.BlockSpec(arr.shape, idx)


# ----------------------------------------------------------------------------
# Single fused kernel: teacher prefill + KV projection + student stack + loss
# ----------------------------------------------------------------------------
def _two_stage_kernel(t_ids_ref, s_ids_ref, pos_ids_ref, tmask_ref, smask_ref,
                      labels_ref,
                      t_embed_ref, s_embed_ref, p_embed_ref,
                      t_wkv_ref, t_bkv_ref, t_w1_ref, t_b1_ref, t_w2_ref, t_b2_ref,
                      s_wqkv_ref, s_bqkv_ref, s_wo_ref, s_bo_ref,
                      s_w1_ref, s_b1_ref, s_w2_ref, s_b2_ref,
                      lm_w_ref, lm_b_ref,
                      logits_ref, loss_ref,
                      *, kept, batch, lt, ls, n_layers, n_heads, head_dim,
                      kv_dim, vocab, max_pos):
    f32 = jnp.float32
    bf16 = jnp.bfloat16
    rows_t = batch * lt
    rows_s = batch * ls

    # -------------------- teacher prefill (batch folded into rows) ----------
    # In-kernel token-embedding gather via one-hot matmul (no XLA gather / HBM h0).
    oh_t = (jax.lax.broadcasted_iota(jnp.int32, (rows_t, vocab), 1)
            == t_ids_ref[...]).astype(f32)
    h_t = jnp.dot(oh_t, t_embed_ref[...], preferred_element_type=f32)    # (B*Lt, Dt)

    # Projected KV cache (bf16) stays entirely in VMEM/vregs — never touches HBM.
    k_cache = [None] * n_layers
    v_cache = [None] * n_layers
    n_used = max(kept) + 1
    for t in range(n_used):
        hb = h_t.astype(bf16)
        for si in [i for i, kl in enumerate(kept) if kl == t]:
            # folded (teacher K/V Linear o embedding_proj), K|V fused in one matmul
            kv = jnp.dot(hb, t_wkv_ref[si], preferred_element_type=f32) + t_bkv_ref[si]
            k_cache[si] = kv[:, :kv_dim].astype(bf16)                    # (B*Lt, KV)
            v_cache[si] = kv[:, kv_dim:].astype(bf16)
        if t + 1 < n_used:  # last used layer's MLP output is never read
            mid = jnp.dot(hb, t_w1_ref[t], preferred_element_type=f32) + t_b1_ref[t]
            mid = jax.nn.gelu(mid, approximate=True)
            h_t = h_t + jnp.dot(mid.astype(bf16), t_w2_ref[t],
                                preferred_element_type=f32) + t_b2_ref[t]

    # -------------------- student (batch folded; attention per batch) -------
    oh_s = (jax.lax.broadcasted_iota(jnp.int32, (rows_s, vocab), 1)
            == s_ids_ref[...]).astype(f32)
    h = jnp.dot(oh_s, s_embed_ref[...], preferred_element_type=f32)      # (B*Ls, Ds)
    oh_p = (jax.lax.broadcasted_iota(jnp.int32, (rows_s, max_pos), 1)
            == pos_ids_ref[...]).astype(f32)
    h = h + jnp.dot(oh_p, p_embed_ref[...], preferred_element_type=f32)

    # Attention bias built in-kernel (teacher-mask gate + causal student mask).
    qi = jax.lax.broadcasted_iota(jnp.int32, (ls, ls), 0)
    ki = jax.lax.broadcasted_iota(jnp.int32, (ls, ls), 1)
    causal = ki <= qi
    tmask = tmask_ref[...]                                               # (B, Lt)
    smask = smask_ref[...]                                               # (B, Ls)
    bias_t, bias_s = [], []
    for b in range(batch):
        bias_t.append(jnp.where(tmask[b:b + 1, :] > 0.5, 0.0, -1e9))     # (1, Lt)
        bias_s.append(jnp.where(causal & (smask[b:b + 1, :] > 0.5), 0.0, -1e9))

    dn = (((1,), (1,)), ((), ()))                                        # q . k^T
    for l in range(n_layers):
        hb = h.astype(bf16)
        qkv = jnp.dot(hb, s_wqkv_ref[l], preferred_element_type=f32) + s_bqkv_ref[l]
        q_all = qkv[:, :kv_dim].astype(bf16)        # softmax scale pre-folded in wq/bq
        k_all = qkv[:, kv_dim:2 * kv_dim].astype(bf16)
        v_all = qkv[:, 2 * kv_dim:].astype(bf16)
        kt_l = k_cache[l]
        vt_l = v_cache[l]

        attn_rows = []
        for b in range(batch):
            q_b = q_all[b * ls:(b + 1) * ls, :]
            kn_b = k_all[b * ls:(b + 1) * ls, :]
            vn_b = v_all[b * ls:(b + 1) * ls, :]
            kt_b = kt_l[b * lt:(b + 1) * lt, :]
            vt_b = vt_l[b * lt:(b + 1) * lt, :]
            head_outs = []
            # NOTE: heads remain a tiny unrolled loop (n_heads=2, head_dim=8); fully
            # merging heads needs an in-kernel (Ls,H,Dh)->(H,Ls,Dh) relayout that is
            # not worth it at these sizes.
            for hh in range(n_heads):
                cs = slice(hh * head_dim, (hh + 1) * head_dim)
                # Two-block softmax: teacher-cache keys + new student keys (no concat).
                s_t = jax.lax.dot_general(q_b[:, cs], kt_b[:, cs], dn,
                                          preferred_element_type=f32) + bias_t[b]
                s_s = jax.lax.dot_general(q_b[:, cs], kn_b[:, cs], dn,
                                          preferred_element_type=f32) + bias_s[b]
                m = jnp.maximum(jnp.max(s_t, axis=-1, keepdims=True),
                                jnp.max(s_s, axis=-1, keepdims=True))
                p_t = jnp.exp(s_t - m)
                p_s = jnp.exp(s_s - m)
                denom = (jnp.sum(p_t, axis=-1, keepdims=True)
                         + jnp.sum(p_s, axis=-1, keepdims=True))
                o_h = (jnp.dot(p_t.astype(bf16), vt_b[:, cs],
                               preferred_element_type=f32)
                       + jnp.dot(p_s.astype(bf16), vn_b[:, cs],
                                 preferred_element_type=f32))
                head_outs.append(o_h * pl.reciprocal(denom, approx=True))
            attn_rows.append(jnp.concatenate(head_outs, axis=-1))        # (Ls, KV)
        attn = jnp.concatenate(attn_rows, axis=0)                        # (B*Ls, KV)

        # Single output projection per layer for all batches / heads (bf16 MXU).
        h = h + jnp.dot(attn.astype(bf16), s_wo_ref[l],
                        preferred_element_type=f32) + s_bo_ref[l]

        hb = h.astype(bf16)
        mid = jnp.dot(hb, s_w1_ref[l], preferred_element_type=f32) + s_b1_ref[l]
        mid = jax.nn.gelu(mid, approximate=True)
        h = h + jnp.dot(mid.astype(bf16), s_w2_ref[l],
                        preferred_element_type=f32) + s_b2_ref[l]

    # -------------------- lm_head + shifted CE (labels pre-shifted) ---------
    logits = jnp.dot(h.astype(bf16), lm_w_ref[...],
                     preferred_element_type=f32) + lm_b_ref[...]         # (B*Ls, V)
    logits_ref[...] = logits.astype(logits_ref.dtype)                    # lane-dense

    lab = labels_ref[...]                                                # (B*Ls, 1)
    mx = jnp.max(logits, axis=-1, keepdims=True)
    lse = jnp.log(jnp.sum(jnp.exp(logits - mx), axis=-1, keepdims=True)) + mx
    col = jax.lax.broadcasted_iota(jnp.int32, logits.shape, 1)
    onehot = (col == lab).astype(f32)
    lab_logit = jnp.sum(onehot * logits, axis=-1, keepdims=True)
    valid = (lab != -100).astype(f32)
    nll_sum = jnp.sum((lse - lab_logit) * valid, keepdims=True)          # (1, 1)
    count = jnp.sum(valid, keepdims=True)                                # (1, 1)
    loss_ref[...] = nll_sum / jnp.maximum(count, 1.0)


# ----------------------------------------------------------------------------
# TwoStageModel.forward
# ----------------------------------------------------------------------------
def two_stage_forward(packed, cfg, input_ids, attention_mask, labels,
                      teacher_input_ids, teacher_attention_mask):
    B, Ls = input_ids.shape
    Lt = teacher_input_ids.shape[1]
    NL = cfg.n_layers
    KV = cfg.student_kv_dim
    V = cfg.vocab
    Hs = cfg.num_kv_heads
    Dh = KV // Hs

    # generate_masks (tiny scalar work; no dedicated kernel needed)
    prefix = jnp.sum(teacher_attention_mask.astype(jnp.int32), axis=1)
    position_ids = jnp.arange(Ls, dtype=jnp.int32)[None, :] + prefix[:, None]

    t_ids = teacher_input_ids.astype(jnp.int32).reshape(B * Lt, 1)
    s_ids = input_ids.astype(jnp.int32).reshape(B * Ls, 1)
    p_ids = position_ids.reshape(B * Ls, 1)
    tmask = teacher_attention_mask.astype(jnp.float32)
    smask = attention_mask.astype(jnp.float32)

    # Pre-shift labels (shift_logits[i] vs labels[i+1]; last position ignored).
    if labels is None:
        lab_shift = jnp.full((B * Ls, 1), -100, jnp.int32)
    else:
        lab = labels.astype(jnp.int32)
        lab_shift = jnp.concatenate(
            [lab[:, 1:], jnp.full((B, 1), -100, jnp.int32)], axis=1).reshape(B * Ls, 1)

    kernel = functools.partial(
        _two_stage_kernel, kept=packed['kept'], batch=B, lt=Lt, ls=Ls,
        n_layers=NL, n_heads=Hs, head_dim=Dh, kv_dim=KV, vocab=V,
        max_pos=cfg.max_pos)

    ops = (t_ids, s_ids, p_ids, tmask, smask, lab_shift,
           packed['teacher_embed'], packed['student_embed'],
           packed['student_pos_embed'],
           packed['t_wkv'], packed['t_bkv'], packed['t_w1'], packed['t_b1'],
           packed['t_w2'], packed['t_b2'],
           packed['s_wqkv'], packed['s_bqkv'], packed['s_wo'], packed['s_bo'],
           packed['s_w1'], packed['s_b1'], packed['s_w2'], packed['s_b2'],
           packed['lm_w'], packed['lm_b'])

    logits2d, loss11 = pl.pallas_call(
        kernel,
        out_shape=(jax.ShapeDtypeStruct((B * Ls, V), jnp.float32),
                   jax.ShapeDtypeStruct((1, 1), jnp.float32)),
        grid=(1,),
        in_specs=[_const_spec(a) for a in ops],
        out_specs=(pl.BlockSpec((B * Ls, V), lambda i: (0, 0)),
                   pl.BlockSpec((1, 1), lambda i: (0, 0))),
        compiler_params=pltpu.CompilerParams(dimension_semantics=("arbitrary",)),
    )(*ops)

    logits = logits2d.reshape(B, Ls, V)
    loss = loss11[0, 0] if labels is not None else None
    return {'logits': logits, 'loss': loss}
    # TODO(synk): LoRA/PEFT wrapping, DynamicCache bookkeeping, tokenizers and the
    # autoregressive .generate() loop of the HF submodules have no Pallas equivalent.


if __name__ == "__main__":
    cfg = Config()
    key = jax.random.PRNGKey(0)
    k_ids, k_tids, k_params = jax.random.split(key, 3)

    input_ids = jax.random.randint(k_ids, (cfg.batch, cfg.student_seq), 0, cfg.vocab, jnp.int32)
    teacher_input_ids = jax.random.randint(k_tids, (cfg.batch, cfg.teacher_seq), 0, cfg.vocab, jnp.int32)
    attention_mask = jnp.ones((cfg.batch, cfg.student_seq), jnp.int32)
    # Give batch item 1 a shorter teacher prefix to exercise prefix-length logic.
    teacher_attention_mask = jnp.ones((cfg.batch, cfg.teacher_seq), jnp.int32)
    teacher_attention_mask = teacher_attention_mask.at[1, -2:].set(0)
    labels = input_ids

    params = init_params(k_params, cfg)
    packed = pack_params(params, cfg)   # one-time stacking / QKV & KV fuse / affine fold

    out = two_stage_forward(packed, cfg, input_ids, attention_mask, labels,
                            teacher_input_ids, teacher_attention_mask)
    jax.block_until_ready(out['logits'])
    jax.block_until_ready(out['loss'])
    assert out['logits'].shape == (cfg.batch, cfg.student_seq, cfg.vocab)
    assert out['loss'].shape == ()
    assert bool(jnp.isfinite(out['loss']))
    print("KERNEL_OK")
</pallas_src>

<mosaic_0001>
module attributes {stable_mosaic.version = 11 : i64} {
  func.func @_two_stage_kernel(%arg0: i32, %arg1: memref<16x1xi32, #tpu.memory_space<vmem>>, %arg2: memref<16x1xi32, #tpu.memory_space<vmem>>, %arg3: memref<16x1xi32, #tpu.memory_space<vmem>>, %arg4: memref<2x8xf32, #tpu.memory_space<vmem>>, %arg5: memref<2x8xf32, #tpu.memory_space<vmem>>, %arg6: memref<16x1xi32, #tpu.memory_space<vmem>>, %arg7: memref<128x64xf32, #tpu.memory_space<vmem>>, %arg8: memref<128x32xf32, #tpu.memory_space<vmem>>, %arg9: memref<32x32xf32, #tpu.memory_space<vmem>>, %arg10: memref<2x64x32xbf16, #tpu.memory_space<vmem>>, %arg11: memref<2x1x32xf32, #tpu.memory_space<vmem>>, %arg12: memref<2x64x256xbf16, #tpu.memory_space<vmem>>, %arg13: memref<2x1x256xf32, #tpu.memory_space<vmem>>, %arg14: memref<2x256x64xbf16, #tpu.memory_space<vmem>>, %arg15: memref<2x1x64xf32, #tpu.memory_space<vmem>>, %arg16: memref<2x32x48xbf16, #tpu.memory_space<vmem>>, %arg17: memref<2x1x48xf32, #tpu.memory_space<vmem>>, %arg18: memref<2x16x32xbf16, #tpu.memory_space<vmem>>, %arg19: memref<2x1x32xf32, #tpu.memory_space<vmem>>, %arg20: memref<2x32x128xbf16, #tpu.memory_space<vmem>>, %arg21: memref<2x1x128xf32, #tpu.memory_space<vmem>>, %arg22: memref<2x128x32xbf16, #tpu.memory_space<vmem>>, %arg23: memref<2x1x32xf32, #tpu.memory_space<vmem>>, %arg24: memref<32x128xbf16, #tpu.memory_space<vmem>>, %arg25: memref<1x128xf32, #tpu.memory_space<vmem>>, %arg26: memref<16x128xf32, #tpu.memory_space<vmem>>, %arg27: memref<1x1xf32, #tpu.memory_space<vmem>>) attributes {dimension_semantics = [#tpu.dimension_semantics<arbitrary>], iteration_bounds = array<i64: 1>, scalar_prefetch = 0 : i64, scratch_operands = 0 : i64, tpu.core_type = #tpu.core_type<tc>, window_params = [{pipeline_mode = #tpu.pipeline_mode<synchronous>, transform_indices = @transform_0, window_bounds = array<i64: 16, 1>}, {pipeline_mode = #tpu.pipeline_mode<synchronous>, transform_indices = @transform_1, window_bounds = array<i64: 16, 1>}, {pipeline_mode = #tpu.pipeline_mode<synchronous>, transform_indices = @transform_2, window_bounds = array<i64: 16, 1>}, {pipeline_mode = #tpu.pipeline_mode<synchronous>, transform_indices = @transform_3, window_bounds = array<i64: 2, 8>}, {pipeline_mode = #tpu.pipeline_mode<synchronous>, transform_indices = @transform_4, window_bounds = array<i64: 2, 8>}, {pipeline_mode = #tpu.pipeline_mode<synchronous>, transform_indices = @transform_5, window_bounds = array<i64: 16, 1>}, {pipeline_mode = #tpu.pipeline_mode<synchronous>, transform_indices = @transform_6, window_bounds = array<i64: 128, 64>}, {pipeline_mode = #tpu.pipeline_mode<synchronous>, transform_indices = @transform_7, window_bounds = array<i64: 128, 32>}, {pipeline_mode = #tpu.pipeline_mode<synchronous>, transform_indices = @transform_8, window_bounds = array<i64: 32, 32>}, {pipeline_mode = #tpu.pipeline_mode<synchronous>, transform_indices = @transform_9, window_bounds = array<i64: 2, 64, 32>}, {pipeline_mode = #tpu.pipeline_mode<synchronous>, transform_indices = @transform_10, window_bounds = array<i64: 2, 1, 32>}, {pipeline_mode = #tpu.pipeline_mode<synchronous>, transform_indices = @transform_11, window_bounds = array<i64: 2, 64, 256>}, {pipeline_mode = #tpu.pipeline_mode<synchronous>, transform_indices = @transform_12, window_bounds = array<i64: 2, 1, 256>}, {pipeline_mode = #tpu.pipeline_mode<synchronous>, transform_indices = @transform_13, window_bounds = array<i64: 2, 256, 64>}, {pipeline_mode = #tpu.pipeline_mode<synchronous>, transform_indices = @transform_14, window_bounds = array<i64: 2, 1, 64>}, {pipeline_mode = #tpu.pipeline_mode<synchronous>, transform_indices = @transform_15, window_bounds = array<i64: 2, 32, 48>}, {pipeline_mode = #tpu.pipeline_mode<synchronous>, transform_indices = @transform_16, window_bounds = array<i64: 2, 1, 48>}, {pipeline_mode = #tpu.pipeline_mode<synchronous>, transform_indices = @transform_17, window_bounds = array<i64: 2, 16, 32>}, {pipeline_mode = #tpu.pipeline_mode<synchronous>, transform_indices = @transform_18, window_bounds = array<i64: 2, 1, 32>}, {pipeline_mode = #tpu.pipeline_mode<synchronous>, transform_indices = @transform_19, window_bounds = array<i64: 2, 32, 128>}, {pipeline_mode = #tpu.pipeline_mode<synchronous>, transform_indices = @transform_20, window_bounds = array<i64: 2, 1, 128>}, {pipeline_mode = #tpu.pipeline_mode<synchronous>, transform_indices = @transform_21, window_bounds = array<i64: 2, 128, 32>}, {pipeline_mode = #tpu.pipeline_mode<synchronous>, transform_indices = @transform_22, window_bounds = array<i64: 2, 1, 32>}, {pipeline_mode = #tpu.pipeline_mode<synchronous>, transform_indices = @transform_23, window_bounds = array<i64: 32, 128>}, {pipeline_mode = #tpu.pipeline_mode<synchronous>, transform_indices = @transform_24, window_bounds = array<i64: 1, 128>}, {pipeline_mode = #tpu.pipeline_mode<synchronous>, transform_indices = @transform_25, window_bounds = array<i64: 16, 128>}, {pipeline_mode = #tpu.pipeline_mode<synchronous>, transform_indices = @transform_26, window_bounds = array<i64: 1, 1>}]} {
    %0 = tpu.iota {dimensions = array<i32: 1>} : vector<16x128xi32>
    %c0 = arith.constant 0 : index
    %c0_0 = arith.constant 0 : index
    %1 = vector.load %arg1[%c0, %c0_0] : memref<16x1xi32, #tpu.memory_space<vmem>>, vector<16x1xi32>
    %2 = vector.broadcast %1 : vector<16x1xi32> to vector<16x128xi32>
    %3 = arith.cmpi eq, %0, %2 : vector<16x128xi32>
    %4 = arith.extui %3 : vector<16x128xi1> to vector<16x128xi32>
    %5 = arith.sitofp %4 : vector<16x128xi32> to vector<16x128xf32>
    %c0_1 = arith.constant 0 : index
    %c0_2 = arith.constant 0 : index
    %6 = vector.load %arg7[%c0_1, %c0_2] : memref<128x64xf32, #tpu.memory_space<vmem>>, vector<128x64xf32>
    %cst = arith.constant dense<0.000000e+00> : vector<16x64xf32>
    %7 = tpu.matmul %5, %6, %cst {dimension_numbers = #tpu.dot_dimension_numbers<[1], [0], [0], [1], [0, 0, 1, 1], [], []>} : vector<16x128xf32>, vector<128x64xf32>, vector<16x64xf32> -> vector<16x64xf32>
    %8 = arith.truncf %7 : vector<16x64xf32> to vector<16x64xbf16>
    %c0_3 = arith.constant 0 : index
    %c0_4 = arith.constant 0 : index
    %c0_5 = arith.constant 0 : index
    %9 = vector.load %arg10[%c0_3, %c0_4, %c0_5] : memref<2x64x32xbf16, #tpu.memory_space<vmem>>, vector<1x64x32xbf16>
    %10 = vector.shape_cast %9 : vector<1x64x32xbf16> to vector<64x32xbf16>
    %cst_6 = arith.constant dense<0.000000e+00> : vector<16x32xf32>
    %11 = tpu.matmul %8, %10, %cst_6 {dimension_numbers = #tpu.dot_dimension_numbers<[1], [0], [0], [1], [0, 0, 1, 1], [], []>} : vector<16x64xbf16>, vector<64x32xbf16>, vector<16x32xf32> -> vector<16x32xf32>
    %c0_7 = arith.constant 0 : index
    %c0_8 = arith.constant 0 : index
    %c0_9 = arith.constant 0 : index
    %12 = vector.load %arg11[%c0_7, %c0_8, %c0_9] : memref<2x1x32xf32, #tpu.memory_space<vmem>>, vector<1x1x32xf32>
    %13 = vector.shape_cast %12 : vector<1x1x32xf32> to vector<1x32xf32>
    %14 = vector.broadcast %13 : vector<1x32xf32> to vector<16x32xf32>
    %15 = arith.addf %11, %14 : vector<16x32xf32>
    %16 = vector.extract_strided_slice %15 {offsets = [0, 0], sizes = [16, 16], strides = [1, 1]} : vector<16x32xf32> to vector<16x16xf32>
    %17 = arith.truncf %16 : vector<16x16xf32> to vector<16x16xbf16>
    %18 = vector.extract_strided_slice %15 {offsets = [0, 16], sizes = [16, 16], strides = [1, 1]} : vector<16x32xf32> to vector<16x16xf32>
    %19 = arith.truncf %18 : vector<16x16xf32> to vector<16x16xbf16>
    %c0_10 = arith.constant 0 : index
    %c0_11 = arith.constant 0 : index
    %c0_12 = arith.constant 0 : index
    %20 = vector.load %arg12[%c0_10, %c0_11, %c0_12] : memref<2x64x256xbf16, #tpu.memory_space<vmem>>, vector<1x64x256xbf16>
    %21 = vector.shape_cast %20 : vector<1x64x256xbf16> to vector<64x256xbf16>
    %cst_13 = arith.constant dense<0.000000e+00> : vector<16x256xf32>
    %22 = tpu.matmul %8, %21, %cst_13 {dimension_numbers = #tpu.dot_dimension_numbers<[1], [0], [0], [1], [0, 0, 1, 1], [], []>} : vector<16x64xbf16>, vector<64x256xbf16>, vector<16x256xf32> -> vector<16x256xf32>
    %c0_14 = arith.constant 0 : index
    %c0_15 = arith.constant 0 : index
    %c0_16 = arith.constant 0 : index
    %23 = vector.load %arg13[%c0_14, %c0_15, %c0_16] : memref<2x1x256xf32, #tpu.memory_space<vmem>>, vector<1x1x256xf32>
    %24 = vector.shape_cast %23 : vector<1x1x256xf32> to vector<1x256xf32>
    %25 = vector.broadcast %24 : vector<1x256xf32> to vector<16x256xf32>
    %26 = arith.addf %22, %25 : vector<16x256xf32>
    %27 = arith.mulf %26, %26 : vector<16x256xf32>
    %28 = arith.mulf %26, %27 : vector<16x256xf32>
    %cst_17 = arith.constant 4.471500e-02 : f32
    %29 = vector.broadcast %cst_17 : f32 to vector<16x256xf32>
    %30 = arith.mulf %29, %28 : vector<16x256xf32>
    %31 = arith.addf %26, %30 : vector<16x256xf32>
    %cst_18 = arith.constant 0.797884583 : f32
    %32 = vector.broadcast %cst_18 : f32 to vector<16x256xf32>
    %33 = arith.mulf %32, %31 : vector<16x256xf32>
    %34 = math.tanh %33 : vector<16x256xf32>
    %cst_19 = arith.constant 1.000000e+00 : f32
    %35 = vector.broadcast %cst_19 : f32 to vector<16x256xf32>
    %36 = arith.addf %35, %34 : vector<16x256xf32>
    %cst_20 = arith.constant 5.000000e-01 : f32
    %37 = vector.broadcast %cst_20 : f32 to vector<16x256xf32>
    %38 = arith.mulf %37, %36 : vector<16x256xf32>
    %39 = arith.mulf %26, %38 : vector<16x256xf32>
    %40 = arith.truncf %39 : vector<16x256xf32> to vector<16x256xbf16>
    %c0_21 = arith.constant 0 : index
    %c0_22 = arith.constant 0 : index
    %c0_23 = arith.constant 0 : index
    %41 = vector.load %arg14[%c0_21, %c0_22, %c0_23] : memref<2x256x64xbf16, #tpu.memory_space<vmem>>, vector<1x256x64xbf16>
    %42 = vector.shape_cast %41 : vector<1x256x64xbf16> to vector<256x64xbf16>
    %cst_24 = arith.constant dense<0.000000e+00> : vector<16x64xf32>
    %43 = tpu.matmul %40, %42, %cst_24 {dimension_numbers = #tpu.dot_dimension_numbers<[1], [0], [0], [1], [0, 0, 1, 1], [], []>} : vector<16x256xbf16>, vector<256x64xbf16>, vector<16x64xf32> -> vector<16x64xf32>
    %44 = arith.addf %7, %43 : vector<16x64xf32>
    %c0_25 = arith.constant 0 : index
    %c0_26 = arith.constant 0 : index
    %c0_27 = arith.constant 0 : index
    %45 = vector.load %arg15[%c0_25, %c0_26, %c0_27] : memref<2x1x64xf32, #tpu.memory_space<vmem>>, vector<1x1x64xf32>
    %46 = vector.shape_cast %45 : vector<1x1x64xf32> to vector<1x64xf32>
    %47 = vector.broadcast %46 : vector<1x64xf32> to vector<16x64xf32>
    %48 = arith.addf %44, %47 : vector<16x64xf32>
    %49 = arith.truncf %48 : vector<16x64xf32> to vector<16x64xbf16>
    %c1 = arith.constant 1 : index
    %c0_28 = arith.constant 0 : index
    %c0_29 = arith.constant 0 : index
    %50 = vector.load %arg10[%c1, %c0_28, %c0_29] : memref<2x64x32xbf16, #tpu.memory_space<vmem>>, vector<1x64x32xbf16>
    %51 = vector.shape_cast %50 : vector<1x64x32xbf16> to vector<64x32xbf16>
    %cst_30 = arith.constant dense<0.000000e+00> : vector<16x32xf32>
    %52 = tpu.matmul %49, %51, %cst_30 {dimension_numbers = #tpu.dot_dimension_numbers<[1], [0], [0], [1], [0, 0, 1, 1], [], []>} : vector<16x64xbf16>, vector<64x32xbf16>, vector<16x32xf32> -> vector<16x32xf32>
    %c1_31 = arith.constant 1 : index
    %c0_32 = arith.constant 0 : index
    %c0_33 = arith.constant 0 : index
    %53 = vector.load %arg11[%c1_31, %c0_32, %c0_33] : memref<2x1x32xf32, #tpu.memory_space<vmem>>, vector<1x1x32xf32>
    %54 = vector.shape_cast %53 : vector<1x1x32xf32> to vector<1x32xf32>
    %55 = vector.broadcast %54 : vector<1x32xf32> to vector<16x32xf32>
    %56 = arith.addf %52, %55 : vector<16x32xf32>
    %57 = vector.extract_strided_slice %56 {offsets = [0, 0], sizes = [16, 16], strides = [1, 1]} : vector<16x32xf32> to vector<16x16xf32>
    %58 = arith.truncf %57 : vector<16x16xf32> to vector<16x16xbf16>
    %59 = vector.extract_strided_slice %56 {offsets = [0, 16], sizes = [16, 16], strides = [1, 1]} : vector<16x32xf32> to vector<16x16xf32>
    %60 = arith.truncf %59 : vector<16x16xf32> to vector<16x16xbf16>
    %61 = tpu.iota {dimensions = array<i32: 1>} : vector<16x128xi32>
    %c0_34 = arith.constant 0 : index
    %c0_35 = arith.constant 0 : index
    %62 = vector.load %arg2[%c0_34, %c0_35] : memref<16x1xi32, #tpu.memory_space<vmem>>, vector<16x1xi32>
    %63 = vector.broadcast %62 : vector<16x1xi32> to vector<16x128xi32>
    %64 = arith.cmpi eq, %61, %63 : vector<16x128xi32>
    %65 = arith.extui %64 : vector<16x128xi1> to vector<16x128xi32>
    %66 = arith.sitofp %65 : vector<16x128xi32> to vector<16x128xf32>
    %c0_36 = arith.constant 0 : index
    %c0_37 = arith.constant 0 : index
    %67 = vector.load %arg8[%c0_36, %c0_37] : memref<128x32xf32, #tpu.memory_space<vmem>>, vector<128x32xf32>
    %cst_38 = arith.constant dense<0.000000e+00> : vector<16x32xf32>
    %68 = tpu.matmul %66, %67, %cst_38 {dimension_numbers = #tpu.dot_dimension_numbers<[1], [0], [0], [1], [0, 0, 1, 1], [], []>} : vector<16x128xf32>, vector<128x32xf32>, vector<16x32xf32> -> vector<16x32xf32>
    %69 = tpu.iota {dimensions = array<i32: 1>} : vector<16x32xi32>
    %c0_39 = arith.constant 0 : index
    %c0_40 = arith.constant 0 : index
    %70 = vector.load %arg3[%c0_39, %c0_40] : memref<16x1xi32, #tpu.memory_space<vmem>>, vector<16x1xi32>
    %71 = vector.broadcast %70 : vector<16x1xi32> to vector<16x32xi32>
    %72 = arith.cmpi eq, %69, %71 : vector<16x32xi32>
    %73 = arith.extui %72 : vector<16x32xi1> to vector<16x32xi32>
    %74 = arith.sitofp %73 : vector<16x32xi32> to vector<16x32xf32>
    %c0_41 = arith.constant 0 : index
    %c0_42 = arith.constant 0 : index
    %75 = vector.load %arg9[%c0_41, %c0_42] : memref<32x32xf32, #tpu.memory_space<vmem>>, vector<32x32xf32>
    %cst_43 = arith.constant dense<0.000000e+00> : vector<16x32xf32>
    %76 = tpu.matmul %74, %75, %cst_43 {dimension_numbers = #tpu.dot_dimension_numbers<[1], [0], [0], [1], [0, 0, 1, 1], [], []>} : vector<16x32xf32>, vector<32x32xf32>, vector<16x32xf32> -> vector<16x32xf32>
    %77 = arith.addf %68, %76 : vector<16x32xf32>
    %78 = tpu.iota {dimensions = array<i32: 0>} : vector<8x8xi32>
    %79 = tpu.iota {dimensions = array<i32: 1>} : vector<8x8xi32>
    %80 = arith.cmpi sle, %79, %78 : vector<8x8xi32>
    %c0_44 = arith.constant 0 : index
    %c0_45 = arith.constant 0 : index
    %81 = vector.load %arg4[%c0_44, %c0_45] : memref<2x8xf32, #tpu.memory_space<vmem>>, vector<2x8xf32>
    %c0_46 = arith.constant 0 : index
    %c0_47 = arith.constant 0 : index
    %82 = vector.load %arg5[%c0_46, %c0_47] : memref<2x8xf32, #tpu.memory_space<vmem>>, vector<2x8xf32>
    %83 = vector.extract_strided_slice %81 {offsets = [0, 0], sizes = [1, 8], strides = [1, 1]} : vector<2x8xf32> to vector<1x8xf32>
    %cst_48 = arith.constant 5.000000e-01 : f32
    %84 = vector.broadcast %cst_48 : f32 to vector<1x8xf32>
    %85 = arith.cmpf ogt, %83, %84 : vector<1x8xf32>
    %cst_49 = arith.constant 0.000000e+00 : f32
    %cst_50 = arith.constant -1.000000e+09 : f32
    %86 = vector.broadcast %cst_49 : f32 to vector<1x8xf32>
    %87 = vector.broadcast %cst_50 : f32 to vector<1x8xf32>
    %88 = arith.select %85, %86, %87 : vector<1x8xi1>, vector<1x8xf32>
    %89 = vector.extract_strided_slice %82 {offsets = [0, 0], sizes = [1, 8], strides = [1, 1]} : vector<2x8xf32> to vector<1x8xf32>
    %cst_51 = arith.constant 5.000000e-01 : f32
    %90 = vector.broadcast %cst_51 : f32 to vector<1x8xf32>
    %91 = arith.cmpf ogt, %89, %90 : vector<1x8xf32>
    %92 = vector.broadcast %91 : vector<1x8xi1> to vector<8x8xi1>
    %93 = arith.andi %80, %92 : vector<8x8xi1>
    %cst_52 = arith.constant 0.000000e+00 : f32
    %cst_53 = arith.constant -1.000000e+09 : f32
    %94 = vector.broadcast %cst_52 : f32 to vector<8x8xf32>
    %95 = vector.broadcast %cst_53 : f32 to vector<8x8xf32>
    %96 = arith.select %93, %94, %95 : vector<8x8xi1>, vector<8x8xf32>
    %97 = vector.extract_strided_slice %81 {offsets = [1, 0], sizes = [1, 8], strides = [1, 1]} : vector<2x8xf32> to vector<1x8xf32>
    %cst_54 = arith.constant 5.000000e-01 : f32
    %98 = vector.broadcast %cst_54 : f32 to vector<1x8xf32>
    %99 = arith.cmpf ogt, %97, %98 : vector<1x8xf32>
    %cst_55 = arith.constant 0.000000e+00 : f32
    %cst_56 = arith.constant -1.000000e+09 : f32
    %100 = vector.broadcast %cst_55 : f32 to vector<1x8xf32>
    %101 = vector.broadcast %cst_56 : f32 to vector<1x8xf32>
    %102 = arith.select %99, %100, %101 : vector<1x8xi1>, vector<1x8xf32>
    %103 = vector.extract_strided_slice %82 {offsets = [1, 0], sizes = [1, 8], strides = [1, 1]} : vector<2x8xf32> to vector<1x8xf32>
    %cst_57 = arith.constant 5.000000e-01 : f32
    %104 = vector.broadcast %cst_57 : f32 to vector<1x8xf32>
    %105 = arith.cmpf ogt, %103, %104 : vector<1x8xf32>
    %106 = vector.broadcast %105 : vector<1x8xi1> to vector<8x8xi1>
    %107 = arith.andi %80, %106 : vector<8x8xi1>
    %cst_58 = arith.constant 0.000000e+00 : f32
    %cst_59 = arith.constant -1.000000e+09 : f32
    %108 = vector.broadcast %cst_58 : f32 to vector<8x8xf32>
    %109 = vector.broadcast %cst_59 : f32 to vector<8x8xf32>
    %110 = arith.select %107, %108, %109 : vector<8x8xi1>, vector<8x8xf32>
    %111 = arith.truncf %77 : vector<16x32xf32> to vector<16x32xbf16>
    %c0_60 = arith.constant 0 : index
    %c0_61 = arith.constant 0 : index
    %c0_62 = arith.constant 0 : index
    %112 = vector.load %arg16[%c0_60, %c0_61, %c0_62] : memref<2x32x48xbf16, #tpu.memory_space<vmem>>, vector<1x32x48xbf16>
    %113 = vector.shape_cast %112 : vector<1x32x48xbf16> to vector<32x48xbf16>
    %cst_63 = arith.constant dense<0.000000e+00> : vector<16x48xf32>
    %114 = tpu.matmul %111, %113, %cst_63 {dimension_numbers = #tpu.dot_dimension_numbers<[1], [0], [0], [1], [0, 0, 1, 1], [], []>} : vector<16x32xbf16>, vector<32x48xbf16>, vector<16x48xf32> -> vector<16x48xf32>
    %c0_64 = arith.constant 0 : index
    %c0_65 = arith.constant 0 : index
    %c0_66 = arith.constant 0 : index
    %115 = vector.load %arg17[%c0_64, %c0_65, %c0_66] : memref<2x1x48xf32, #tpu.memory_space<vmem>>, vector<1x1x48xf32>
    %116 = vector.shape_cast %115 : vector<1x1x48xf32> to vector<1x48xf32>
    %117 = vector.broadcast %116 : vector<1x48xf32> to vector<16x48xf32>
    %118 = arith.addf %114, %117 : vector<16x48xf32>
    %119 = vector.extract_strided_slice %118 {offsets = [0, 0], sizes = [16, 16], strides = [1, 1]} : vector<16x48xf32> to vector<16x16xf32>
    %120 = arith.truncf %119 : vector<16x16xf32> to vector<16x16xbf16>
    %121 = vector.extract_strided_slice %118 {offsets = [0, 16], sizes = [16, 16], strides = [1, 1]} : vector<16x48xf32> to vector<16x16xf32>
    %122 = arith.truncf %121 : vector<16x16xf32> to vector<16x16xbf16>
    %123 = vector.extract_strided_slice %118 {offsets = [0, 32], sizes = [16, 16], strides = [1, 1]} : vector<16x48xf32> to vector<16x16xf32>
    %124 = arith.truncf %123 : vector<16x16xf32> to vector<16x16xbf16>
    %125 = vector.extract_strided_slice %120 {offsets = [0, 0], sizes = [8, 16], strides = [1, 1]} : vector<16x16xbf16> to vector<8x16xbf16>
    %126 = vector.extract_strided_slice %122 {offsets = [0, 0], sizes = [8, 16], strides = [1, 1]} : vector<16x16xbf16> to vector<8x16xbf16>
    %127 = vector.extract_strided_slice %124 {offsets = [0, 0], sizes = [8, 16], strides = [1, 1]} : vector<16x16xbf16> to vector<8x16xbf16>
    %128 = vector.extract_strided_slice %17 {offsets = [0, 0], sizes = [8, 16], strides = [1, 1]} : vector<16x16xbf16> to vector<8x16xbf16>
    %129 = vector.extract_strided_slice %19 {offsets = [0, 0], sizes = [8, 16], strides = [1, 1]} : vector<16x16xbf16> to vector<8x16xbf16>
    %130 = vector.extract_strided_slice %125 {offsets = [0, 0], sizes = [8, 8], strides = [1, 1]} : vector<8x16xbf16> to vector<8x8xbf16>
    %131 = vector.extract_strided_slice %128 {offsets = [0, 0], sizes = [8, 8], strides = [1, 1]} : vector<8x16xbf16> to vector<8x8xbf16>
    %cst_67 = arith.constant dense<0.000000e+00> : vector<8x8xf32>
    %132 = tpu.matmul %130, %131, %cst_67 {dimension_numbers = #tpu.dot_dimension_numbers<[1], [1], [0], [0], [0, 0, 1, 0], [], []>} : vector<8x8xbf16>, vector<8x8xbf16>, vector<8x8xf32> -> vector<8x8xf32>
    %133 = vector.broadcast %88 : vector<1x8xf32> to vector<8x8xf32>
    %134 = arith.addf %132, %133 : vector<8x8xf32>
    %135 = vector.extract_strided_slice %125 {offsets = [0, 0], sizes = [8, 8], strides = [1, 1]} : vector<8x16xbf16> to vector<8x8xbf16>
    %136 = vector.extract_strided_slice %126 {offsets = [0, 0], sizes = [8, 8], strides = [1, 1]} : vector<8x16xbf16> to vector<8x8xbf16>
    %cst_68 = arith.constant dense<0.000000e+00> : vector<8x8xf32>
    %137 = tpu.matmul %135, %136, %cst_68 {dimension_numbers = #tpu.dot_dimension_numbers<[1], [1], [0], [0], [0, 0, 1, 0], [], []>} : vector<8x8xbf16>, vector<8x8xbf16>, vector<8x8xf32> -> vector<8x8xf32>
    %138 = arith.addf %137, %96 : vector<8x8xf32>
    %cst_69 = arith.constant dense<0xFF800000> : vector<8xf32>
    %139 = vector.multi_reduction <maximumf>, %134, %cst_69 [1] : vector<8x8xf32> to vector<8xf32>
    %140 = vector.shape_cast %139 : vector<8xf32> to vector<8x1xf32>
    %cst_70 = arith.constant dense<0xFF800000> : vector<8xf32>
    %141 = vector.multi_reduction <maximumf>, %138, %cst_70 [1] : vector<8x8xf32> to vector<8xf32>
    %142 = vector.shape_cast %141 : vector<8xf32> to vector<8x1xf32>
    %143 = arith.maximumf %140, %142 : vector<8x1xf32>
    %144 = vector.broadcast %143 : vector<8x1xf32> to vector<8x8xf32>
    %145 = arith.subf %134, %144 : vector<8x8xf32>
    %146 = math.exp %145 : vector<8x8xf32>
    %147 = vector.broadcast %143 : vector<8x1xf32> to vector<8x8xf32>
    %148 = arith.subf %138, %147 : vector<8x8xf32>
    %149 = math.exp %148 : vector<8x8xf32>
    %cst_71 = arith.constant dense<0.000000e+00> : vector<8xf32>
    %150 = vector.multi_reduction <add>, %146, %cst_71 [1] : vector<8x8xf32> to vector<8xf32>
    %151 = vector.shape_cast %150 : vector<8xf32> to vector<8x1xf32>
    %cst_72 = arith.constant dense<0.000000e+00> : vector<8xf32>
    %152 = vector.multi_reduction <add>, %149, %cst_72 [1] : vector<8x8xf32> to vector<8xf32>
    %153 = vector.shape_cast %152 : vector<8xf32> to vector<8x1xf32>
    %154 = arith.addf %151, %153 : vector<8x1xf32>
    %155 = arith.truncf %146 : vector<8x8xf32> to vector<8x8xbf16>
    %156 = vector.extract_strided_slice %129 {offsets = [0, 0], sizes = [8, 8], strides = [1, 1]} : vector<8x16xbf16> to vector<8x8xbf16>
    %cst_73 = arith.constant dense<0.000000e+00> : vector<8x8xf32>
    %157 = tpu.matmul %155, %156, %cst_73 {dimension_numbers = #tpu.dot_dimension_numbers<[1], [0], [0], [1], [0, 0, 1, 1], [], []>} : vector<8x8xbf16>, vector<8x8xbf16>, vector<8x8xf32> -> vector<8x8xf32>
    %158 = arith.truncf %149 : vector<8x8xf32> to vector<8x8xbf16>
    %159 = vector.extract_strided_slice %127 {offsets = [0, 0], sizes = [8, 8], strides = [1, 1]} : vector<8x16xbf16> to vector<8x8xbf16>
    %cst_74 = arith.constant dense<0.000000e+00> : vector<8x8xf32>
    %160 = tpu.matmul %158, %159, %cst_74 {dimension_numbers = #tpu.dot_dimension_numbers<[1], [0], [0], [1], [0, 0, 1, 1], [], []>} : vector<8x8xbf16>, vector<8x8xbf16>, vector<8x8xf32> -> vector<8x8xf32>
    %161 = arith.addf %157, %160 : vector<8x8xf32>
    %162 = tpu.reciprocal %154 {approx = true} : vector<8x1xf32> -> vector<8x1xf32>
    %163 = vector.broadcast %162 : vector<8x1xf32> to vector<8x8xf32>
    %164 = arith.mulf %161, %163 : vector<8x8xf32>
    %165 = vector.extract_strided_slice %125 {offsets = [0, 8], sizes = [8, 8], strides = [1, 1]} : vector<8x16xbf16> to vector<8x8xbf16>
    %166 = vector.extract_strided_slice %128 {offsets = [0, 8], sizes = [8, 8], strides = [1, 1]} : vector<8x16xbf16> to vector<8x8xbf16>
    %cst_75 = arith.constant dense<0.000000e+00> : vector<8x8xf32>
    %167 = tpu.matmul %165, %166, %cst_75 {dimension_numbers = #tpu.dot_dimension_numbers<[1], [1], [0], [0], [0, 0, 1, 0], [], []>} : vector<8x8xbf16>, vector<8x8xbf16>, vector<8x8xf32> -> vector<8x8xf32>
    %168 = vector.broadcast %88 : vector<1x8xf32> to vector<8x8xf32>
    %169 = arith.addf %167, %168 : vector<8x8xf32>
    %170 = vector.extract_strided_slice %125 {offsets = [0, 8], sizes = [8, 8], strides = [1, 1]} : vector<8x16xbf16> to vector<8x8xbf16>
    %171 = vector.extract_strided_slice %126 {offsets = [0, 8], sizes = [8, 8], strides = [1, 1]} : vector<8x16xbf16> to vector<8x8xbf16>
    %cst_76 = arith.constant dense<0.000000e+00> : vector<8x8xf32>
    %172 = tpu.matmul %170, %171, %cst_76 {dimension_numbers = #tpu.dot_dimension_numbers<[1], [1], [0], [0], [0, 0, 1, 0], [], []>} : vector<8x8xbf16>, vector<8x8xbf16>, vector<8x8xf32> -> vector<8x8xf32>
    %173 = arith.addf %172, %96 : vector<8x8xf32>
    %cst_77 = arith.constant dense<0xFF800000> : vector<8xf32>
    %174 = vector.multi_reduction <maximumf>, %169, %cst_77 [1] : vector<8x8xf32> to vector<8xf32>
    %175 = vector.shape_cast %174 : vector<8xf32> to vector<8x1xf32>
    %cst_78 = arith.constant dense<0xFF800000> : vector<8xf32>
    %176 = vector.multi_reduction <maximumf>, %173, %cst_78 [1] : vector<8x8xf32> to vector<8xf32>
    %177 = vector.shape_cast %176 : vector<8xf32> to vector<8x1xf32>
    %178 = arith.maximumf %175, %177 : vector<8x1xf32>
    %179 = vector.broadcast %178 : vector<8x1xf32> to vector<8x8xf32>
    %180 = arith.subf %169, %179 : vector<8x8xf32>
    %181 = math.exp %180 : vector<8x8xf32>
    %182 = vector.broadcast %178 : vector<8x1xf32> to vector<8x8xf32>
    %183 = arith.subf %173, %182 : vector<8x8xf32>
    %184 = math.exp %183 : vector<8x8xf32>
    %cst_79 = arith.constant dense<0.000000e+00> : vector<8xf32>
    %185 = vector.multi_reduction <add>, %181, %cst_79 [1] : vector<8x8xf32> to vector<8xf32>
    %186 = vector.shape_cast %185 : vector<8xf32> to vector<8x1xf32>
    %cst_80 = arith.constant dense<0.000000e+00> : vector<8xf32>
    %187 = vector.multi_reduction <add>, %184, %cst_80 [1] : vector<8x8xf32> to vector<8xf32>
    %188 = vector.shape_cast %187 : vector<8xf32> to vector<8x1xf32>
    %189 = arith.addf %186, %188 : vector<8x1xf32>
    %190 = arith.truncf %181 : vector<8x8xf32> to vector<8x8xbf16>
    %191 = vector.extract_strided_slice %129 {offsets = [0, 8], sizes = [8, 8], strides = [1, 1]} : vector<8x16xbf16> to vector<8x8xbf16>
    %cst_81 = arith.constant dense<0.000000e+00> : vector<8x8xf32>
    %192 = tpu.matmul %190, %191, %cst_81 {dimension_numbers = #tpu.dot_dimension_numbers<[1], [0], [0], [1], [0, 0, 1, 1], [], []>} : vector<8x8xbf16>, vector<8x8xbf16>, vector<8x8xf32> -> vector<8x8xf32>
    %193 = arith.truncf %184 : vector<8x8xf32> to vector<8x8xbf16>
    %194 = vector.extract_strided_slice %127 {offsets = [0, 8], sizes = [8, 8], strides = [1, 1]} : vector<8x16xbf16> to vector<8x8xbf16>
    %cst_82 = arith.constant dense<0.000000e+00> : vector<8x8xf32>
    %195 = tpu.matmul %193, %194, %cst_82 {dimension_numbers = #tpu.dot_dimension_numbers<[1], [0], [0], [1], [0, 0, 1, 1], [], []>} : vector<8x8xbf16>, vector<8x8xbf16>, vector<8x8xf32> -> vector<8x8xf32>
    %196 = arith.addf %192, %195 : vector<8x8xf32>
    %197 = tpu.reciprocal %189 {approx = true} : vector<8x1xf32> -> vector<8x1xf32>
    %198 = vector.broadcast %197 : vector<8x1xf32> to vector<8x8xf32>
    %199 = arith.mulf %196, %198 : vector<8x8xf32>
    %200 = tpu.concatenate %164, %199 in 1 : vector<8x8xf32>, vector<8x8xf32> -> vector<8x16xf32>
    %201 = vector.extract_strided_slice %120 {offsets = [8, 0], sizes = [8, 16], strides = [1, 1]} : vector<16x16xbf16> to vector<8x16xbf16>
    %202 = vector.extract_strided_slice %122 {offsets = [8, 0], sizes = [8, 16], strides = [1, 1]} : vector<16x16xbf16> to vector<8x16xbf16>
    %203 = vector.extract_strided_slice %124 {offsets = [8, 0], sizes = [8, 16], strides = [1, 1]} : vector<16x16xbf16> to vector<8x16xbf16>
    %204 = vector.extract_strided_slice %17 {offsets = [8, 0], sizes = [8, 16], strides = [1, 1]} : vector<16x16xbf16> to vector<8x16xbf16>
    %205 = vector.extract_strided_slice %19 {offsets = [8, 0], sizes = [8, 16], strides = [1, 1]} : vector<16x16xbf16> to vector<8x16xbf16>
    %206 = vector.extract_strided_slice %201 {offsets = [0, 0], sizes = [8, 8], strides = [1, 1]} : vector<8x16xbf16> to vector<8x8xbf16>
    %207 = vector.extract_strided_slice %204 {offsets = [0, 0], sizes = [8, 8], strides = [1, 1]} : vector<8x16xbf16> to vector<8x8xbf16>
    %cst_83 = arith.constant dense<0.000000e+00> : vector<8x8xf32>
    %208 = tpu.matmul %206, %207, %cst_83 {dimension_numbers = #tpu.dot_dimension_numbers<[1], [1], [0], [0], [0, 0, 1, 0], [], []>} : vector<8x8xbf16>, vector<8x8xbf16>, vector<8x8xf32> -> vector<8x8xf32>
    %209 = vector.broadcast %102 : vector<1x8xf32> to vector<8x8xf32>
    %210 = arith.addf %208, %209 : vector<8x8xf32>
    %211 = vector.extract_strided_slice %201 {offsets = [0, 0], sizes = [8, 8], strides = [1, 1]} : vector<8x16xbf16> to vector<8x8xbf16>
    %212 = vector.extract_strided_slice %202 {offsets = [0, 0], sizes = [8, 8], strides = [1, 1]} : vector<8x16xbf16> to vector<8x8xbf16>
    %cst_84 = arith.constant dense<0.000000e+00> : vector<8x8xf32>
    %213 = tpu.matmul %211, %212, %cst_84 {dimension_numbers = #tpu.dot_dimension_numbers<[1], [1], [0], [0], [0, 0, 1, 0], [], []>} : vector<8x8xbf16>, vector<8x8xbf16>, vector<8x8xf32> -> vector<8x8xf32>
    %214 = arith.addf %213, %110 : vector<8x8xf32>
    %cst_85 = arith.constant dense<0xFF800000> : vector<8xf32>
    %215 = vector.multi_reduction <maximumf>, %210, %cst_85 [1] : vector<8x8xf32> to vector<8xf32>
    %216 = vector.shape_cast %215 : vector<8xf32> to vector<8x1xf32>
    %cst_86 = arith.constant dense<0xFF800000> : vector<8xf32>
    %217 = vector.multi_reduction <maximumf>, %214, %cst_86 [1] : vector<8x8xf32> to vector<8xf32>
    %218 = vector.shape_cast %217 : vector<8xf32> to vector<8x1xf32>
    %219 = arith.maximumf %216, %218 : vector<8x1xf32>
    %220 = vector.broadcast %219 : vector<8x1xf32> to vector<8x8xf32>
    %221 = arith.subf %210, %220 : vector<8x8xf32>
    %222 = math.exp %221 : vector<8x8xf32>
    %223 = vector.broadcast %219 : vector<8x1xf32> to vector<8x8xf32>
    %224 = arith.subf %214, %223 : vector<8x8xf32>
    %225 = math.exp %224 : vector<8x8xf32>
    %cst_87 = arith.constant dense<0.000000e+00> : vector<8xf32>
    %226 = vector.multi_reduction <add>, %222, %cst_87 [1] : vector<8x8xf32> to vector<8xf32>
    %227 = vector.shape_cast %226 : vector<8xf32> to vector<8x1xf32>
    %cst_88 = arith.constant dense<0.000000e+00> : vector<8xf32>
    %228 = vector.multi_reduction <add>, %225, %cst_88 [1] : vector<8x8xf32> to vector<8xf32>
    %229 = vector.shape_cast %228 : vector<8xf32> to vector<8x1xf32>
    %230 = arith.addf %227, %229 : vector<8x1xf32>
    %231 = arith.truncf %222 : vector<8x8xf32> to vector<8x8xbf16>
    %232 = vector.extract_strided_slice %205 {offsets = [0, 0], sizes = [8, 8], strides = [1, 1]} : vector<8x16xbf16> to vector<8x8xbf16>
    %cst_89 = arith.constant dense<0.000000e+00> : vector<8x8xf32>
    %233 = tpu.matmul %231, %232, %cst_89 {dimension_numbers = #tpu.dot_dimension_numbers<[1], [0], [0], [1], [0, 0, 1, 1], [], []>} : vector<8x8xbf16>, vector<8x8xbf16>, vector<8x8xf32> -> vector<8x8xf32>
    %234 = arith.truncf %225 : vector<8x8xf32> to vector<8x8xbf16>
    %235 = vector.extract_strided_slice %203 {offsets = [0, 0], sizes = [8, 8], strides = [1, 1]} : vector<8x16xbf16> to vector<8x8xbf16>
    %cst_90 = arith.constant dense<0.000000e+00> : vector<8x8xf32>
    %236 = tpu.matmul %234, %235, %cst_90 {dimension_numbers = #tpu.dot_dimension_numbers<[1], [0], [0], [1], [0, 0, 1, 1], [], []>} : vector<8x8xbf16>, vector<8x8xbf16>, vector<8x8xf32> -> vector<8x8xf32>
    %237 = arith.addf %233, %236 : vector<8x8xf32>
    %238 = tpu.reciprocal %230 {approx = true} : vector<8x1xf32> -> vector<8x1xf32>
    %239 = vector.broadcast %238 : vector<8x1xf32> to vector<8x8xf32>
    %240 = arith.mulf %237, %239 : vector<8x8xf32>
    %241 = vector.extract_strided_slice %201 {offsets = [0, 8], sizes = [8, 8], strides = [1, 1]} : vector<8x16xbf16> to vector<8x8xbf16>
    %242 = vector.extract_strided_slice %204 {offsets = [0, 8], sizes = [8, 8], strides = [1, 1]} : vector<8x16xbf16> to vector<8x8xbf16>
    %cst_91 = arith.constant dense<0.000000e+00> : vector<8x8xf32>
    %243 = tpu.matmul %241, %242, %cst_91 {dimension_numbers = #tpu.dot_dimension_numbers<[1], [1], [0], [0], [0, 0, 1, 0], [], []>} : vector<8x8xbf16>, vector<8x8xbf16>, vector<8x8xf32> -> vector<8x8xf32>
    %244 = vector.broadcast %102 : vector<1x8xf32> to vector<8x8xf32>
    %245 = arith.addf %243, %244 : vector<8x8xf32>
    %246 = vector.extract_strided_slice %201 {offsets = [0, 8], sizes = [8, 8], strides = [1, 1]} : vector<8x16xbf16> to vector<8x8xbf16>
    %247 = vector.extract_strided_slice %202 {offsets = [0, 8], sizes = [8, 8], strides = [1, 1]} : vector<8x16xbf16> to vector<8x8xbf16>
    %cst_92 = arith.constant dense<0.000000e+00> : vector<8x8xf32>
    %248 = tpu.matmul %246, %247, %cst_92 {dimension_numbers = #tpu.dot_dimension_numbers<[1], [1], [0], [0], [0, 0, 1, 0], [], []>} : vector<8x8xbf16>, vector<8x8xbf16>, vector<8x8xf32> -> vector<8x8xf32>
    %249 = arith.addf %248, %110 : vector<8x8xf32>
    %cst_93 = arith.constant dense<0xFF800000> : vector<8xf32>
    %250 = vector.multi_reduction <maximumf>, %245, %cst_93 [1] : vector<8x8xf32> to vector<8xf32>
    %251 = vector.shape_cast %250 : vector<8xf32> to vector<8x1xf32>
    %cst_94 = arith.constant dense<0xFF800000> : vector<8xf32>
    %252 = vector.multi_reduction <maximumf>, %249, %cst_94 [1] : vector<8x8xf32> to vector<8xf32>
    %253 = vector.shape_cast %252 : vector<8xf32> to vector<8x1xf32>
    %254 = arith.maximumf %251, %253 : vector<8x1xf32>
    %255 = vector.broadcast %254 : vector<8x1xf32> to vector<8x8xf32>
    %256 = arith.subf %245, %255 : vector<8x8xf32>
    %257 = math.exp %256 : vector<8x8xf32>
    %258 = vector.broadcast %254 : vector<8x1xf32> to vector<8x8xf32>
    %259 = arith.subf %249, %258 : vector<8x8xf32>
    %260 = math.exp %259 : vector<8x8xf32>
    %cst_95 = arith.constant dense<0.000000e+00> : vector<8xf32>
    %261 = vector.multi_reduction <add>, %257, %cst_95 [1] : vector<8x8xf32> to vector<8xf32>
    %262 = vector.shape_cast %261 : vector<8xf32> to vector<8x1xf32>
    %cst_96 = arith.constant dense<0.000000e+00> : vector<8xf32>
    %263 = vector.multi_reduction <add>, %260, %cst_96 [1] : vector<8x8xf32> to vector<8xf32>
    %264 = vector.shape_cast %263 : vector<8xf32> to vector<8x1xf32>
    %265 = arith.addf %262, %264 : vector<8x1xf32>
    %266 = arith.truncf %257 : vector<8x8xf32> to vector<8x8xbf16>
    %267 = vector.extract_strided_slice %205 {offsets = [0, 8], sizes = [8, 8], strides = [1, 1]} : vector<8x16xbf16> to vector<8x8xbf16>
    %cst_97 = arith.constant dense<0.000000e+00> : vector<8x8xf32>
    %268 = tpu.matmul %266, %267, %cst_97 {dimension_numbers = #tpu.dot_dimension_numbers<[1], [0], [0], [1], [0, 0, 1, 1], [], []>} : vector<8x8xbf16>, vector<8x8xbf16>, vector<8x8xf32> -> vector<8x8xf32>
    %269 = arith.truncf %260 : vector<8x8xf32> to vector<8x8xbf16>
    %270 = vector.extract_strided_slice %203 {offsets = [0, 8], sizes = [8, 8], strides = [1, 1]} : vector<8x16xbf16> to vector<8x8xbf16>
    %cst_98 = arith.constant dense<0.000000e+00> : vector<8x8xf32>
    %271 = tpu.matmul %269, %270, %cst_98 {dimension_numbers = #tpu.dot_dimension_numbers<[1], [0], [0], [1], [0, 0, 1, 1], [], []>} : vector<8x8xbf16>, vector<8x8xbf16>, vector<8x8xf32> -> vector<8x8xf32>
    %272 = arith.addf %268, %271 : vector<8x8xf32>
    %273 = tpu.reciprocal %265 {approx = true} : vector<8x1xf32> -> vector<8x1xf32>
    %274 = vector.broadcast %273 : vector<8x1xf32> to vector<8x8xf32>
    %275 = arith.mulf %272, %274 : vector<8x8xf32>
    %276 = tpu.concatenate %240, %275 in 1 : vector<8x8xf32>, vector<8x8xf32> -> vector<8x16xf32>
    %277 = tpu.concatenate %200, %276 in 0 : vector<8x16xf32>, vector<8x16xf32> -> vector<16x16xf32>
    %278 = arith.truncf %277 : vector<16x16xf32> to vector<16x16xbf16>
    %c0_99 = arith.constant 0 : index
    %c0_100 = arith.constant 0 : index
    %c0_101 = arith.constant 0 : index
    %279 = vector.load %arg18[%c0_99, %c0_100, %c0_101] : memref<2x16x32xbf16, #tpu.memory_space<vmem>>, vector<1x16x32xbf16>
    %280 = vector.shape_cast %279 : vector<1x16x32xbf16> to vector<16x32xbf16>
    %cst_102 = arith.constant dense<0.000000e+00> : vector<16x32xf32>
    %281 = tpu.matmul %278, %280, %cst_102 {dimension_numbers = #tpu.dot_dimension_numbers<[1], [0], [0], [1], [0, 0, 1, 1], [], []>} : vector<16x16xbf16>, vector<16x32xbf16>, vector<16x32xf32> -> vector<16x32xf32>
    %282 = arith.addf %77, %281 : vector<16x32xf32>
    %c0_103 = arith.constant 0 : index
    %c0_104 = arith.constant 0 : index
    %c0_105 = arith.constant 0 : index
    %283 = vector.load %arg19[%c0_103, %c0_104, %c0_105] : memref<2x1x32xf32, #tpu.memory_space<vmem>>, vector<1x1x32xf32>
    %284 = vector.shape_cast %283 : vector<1x1x32xf32> to vector<1x32xf32>
    %285 = vector.broadcast %284 : vector<1x32xf32> to vector<16x32xf32>
    %286 = arith.addf %282, %285 : vector<16x32xf32>
    %287 = arith.truncf %286 : vector<16x32xf32> to vector<16x32xbf16>
    %c0_106 = arith.constant 0 : index
    %c0_107 = arith.constant 0 : index
    %c0_108 = arith.constant 0 : index
    %288 = vector.load %arg20[%c0_106, %c0_107, %c0_108] : memref<2x32x128xbf16, #tpu.memory_space<vmem>>, vector<1x32x128xbf16>
    %289 = vector.shape_cast %288 : vector<1x32x128xbf16> to vector<32x128xbf16>
    %cst_109 = arith.constant dense<0.000000e+00> : vector<16x128xf32>
    %290 = tpu.matmul %287, %289, %cst_109 {dimension_numbers = #tpu.dot_dimension_numbers<[1], [0], [0], [1], [0, 0, 1, 1], [], []>} : vector<16x32xbf16>, vector<32x128xbf16>, vector<16x128xf32> -> vector<16x128xf32>
    %c0_110 = arith.constant 0 : index
    %c0_111 = arith.constant 0 : index
    %c0_112 = arith.constant 0 : index
    %291 = vector.load %arg21[%c0_110, %c0_111, %c0_112] : memref<2x1x128xf32, #tpu.memory_space<vmem>>, vector<1x1x128xf32>
    %292 = vector.shape_cast %291 : vector<1x1x128xf32> to vector<1x128xf32>
    %293 = vector.broadcast %292 : vector<1x128xf32> to vector<16x128xf32>
    %294 = arith.addf %290, %293 : vector<16x128xf32>
    %295 = arith.mulf %294, %294 : vector<16x128xf32>
    %296 = arith.mulf %294, %295 : vector<16x128xf32>
    %cst_113 = arith.constant 4.471500e-02 : f32
    %297 = vector.broadcast %cst_113 : f32 to vector<16x128xf32>
    %298 = arith.mulf %297, %296 : vector<16x128xf32>
    %299 = arith.addf %294, %298 : vector<16x128xf32>
    %cst_114 = arith.constant 0.797884583 : f32
    %300 = vector.broadcast %cst_114 : f32 to vector<16x128xf32>
    %301 = arith.mulf %300, %299 : vector<16x128xf32>
    %302 = math.tanh %301 : vector<16x128xf32>
    %cst_115 = arith.constant 1.000000e+00 : f32
    %303 = vector.broadcast %cst_115 : f32 to vector<16x128xf32>
    %304 = arith.addf %303, %302 : vector<16x128xf32>
    %cst_116 = arith.constant 5.000000e-01 : f32
    %305 = vector.broadcast %cst_116 : f32 to vector<16x128xf32>
    %306 = arith.mulf %305, %304 : vector<16x128xf32>
    %307 = arith.mulf %294, %306 : vector<16x128xf32>
    %308 = arith.truncf %307 : vector<16x128xf32> to vector<16x128xbf16>
    %c0_117 = arith.constant 0 : index
    %c0_118 = arith.constant 0 : index
    %c0_119 = arith.constant 0 : index
    %309 = vector.load %arg22[%c0_117, %c0_118, %c0_119] : memref<2x128x32xbf16, #tpu.memory_space<vmem>>, vector<1x128x32xbf16>
    %310 = vector.shape_cast %309 : vector<1x128x32xbf16> to vector<128x32xbf16>
    %cst_120 = arith.constant dense<0.000000e+00> : vector<16x32xf32>
    %311 = tpu.matmul %308, %310, %cst_120 {dimension_numbers = #tpu.dot_dimension_numbers<[1], [0], [0], [1], [0, 0, 1, 1], [], []>} : vector<16x128xbf16>, vector<128x32xbf16>, vector<16x32xf32> -> vector<16x32xf32>
    %312 = arith.addf %286, %311 : vector<16x32xf32>
    %c0_121 = arith.constant 0 : index
    %c0_122 = arith.constant 0 : index
    %c0_123 = arith.constant 0 : index
    %313 = vector.load %arg23[%c0_121, %c0_122, %c0_123] : memref<2x1x32xf32, #tpu.memory_space<vmem>>, vector<1x1x32xf32>
    %314 = vector.shape_cast %313 : vector<1x1x32xf32> to vector<1x32xf32>
    %315 = vector.broadcast %314 : vector<1x32xf32> to vector<16x32xf32>
    %316 = arith.addf %312, %315 : vector<16x32xf32>
    %317 = arith.truncf %316 : vector<16x32xf32> to vector<16x32xbf16>
    %c1_124 = arith.constant 1 : index
    %c0_125 = arith.constant 0 : index
    %c0_126 = arith.constant 0 : index
    %318 = vector.load %arg16[%c1_124, %c0_125, %c0_126] : memref<2x32x48xbf16, #tpu.memory_space<vmem>>, vector<1x32x48xbf16>
    %319 = vector.shape_cast %318 : vector<1x32x48xbf16> to vector<32x48xbf16>
    %cst_127 = arith.constant dense<0.000000e+00> : vector<16x48xf32>
    %320 = tpu.matmul %317, %319, %cst_127 {dimension_numbers = #tpu.dot_dimension_numbers<[1], [0], [0], [1], [0, 0, 1, 1], [], []>} : vector<16x32xbf16>, vector<32x48xbf16>, vector<16x48xf32> -> vector<16x48xf32>
    %c1_128 = arith.constant 1 : index
    %c0_129 = arith.constant 0 : index
    %c0_130 = arith.constant 0 : index
    %321 = vector.load %arg17[%c1_128, %c0_129, %c0_130] : memref<2x1x48xf32, #tpu.memory_space<vmem>>, vector<1x1x48xf32>
    %322 = vector.shape_cast %321 : vector<1x1x48xf32> to vector<1x48xf32>
    %323 = vector.broadcast %322 : vector<1x48xf32> to vector<16x48xf32>
    %324 = arith.addf %320, %323 : vector<16x48xf32>
    %325 = vector.extract_strided_slice %324 {offsets = [0, 0], sizes = [16, 16], strides = [1, 1]} : vector<16x48xf32> to vector<16x16xf32>
    %326 = arith.truncf %325 : vector<16x16xf32> to vector<16x16xbf16>
    %327 = vector.extract_strided_slice %324 {offsets = [0, 16], sizes = [16, 16], strides = [1, 1]} : vector<16x48xf32> to vector<16x16xf32>
    %328 = arith.truncf %327 : vector<16x16xf32> to vector<16x16xbf16>
    %329 = vector.extract_strided_slice %324 {offsets = [0, 32], sizes = [16, 16], strides = [1, 1]} : vector<16x48xf32> to vector<16x16xf32>
    %330 = arith.truncf %329 : vector<16x16xf32> to vector<16x16xbf16>
    %331 = vector.extract_strided_slice %326 {offsets = [0, 0], sizes = [8, 16], strides = [1, 1]} : vector<16x16xbf16> to vector<8x16xbf16>
    %332 = vector.extract_strided_slice %328 {offsets = [0, 0], sizes = [8, 16], strides = [1, 1]} : vector<16x16xbf16> to vector<8x16xbf16>
    %333 = vector.extract_strided_slice %330 {offsets = [0, 0], sizes = [8, 16], strides = [1, 1]} : vector<16x16xbf16> to vector<8x16xbf16>
    %334 = vector.extract_strided_slice %58 {offsets = [0, 0], sizes = [8, 16], strides = [1, 1]} : vector<16x16xbf16> to vector<8x16xbf16>
    %335 = vector.extract_strided_slice %60 {offsets = [0, 0], sizes = [8, 16], strides = [1, 1]} : vector<16x16xbf16> to vector<8x16xbf16>
    %336 = vector.extract_strided_slice %331 {offsets = [0, 0], sizes = [8, 8], strides = [1, 1]} : vector<8x16xbf16> to vector<8x8xbf16>
    %337 = vector.extract_strided_slice %334 {offsets = [0, 0], sizes = [8, 8], strides = [1, 1]} : vector<8x16xbf16> to vector<8x8xbf16>
    %cst_131 = arith.constant dense<0.000000e+00> : vector<8x8xf32>
    %338 = tpu.matmul %336, %337, %cst_131 {dimension_numbers = #tpu.dot_dimension_numbers<[1], [1], [0], [0], [0, 0, 1, 0], [], []>} : vector<8x8xbf16>, vector<8x8xbf16>, vector<8x8xf32> -> vector<8x8xf32>
    %339 = vector.broadcast %88 : vector<1x8xf32> to vector<8x8xf32>
    %340 = arith.addf %338, %339 : vector<8x8xf32>
    %341 = vector.extract_strided_slice %331 {offsets = [0, 0], sizes = [8, 8], strides = [1, 1]} : vector<8x16xbf16> to vector<8x8xbf16>
    %342 = vector.extract_strided_slice %332 {offsets = [0, 0], sizes = [8, 8], strides = [1, 1]} : vector<8x16xbf16> to vector<8x8xbf16>
    %cst_132 = arith.constant dense<0.000000e+00> : vector<8x8xf32>
    %343 = tpu.matmul %341, %342, %cst_132 {dimension_numbers = #tpu.dot_dimension_numbers<[1], [1], [0], [0], [0, 0, 1, 0], [], []>} : vector<8x8xbf16>, vector<8x8xbf16>, vector<8x8xf32> -> vector<8x8xf32>
    %344 = arith.addf %343, %96 : vector<8x8xf32>
    %cst_133 = arith.constant dense<0xFF800000> : vector<8xf32>
    %345 = vector.multi_reduction <maximumf>, %340, %cst_133 [1] : vector<8x8xf32> to vector<8xf32>
    %346 = vector.shape_cast %345 : vector<8xf32> to vector<8x1xf32>
    %cst_134 = arith.constant dense<0xFF800000> : vector<8xf32>
    %347 = vector.multi_reduction <maximumf>, %344, %cst_134 [1] : vector<8x8xf32> to vector<8xf32>
    %348 = vector.shape_cast %347 : vector<8xf32> to vector<8x1xf32>
    %349 = arith.maximumf %346, %348 : vector<8x1xf32>
    %350 = vector.broadcast %349 : vector<8x1xf32> to vector<8x8xf32>
    %351 = arith.subf %340, %350 : vector<8x8xf32>
    %352 = math.exp %351 : vector<8x8xf32>
    %353 = vector.broadcast %349 : vector<8x1xf32> to vector<8x8xf32>
    %354 = arith.subf %344, %353 : vector<8x8xf32>
    %355 = math.exp %354 : vector<8x8xf32>
    %cst_135 = arith.constant dense<0.000000e+00> : vector<8xf32>
    %356 = vector.multi_reduction <add>, %352, %cst_135 [1] : vector<8x8xf32> to vector<8xf32>
    %357 = vector.shape_cast %356 : vector<8xf32> to vector<8x1xf32>
    %cst_136 = arith.constant dense<0.000000e+00> : vector<8xf32>
    %358 = vector.multi_reduction <add>, %355, %cst_136 [1] : vector<8x8xf32> to vector<8xf32>
    %359 = vector.shape_cast %358 : vector<8xf32> to vector<8x1xf32>
    %360 = arith.addf %357, %359 : vector<8x1xf32>
    %361 = arith.truncf %352 : vector<8x8xf32> to vector<8x8xbf16>
    %362 = vector.extract_strided_slice %335 {offsets = [0, 0], sizes = [8, 8], strides = [1, 1]} : vector<8x16xbf16> to vector<8x8xbf16>
    %cst_137 = arith.constant dense<0.000000e+00> : vector<8x8xf32>
    %363 = tpu.matmul %361, %362, %cst_137 {dimension_numbers = #tpu.dot_dimension_numbers<[1], [0], [0], [1], [0, 0, 1, 1], [], []>} : vector<8x8xbf16>, vector<8x8xbf16>, vector<8x8xf32> -> vector<8x8xf32>
    %364 = arith.truncf %355 : vector<8x8xf32> to vector<8x8xbf16>
    %365 = vector.extract_strided_slice %333 {offsets = [0, 0], sizes = [8, 8], strides = [1, 1]} : vector<8x16xbf16> to vector<8x8xbf16>
    %cst_138 = arith.constant dense<0.000000e+00> : vector<8x8xf32>
    %366 = tpu.matmul %364, %365, %cst_138 {dimension_numbers = #tpu.dot_dimension_numbers<[1], [0], [0], [1], [0, 0, 1, 1], [], []>} : vector<8x8xbf16>, vector<8x8xbf16>, vector<8x8xf32> -> vector<8x8xf32>
    %367 = arith.addf %363, %366 : vector<8x8xf32>
    %368 = tpu.reciprocal %360 {approx = true} : vector<8x1xf32> -> vector<8x1xf32>
    %369 = vector.broadcast %368 : vector<8x1xf32> to vector<8x8xf32>
    %370 = arith.mulf %367, %369 : vector<8x8xf32>
    %371 = vector.extract_strided_slice %331 {offsets = [0, 8], sizes = [8, 8], strides = [1, 1]} : vector<8x16xbf16> to vector<8x8xbf16>
    %372 = vector.extract_strided_slice %334 {offsets = [0, 8], sizes = [8, 8], strides = [1, 1]} : vector<8x16xbf16> to vector<8x8xbf16>
    %cst_139 = arith.constant dense<0.000000e+00> : vector<8x8xf32>
    %373 = tpu.matmul %371, %372, %cst_139 {dimension_numbers = #tpu.dot_dimension_numbers<[1], [1], [0], [0], [0, 0, 1, 0], [], []>} : vector<8x8xbf16>, vector<8x8xbf16>, vector<8x8xf32> -> vector<8x8xf32>
    %374 = vector.broadcast %88 : vector<1x8xf32> to vector<8x8xf32>
    %375 = arith.addf %373, %374 : vector<8x8xf32>
    %376 = vector.extract_strided_slice %331 {offsets = [0, 8], sizes = [8, 8], strides = [1, 1]} : vector<8x16xbf16> to vector<8x8xbf16>
    %377 = vector.extract_strided_slice %332 {offsets = [0, 8], sizes = [8, 8], strides = [1, 1]} : vector<8x16xbf16> to vector<8x8xbf16>
    %cst_140 = arith.constant dense<0.000000e+00> : vector<8x8xf32>
    %378 = tpu.matmul %376, %377, %cst_140 {dimension_numbers = #tpu.dot_dimension_numbers<[1], [1], [0], [0], [0, 0, 1, 0], [], []>} : vector<8x8xbf16>, vector<8x8xbf16>, vector<8x8xf32> -> vector<8x8xf32>
    %379 = arith.addf %378, %96 : vector<8x8xf32>
    %cst_141 = arith.constant dense<0xFF800000> : vector<8xf32>
    %380 = vector.multi_reduction <maximumf>, %375, %cst_141 [1] : vector<8x8xf32> to vector<8xf32>
    %381 = vector.shape_cast %380 : vector<8xf32> to vector<8x1xf32>
    %cst_142 = arith.constant dense<0xFF800000> : vector<8xf32>
    %382 = vector.multi_reduction <maximumf>, %379, %cst_142 [1] : vector<8x8xf32> to vector<8xf32>
    %383 = vector.shape_cast %382 : vector<8xf32> to vector<8x1xf32>
    %384 = arith.maximumf %381, %383 : vector<8x1xf32>
    %385 = vector.broadcast %384 : vector<8x1xf32> to vector<8x8xf32>
    %386 = arith.subf %375, %385 : vector<8x8xf32>
    %387 = math.exp %386 : vector<8x8xf32>
    %388 = vector.broadcast %384 : vector<8x1xf32> to vector<8x8xf32>
    %389 = arith.subf %379, %388 : vector<8x8xf32>
    %390 = math.exp %389 : vector<8x8xf32>
    %cst_143 = arith.constant dense<0.000000e+00> : vector<8xf32>
    %391 = vector.multi_reduction <add>, %387, %cst_143 [1] : vector<8x8xf32> to vector<8xf32>
    %392 = vector.shape_cast %391 : vector<8xf32> to vector<8x1xf32>
    %cst_144 = arith.constant dense<0.000000e+00> : vector<8xf32>
    %393 = vector.multi_reduction <add>, %390, %cst_144 [1] : vector<8x8xf32> to vector<8xf32>
    %394 = vector.shape_cast %393 : vector<8xf32> to vector<8x1xf32>
    %395 = arith.addf %392, %394 : vector<8x1xf32>
    %396 = arith.truncf %387 : vector<8x8xf32> to vector<8x8xbf16>
    %397 = vector.extract_strided_slice %335 {offsets = [0, 8], sizes = [8, 8], strides = [1, 1]} : vector<8x16xbf16> to vector<8x8xbf16>
    %cst_145 = arith.constant dense<0.000000e+00> : vector<8x8xf32>
    %398 = tpu.matmul %396, %397, %cst_145 {dimension_numbers = #tpu.dot_dimension_numbers<[1], [0], [0], [1], [0, 0, 1, 1], [], []>} : vector<8x8xbf16>, vector<8x8xbf16>, vector<8x8xf32> -> vector<8x8xf32>
    %399 = arith.truncf %390 : vector<8x8xf32> to vector<8x8xbf16>
    %400 = vector.extract_strided_slice %333 {offsets = [0, 8], sizes = [8, 8], strides = [1, 1]} : vector<8x16xbf16> to vector<8x8xbf16>
    %cst_146 = arith.constant dense<0.000000e+00> : vector<8x8xf32>
    %401 = tpu.matmul %399, %400, %cst_146 {dimension_numbers = #tpu.dot_dimension_numbers<[1], [0], [0], [1], [0, 0, 1, 1], [], []>} : vector<8x8xbf16>, vector<8x8xbf16>, vector<8x8xf32> -> vector<8x8xf32>
    %402 = arith.addf %398, %401 : vector<8x8xf32>
    %403 = tpu.reciprocal %395 {approx = true} : vector<8x1xf32> -> vector<8x1xf32>
    %404 = vector.broadcast %403 : vector<8x1xf32> to vector<8x8xf32>
    %405 = arith.mulf %402, %404 : vector<8x8xf32>
    %406 = tpu.concatenate %370, %405 in 1 : vector<8x8xf32>, vector<8x8xf32> -> vector<8x16xf32>
    %407 = vector.extract_strided_slice %326 {offsets = [8, 0], sizes = [8, 16], strides = [1, 1]} : vector<16x16xbf16> to vector<8x16xbf16>
    %408 = vector.extract_strided_slice %328 {offsets = [8, 0], sizes = [8, 16], strides = [1, 1]} : vector<16x16xbf16> to vector<8x16xbf16>
    %409 = vector.extract_strided_slice %330 {offsets = [8, 0], sizes = [8, 16], strides = [1, 1]} : vector<16x16xbf16> to vector<8x16xbf16>
    %410 = vector.extract_strided_slice %58 {offsets = [8, 0], sizes = [8, 16], strides = [1, 1]} : vector<16x16xbf16> to vector<8x16xbf16>
    %411 = vector.extract_strided_slice %60 {offsets = [8, 0], sizes = [8, 16], strides = [1, 1]} : vector<16x16xbf16> to vector<8x16xbf16>
    %412 = vector.extract_strided_slice %407 {offsets = [0, 0], sizes = [8, 8], strides = [1, 1]} : vector<8x16xbf16> to vector<8x8xbf16>
    %413 = vector.extract_strided_slice %410 {offsets = [0, 0], sizes = [8, 8], strides = [1, 1]} : vector<8x16xbf16> to vector<8x8xbf16>
    %cst_147 = arith.constant dense<0.000000e+00> : vector<8x8xf32>
    %414 = tpu.matmul %412, %413, %cst_147 {dimension_numbers = #tpu.dot_dimension_numbers<[1], [1], [0], [0], [0, 0, 1, 0], [], []>} : vector<8x8xbf16>, vector<8x8xbf16>, vector<8x8xf32> -> vector<8x8xf32>
    %415 = vector.broadcast %102 : vector<1x8xf32> to vector<8x8xf32>
    %416 = arith.addf %414, %415 : vector<8x8xf32>
    %417 = vector.extract_strided_slice %407 {offsets = [0, 0], sizes = [8, 8], strides = [1, 1]} : vector<8x16xbf16> to vector<8x8xbf16>
    %418 = vector.extract_strided_slice %408 {offsets = [0, 0], sizes = [8, 8], strides = [1, 1]} : vector<8x16xbf16> to vector<8x8xbf16>
    %cst_148 = arith.constant dense<0.000000e+00> : vector<8x8xf32>
    %419 = tpu.matmul %417, %418, %cst_148 {dimension_numbers = #tpu.dot_dimension_numbers<[1], [1], [0], [0], [0, 0, 1, 0], [], []>} : vector<8x8xbf16>, vector<8x8xbf16>, vector<8x8xf32> -> vector<8x8xf32>
    %420 = arith.addf %419, %110 : vector<8x8xf32>
    %cst_149 = arith.constant dense<0xFF800000> : vector<8xf32>
    %421 = vector.multi_reduction <maximumf>, %416, %cst_149 [1] : vector<8x8xf32> to vector<8xf32>
    %422 = vector.shape_cast %421 : vector<8xf32> to vector<8x1xf32>
    %cst_150 = arith.constant dense<0xFF800000> : vector<8xf32>
    %423 = vector.multi_reduction <maximumf>, %420, %cst_150 [1] : vector<8x8xf32> to vector<8xf32>
    %424 = vector.shape_cast %423 : vector<8xf32> to vector<8x1xf32>
    %425 = arith.maximumf %422, %424 : vector<8x1xf32>
    %426 = vector.broadcast %425 : vector<8x1xf32> to vector<8x8xf32>
    %427 = arith.subf %416, %426 : vector<8x8xf32>
    %428 = math.exp %427 : vector<8x8xf32>
    %429 = vector.broadcast %425 : vector<8x1xf32> to vector<8x8xf32>
    %430 = arith.subf %420, %429 : vector<8x8xf32>
    %431 = math.exp %430 : vector<8x8xf32>
    %cst_151 = arith.constant dense<0.000000e+00> : vector<8xf32>
    %432 = vector.multi_reduction <add>, %428, %cst_151 [1] : vector<8x8xf32> to vector<8xf32>
    %433 = vector.shape_cast %432 : vector<8xf32> to vector<8x1xf32>
    %cst_152 = arith.constant dense<0.000000e+00> : vector<8xf32>
    %434 = vector.multi_reduction <add>, %431, %cst_152 [1] : vector<8x8xf32> to vector<8xf32>
    %435 = vector.shape_cast %434 : vector<8xf32> to vector<8x1xf32>
    %436 = arith.addf %433, %435 : vector<8x1xf32>
    %437 = arith.truncf %428 : vector<8x8xf32> to vector<8x8xbf16>
    %438 = vector.extract_strided_slice %411 {offsets = [0, 0], sizes = [8, 8], strides = [1, 1]} : vector<8x16xbf16> to vector<8x8xbf16>
    %cst_153 = arith.constant dense<0.000000e+00> : vector<8x8xf32>
    %439 = tpu.matmul %437, %438, %cst_153 {dimension_numbers = #tpu.dot_dimension_numbers<[1], [0], [0], [1], [0, 0, 1, 1], [], []>} : vector<8x8xbf16>, vector<8x8xbf16>, vector<8x8xf32> -> vector<8x8xf32>
    %440 = arith.truncf %431 : vector<8x8xf32> to vector<8x8xbf16>
    %441 = vector.extract_strided_slice %409 {offsets = [0, 0], sizes = [8, 8], strides = [1, 1]} : vector<8x16xbf16> to vector<8x8xbf16>
    %cst_154 = arith.constant dense<0.000000e+00> : vector<8x8xf32>
    %442 = tpu.matmul %440, %441, %cst_154 {dimension_numbers = #tpu.dot_dimension_numbers<[1], [0], [0], [1], [0, 0, 1, 1], [], []>} : vector<8x8xbf16>, vector<8x8xbf16>, vector<8x8xf32> -> vector<8x8xf32>
    %443 = arith.addf %439, %442 : vector<8x8xf32>
    %444 = tpu.reciprocal %436 {approx = true} : vector<8x1xf32> -> vector<8x1xf32>
    %445 = vector.broadcast %444 : vector<8x1xf32> to vector<8x8xf32>
    %446 = arith.mulf %443, %445 : vector<8x8xf32>
    %447 = vector.extract_strided_slice %407 {offsets = [0, 8], sizes = [8, 8], strides = [1, 1]} : vector<8x16xbf16> to vector<8x8xbf16>
    %448 = vector.extract_strided_slice %410 {offsets = [0, 8], sizes = [8, 8], strides = [1, 1]} : vector<8x16xbf16> to vector<8x8xbf16>
    %cst_155 = arith.constant dense<0.000000e+00> : vector<8x8xf32>
    %449 = tpu.matmul %447, %448, %cst_155 {dimension_numbers = #tpu.dot_dimension_numbers<[1], [1], [0], [0], [0, 0, 1, 0], [], []>} : vector<8x8xbf16>, vector<8x8xbf16>, vector<8x8xf32> -> vector<8x8xf32>
    %450 = vector.broadcast %102 : vector<1x8xf32> to vector<8x8xf32>
    %451 = arith.addf %449, %450 : vector<8x8xf32>
    %452 = vector.extract_strided_slice %407 {offsets = [0, 8], sizes = [8, 8], strides = [1, 1]} : vector<8x16xbf16> to vector<8x8xbf16>
    %453 = vector.extract_strided_slice %408 {offsets = [0, 8], sizes = [8, 8], strides = [1, 1]} : vector<8x16xbf16> to vector<8x8xbf16>
    %cst_156 = arith.constant dense<0.000000e+00> : vector<8x8xf32>
    %454 = tpu.matmul %452, %453, %cst_156 {dimension_numbers = #tpu.dot_dimension_numbers<[1], [1], [0], [0], [0, 0, 1, 0], [], []>} : vector<8x8xbf16>, vector<8x8xbf16>, vector<8x8xf32> -> vector<8x8xf32>
    %455 = arith.addf %454, %110 : vector<8x8xf32>
    %cst_157 = arith.constant dense<0xFF800000> : vector<8xf32>
    %456 = vector.multi_reduction <maximumf>, %451, %cst_157 [1] : vector<8x8xf32> to vector<8xf32>
    %457 = vector.shape_cast %456 : vector<8xf32> to vector<8x1xf32>
    %cst_158 = arith.constant dense<0xFF800000> : vector<8xf32>
    %458 = vector.multi_reduction <maximumf>, %455, %cst_158 [1] : vector<8x8xf32> to vector<8xf32>
    %459 = vector.shape_cast %458 : vector<8xf32> to vector<8x1xf32>
    %460 = arith.maximumf %457, %459 : vector<8x1xf32>
    %461 = vector.broadcast %460 : vector<8x1xf32> to vector<8x8xf32>
    %462 = arith.subf %451, %461 : vector<8x8xf32>
    %463 = math.exp %462 : vector<8x8xf32>
    %464 = vector.broadcast %460 : vector<8x1xf32> to vector<8x8xf32>
    %465 = arith.subf %455, %464 : vector<8x8xf32>
    %466 = math.exp %465 : vector<8x8xf32>
    %cst_159 = arith.constant dense<0.000000e+00> : vector<8xf32>
    %467 = vector.multi_reduction <add>, %463, %cst_159 [1] : vector<8x8xf32> to vector<8xf32>
    %468 = vector.shape_cast %467 : vector<8xf32> to vector<8x1xf32>
    %cst_160 = arith.constant dense<0.000000e+00> : vector<8xf32>
    %469 = vector.multi_reduction <add>, %466, %cst_160 [1] : vector<8x8xf32> to vector<8xf32>
    %470 = vector.shape_cast %469 : vector<8xf32> to vector<8x1xf32>
    %471 = arith.addf %468, %470 : vector<8x1xf32>
    %472 = arith.truncf %463 : vector<8x8xf32> to vector<8x8xbf16>
    %473 = vector.extract_strided_slice %411 {offsets = [0, 8], sizes = [8, 8], strides = [1, 1]} : vector<8x16xbf16> to vector<8x8xbf16>
    %cst_161 = arith.constant dense<0.000000e+00> : vector<8x8xf32>
    %474 = tpu.matmul %472, %473, %cst_161 {dimension_numbers = #tpu.dot_dimension_numbers<[1], [0], [0], [1], [0, 0, 1, 1], [], []>} : vector<8x8xbf16>, vector<8x8xbf16>, vector<8x8xf32> -> vector<8x8xf32>
    %475 = arith.truncf %466 : vector<8x8xf32> to vector<8x8xbf16>
    %476 = vector.extract_strided_slice %409 {offsets = [0, 8], sizes = [8, 8], strides = [1, 1]} : vector<8x16xbf16> to vector<8x8xbf16>
    %cst_162 = arith.constant dense<0.000000e+00> : vector<8x8xf32>
    %477 = tpu.matmul %475, %476, %cst_162 {dimension_numbers = #tpu.dot_dimension_numbers<[1], [0], [0], [1], [0, 0, 1, 1], [], []>} : vector<8x8xbf16>, vector<8x8xbf16>, vector<8x8xf32> -> vector<8x8xf32>
    %478 = arith.addf %474, %477 : vector<8x8xf32>
    %479 = tpu.reciprocal %471 {approx = true} : vector<8x1xf32> -> vector<8x1xf32>
    %480 = vector.broadcast %479 : vector<8x1xf32> to vector<8x8xf32>
    %481 = arith.mulf %478, %480 : vector<8x8xf32>
    %482 = tpu.concatenate %446, %481 in 1 : vector<8x8xf32>, vector<8x8xf32> -> vector<8x16xf32>
    %483 = tpu.concatenate %406, %482 in 0 : vector<8x16xf32>, vector<8x16xf32> -> vector<16x16xf32>
    %484 = arith.truncf %483 : vector<16x16xf32> to vector<16x16xbf16>
    %c1_163 = arith.constant 1 : index
    %c0_164 = arith.constant 0 : index
    %c0_165 = arith.constant 0 : index
    %485 = vector.load %arg18[%c1_163, %c0_164, %c0_165] : memref<2x16x32xbf16, #tpu.memory_space<vmem>>, vector<1x16x32xbf16>
    %486 = vector.shape_cast %485 : vector<1x16x32xbf16> to vector<16x32xbf16>
    %cst_166 = arith.constant dense<0.000000e+00> : vector<16x32xf32>
    %487 = tpu.matmul %484, %486, %cst_166 {dimension_numbers = #tpu.dot_dimension_numbers<[1], [0], [0], [1], [0, 0, 1, 1], [], []>} : vector<16x16xbf16>, vector<16x32xbf16>, vector<16x32xf32> -> vector<16x32xf32>
    %488 = arith.addf %316, %487 : vector<16x32xf32>
    %c1_167 = arith.constant 1 : index
    %c0_168 = arith.constant 0 : index
    %c0_169 = arith.constant 0 : index
    %489 = vector.load %arg19[%c1_167, %c0_168, %c0_169] : memref<2x1x32xf32, #tpu.memory_space<vmem>>, vector<1x1x32xf32>
    %490 = vector.shape_cast %489 : vector<1x1x32xf32> to vector<1x32xf32>
    %491 = vector.broadcast %490 : vector<1x32xf32> to vector<16x32xf32>
    %492 = arith.addf %488, %491 : vector<16x32xf32>
    %493 = arith.truncf %492 : vector<16x32xf32> to vector<16x32xbf16>
    %c1_170 = arith.constant 1 : index
    %c0_171 = arith.constant 0 : index
    %c0_172 = arith.constant 0 : index
    %494 = vector.load %arg20[%c1_170, %c0_171, %c0_172] : memref<2x32x128xbf16, #tpu.memory_space<vmem>>, vector<1x32x128xbf16>
    %495 = vector.shape_cast %494 : vector<1x32x128xbf16> to vector<32x128xbf16>
    %cst_173 = arith.constant dense<0.000000e+00> : vector<16x128xf32>
    %496 = tpu.matmul %493, %495, %cst_173 {dimension_numbers = #tpu.dot_dimension_numbers<[1], [0], [0], [1], [0, 0, 1, 1], [], []>} : vector<16x32xbf16>, vector<32x128xbf16>, vector<16x128xf32> -> vector<16x128xf32>
    %c1_174 = arith.constant 1 : index
    %c0_175 = arith.constant 0 : index
    %c0_176 = arith.constant 0 : index
    %497 = vector.load %arg21[%c1_174, %c0_175, %c0_176] : memref<2x1x128xf32, #tpu.memory_space<vmem>>, vector<1x1x128xf32>
    %498 = vector.shape_cast %497 : vector<1x1x128xf32> to vector<1x128xf32>
    %499 = vector.broadcast %498 : vector<1x128xf32> to vector<16x128xf32>
    %500 = arith.addf %496, %499 : vector<16x128xf32>
    %501 = arith.mulf %500, %500 : vector<16x128xf32>
    %502 = arith.mulf %500, %501 : vector<16x128xf32>
    %cst_177 = arith.constant 4.471500e-02 : f32
    %503 = vector.broadcast %cst_177 : f32 to vector<16x128xf32>
    %504 = arith.mulf %503, %502 : vector<16x128xf32>
    %505 = arith.addf %500, %504 : vector<16x128xf32>
    %cst_178 = arith.constant 0.797884583 : f32
    %506 = vector.broadcast %cst_178 : f32 to vector<16x128xf32>
    %507 = arith.mulf %506, %505 : vector<16x128xf32>
    %508 = math.tanh %507 : vector<16x128xf32>
    %cst_179 = arith.constant 1.000000e+00 : f32
    %509 = vector.broadcast %cst_179 : f32 to vector<16x128xf32>
    %510 = arith.addf %509, %508 : vector<16x128xf32>
    %cst_180 = arith.constant 5.000000e-01 : f32
    %511 = vector.broadcast %cst_180 : f32 to vector<16x128xf32>
    %512 = arith.mulf %511, %510 : vector<16x128xf32>
    %513 = arith.mulf %500, %512 : vector<16x128xf32>
    %514 = arith.truncf %513 : vector<16x128xf32> to vector<16x128xbf16>
    %c1_181 = arith.constant 1 : index
    %c0_182 = arith.constant 0 : index
    %c0_183 = arith.constant 0 : index
    %515 = vector.load %arg22[%c1_181, %c0_182, %c0_183] : memref<2x128x32xbf16, #tpu.memory_space<vmem>>, vector<1x128x32xbf16>
    %516 = vector.shape_cast %515 : vector<1x128x32xbf16> to vector<128x32xbf16>
    %cst_184 = arith.constant dense<0.000000e+00> : vector<16x32xf32>
    %517 = tpu.matmul %514, %516, %cst_184 {dimension_numbers = #tpu.dot_dimension_numbers<[1], [0], [0], [1], [0, 0, 1, 1], [], []>} : vector<16x128xbf16>, vector<128x32xbf16>, vector<16x32xf32> -> vector<16x32xf32>
    %518 = arith.addf %492, %517 : vector<16x32xf32>
    %c1_185 = arith.constant 1 : index
    %c0_186 = arith.constant 0 : index
    %c0_187 = arith.constant 0 : index
    %519 = vector.load %arg23[%c1_185, %c0_186, %c0_187] : memref<2x1x32xf32, #tpu.memory_space<vmem>>, vector<1x1x32xf32>
    %520 = vector.shape_cast %519 : vector<1x1x32xf32> to vector<1x32xf32>
    %521 = vector.broadcast %520 : vector<1x32xf32> to vector<16x32xf32>
    %522 = arith.addf %518, %521 : vector<16x32xf32>
    %523 = arith.truncf %522 : vector<16x32xf32> to vector<16x32xbf16>
    %c0_188 = arith.constant 0 : index
    %c0_189 = arith.constant 0 : index
    %524 = vector.load %arg24[%c0_188, %c0_189] : memref<32x128xbf16, #tpu.memory_space<vmem>>, vector<32x128xbf16>
    %cst_190 = arith.constant dense<0.000000e+00> : vector<16x128xf32>
    %525 = tpu.matmul %523, %524, %cst_190 {dimension_numbers = #tpu.dot_dimension_numbers<[1], [0], [0], [1], [0, 0, 1, 1], [], []>} : vector<16x32xbf16>, vector<32x128xbf16>, vector<16x128xf32> -> vector<16x128xf32>
    %c0_191 = arith.constant 0 : index
    %c0_192 = arith.constant 0 : index
    %526 = vector.load %arg25[%c0_191, %c0_192] : memref<1x128xf32, #tpu.memory_space<vmem>>, vector<1x128xf32>
    %527 = vector.broadcast %526 : vector<1x128xf32> to vector<16x128xf32>
    %528 = arith.addf %525, %527 : vector<16x128xf32>
    %c0_193 = arith.constant 0 : index
    %c0_194 = arith.constant 0 : index
    %529 = vector.load %arg26[%c0_193, %c0_194] : memref<16x128xf32, #tpu.memory_space<vmem>>, vector<16x128xf32>
    tpu.vector_store %arg26[%c0_193, %c0_194], %528 {strides = array<i32>} : memref<16x128xf32, #tpu.memory_space<vmem>>, vector<16x128xf32>,
    %c0_195 = arith.constant 0 : index
    %c0_196 = arith.constant 0 : index
    %530 = vector.load %arg6[%c0_195, %c0_196] : memref<16x1xi32, #tpu.memory_space<vmem>>, vector<16x1xi32>
    %cst_197 = arith.constant dense<0xFF800000> : vector<16xf32>
    %531 = vector.multi_reduction <maximumf>, %528, %cst_197 [1] : vector<16x128xf32> to vector<16xf32>
    %532 = vector.shape_cast %531 : vector<16xf32> to vector<16x1xf32>
    %533 = vector.broadcast %532 : vector<16x1xf32> to vector<16x128xf32>
    %534 = arith.subf %528, %533 : vector<16x128xf32>
    %535 = math.exp %534 : vector<16x128xf32>
    %cst_198 = arith.constant dense<0.000000e+00> : vector<16xf32>
    %536 = vector.multi_reduction <add>, %535, %cst_198 [1] : vector<16x128xf32> to vector<16xf32>
    %537 = vector.shape_cast %536 : vector<16xf32> to vector<16x1xf32>
    %538 = math.log %537 : vector<16x1xf32>
    %539 = arith.addf %538, %532 : vector<16x1xf32>
    %540 = tpu.iota {dimensions = array<i32: 1>} : vector<16x128xi32>
    %541 = vector.broadcast %530 : vector<16x1xi32> to vector<16x128xi32>
    %542 = arith.cmpi eq, %540, %541 : vector<16x128xi32>
    %543 = arith.extui %542 : vector<16x128xi1> to vector<16x128xi32>
    %544 = arith.sitofp %543 : vector<16x128xi32> to vector<16x128xf32>
    %545 = arith.mulf %544, %528 : vector<16x128xf32>
    %cst_199 = arith.constant dense<0.000000e+00> : vector<16xf32>
    %546 = vector.multi_reduction <add>, %545, %cst_199 [1] : vector<16x128xf32> to vector<16xf32>
    %547 = vector.shape_cast %546 : vector<16xf32> to vector<16x1xf32>
    %c-100_i32 = arith.constant -100 : i32
    %548 = vector.broadcast %c-100_i32 : i32 to vector<16x1xi32>
    %549 = arith.cmpi ne, %530, %548 : vector<16x1xi32>
    %550 = arith.extui %549 : vector<16x1xi1> to vector<16x1xi32>
    %551 = arith.sitofp %550 : vector<16x1xi32> to vector<16x1xf32>
    %552 = arith.subf %539, %547 : vector<16x1xf32>
    %553 = arith.mulf %552, %551 : vector<16x1xf32>
    %554 = vector.shape_cast %553 : vector<16x1xf32> to vector<1x16x1xf32>
    %cst_200 = arith.constant dense<0.000000e+00> : vector<1xf32>
    %555 = vector.multi_reduction <add>, %554, %cst_200 [1, 2] : vector<1x16x1xf32> to vector<1xf32>
    %556 = vector.shape_cast %555 : vector<1xf32> to vector<1x1x1xf32>
    %557 = vector.extract %556[0, 0, 0] : f32 from vector<1x1x1xf32>
    %558 = vector.broadcast %557 : f32 to vector<1x1xf32>
    %559 = vector.shape_cast %551 : vector<16x1xf32> to vector<1x16x1xf32>
    %cst_201 = arith.constant dense<0.000000e+00> : vector<1xf32>
    %560 = vector.multi_reduction <add>, %559, %cst_201 [1, 2] : vector<1x16x1xf32> to vector<1xf32>
    %561 = vector.shape_cast %560 : vector<1xf32> to vector<1x1x1xf32>
    %562 = vector.extract %561[0, 0, 0] : f32 from vector<1x1x1xf32>
    %563 = vector.broadcast %562 : f32 to vector<1x1xf32>
    %cst_202 = arith.constant 1.000000e+00 : f32
    %564 = vector.broadcast %cst_202 : f32 to vector<1x1xf32>
    %565 = arith.maximumf %563, %564 : vector<1x1xf32>
    %566 = arith.divf %558, %565 : vector<1x1xf32>
    %c0_203 = arith.constant 0 : index
    %c0_204 = arith.constant 0 : index
    %567 = vector.load %arg27[%c0_203, %c0_204] : memref<1x1xf32, #tpu.memory_space<vmem>>, vector<1x1xf32>
    tpu.vector_store %arg27[%c0_203, %c0_204], %566 {strides = array<i32>} : memref<1x1xf32, #tpu.memory_space<vmem>>, vector<1x1xf32>,
    return
  }
  func.func @transform_0(%arg0: i32) -> (i32, i32) {
    %c0_i32 = arith.constant 0 : i32
    %c0_i32_0 = arith.constant 0 : i32
    %c0_i32_1 = arith.constant 0 : i32
    return %c0_i32, %c0_i32_0 : i32, i32
  }
  func.func @transform_1(%arg0: i32) -> (i32, i32) {
    %c0_i32 = arith.constant 0 : i32
    %c0_i32_0 = arith.constant 0 : i32
    %c0_i32_1 = arith.constant 0 : i32
    return %c0_i32, %c0_i32_0 : i32, i32
  }
  func.func @transform_2(%arg0: i32) -> (i32, i32) {
    %c0_i32 = arith.constant 0 : i32
    %c0_i32_0 = arith.constant 0 : i32
    %c0_i32_1 = arith.constant 0 : i32
    return %c0_i32, %c0_i32_0 : i32, i32
  }
  func.func @transform_3(%arg0: i32) -> (i32, i32) {
    %c0_i32 = arith.constant 0 : i32
    %c0_i32_0 = arith.constant 0 : i32
    %c0_i32_1 = arith.constant 0 : i32
    return %c0_i32, %c0_i32_0 : i32, i32
  }
  func.func @transform_4(%arg0: i32) -> (i32, i32) {
    %c0_i32 = arith.constant 0 : i32
    %c0_i32_0 = arith.constant 0 : i32
    %c0_i32_1 = arith.constant 0 : i32
    return %c0_i32, %c0_i32_0 : i32, i32
  }
  func.func @transform_5(%arg0: i32) -> (i32, i32) {
    %c0_i32 = arith.constant 0 : i32
    %c0_i32_0 = arith.constant 0 : i32
    %c0_i32_1 = arith.constant 0 : i32
    return %c0_i32, %c0_i32_0 : i32, i32
  }
  func.func @transform_6(%arg0: i32) -> (i32, i32) {
    %c0_i32 = arith.constant 0 : i32
    %c0_i32_0 = arith.constant 0 : i32
    %c0_i32_1 = arith.constant 0 : i32
    return %c0_i32, %c0_i32_0 : i32, i32
  }
  func.func @transform_7(%arg0: i32) -> (i32, i32) {
    %c0_i32 = arith.constant 0 : i32
    %c0_i32_0 = arith.constant 0 : i32
    %c0_i32_1 = arith.constant 0 : i32
    return %c0_i32, %c0_i32_0 : i32, i32
  }
  func.func @transform_8(%arg0: i32) -> (i32, i32) {
    %c0_i32 = arith.constant 0 : i32
    %c0_i32_0 = arith.constant 0 : i32
    %c0_i32_1 = arith.constant 0 : i32
    return %c0_i32, %c0_i32_0 : i32, i32
  }
  func.func @transform_9(%arg0: i32) -> (i32, i32, i32) {
    %c0_i32 = arith.constant 0 : i32
    %c0_i32_0 = arith.constant 0 : i32
    %c0_i32_1 = arith.constant 0 : i32
    %c0_i32_2 = arith.constant 0 : i32
    return %c0_i32, %c0_i32_0, %c0_i32_1 : i32, i32, i32
  }
  func.func @transform_10(%arg0: i32) -> (i32, i32, i32) {
    %c0_i32 = arith.constant 0 : i32
    %c0_i32_0 = arith.constant 0 : i32
    %c0_i32_1 = arith.constant 0 : i32
    %c0_i32_2 = arith.constant 0 : i32
    return %c0_i32, %c0_i32_0, %c0_i32_1 : i32, i32, i32
  }
  func.func @transform_11(%arg0: i32) -> (i32, i32, i32) {
    %c0_i32 = arith.constant 0 : i32
    %c0_i32_0 = arith.constant 0 : i32
    %c0_i32_1 = arith.constant 0 : i32
    %c0_i32_2 = arith.constant 0 : i32
    return %c0_i32, %c0_i32_0, %c0_i32_1 : i32, i32, i32
  }
  func.func @transform_12(%arg0: i32) -> (i32, i32, i32) {
    %c0_i32 = arith.constant 0 : i32
    %c0_i32_0 = arith.constant 0 : i32
    %c0_i32_1 = arith.constant 0 : i32
    %c0_i32_2 = arith.constant 0 : i32
    return %c0_i32, %c0_i32_0, %c0_i32_1 : i32, i32, i32
  }
  func.func @transform_13(%arg0: i32) -> (i32, i32, i32) {
    %c0_i32 = arith.constant 0 : i32
    %c0_i32_0 = arith.constant 0 : i32
    %c0_i32_1 = arith.constant 0 : i32
    %c0_i32_2 = arith.constant 0 : i32
    return %c0_i32, %c0_i32_0, %c0_i32_1 : i32, i32, i32
  }
  func.func @transform_14(%arg0: i32) -> (i32, i32, i32) {
    %c0_i32 = arith.constant 0 : i32
    %c0_i32_0 = arith.constant 0 : i32
    %c0_i32_1 = arith.constant 0 : i32
    %c0_i32_2 = arith.constant 0 : i32
    return %c0_i32, %c0_i32_0, %c0_i32_1 : i32, i32, i32
  }
  func.func @transform_15(%arg0: i32) -> (i32, i32, i32) {
    %c0_i32 = arith.constant 0 : i32
    %c0_i32_0 = arith.constant 0 : i32
    %c0_i32_1 = arith.constant 0 : i32
    %c0_i32_2 = arith.constant 0 : i32
    return %c0_i32, %c0_i32_0, %c0_i32_1 : i32, i32, i32
  }
  func.func @transform_16(%arg0: i32) -> (i32, i32, i32) {
    %c0_i32 = arith.constant 0 : i32
    %c0_i32_0 = arith.constant 0 : i32
    %c0_i32_1 = arith.constant 0 : i32
    %c0_i32_2 = arith.constant 0 : i32
    return %c0_i32, %c0_i32_0, %c0_i32_1 : i32, i32, i32
  }
  func.func @transform_17(%arg0: i32) -> (i32, i32, i32) {
    %c0_i32 = arith.constant 0 : i32
    %c0_i32_0 = arith.constant 0 : i32
    %c0_i32_1 = arith.constant 0 : i32
    %c0_i32_2 = arith.constant 0 : i32
    return %c0_i32, %c0_i32_0, %c0_i32_1 : i32, i32, i32
  }
  func.func @transform_18(%arg0: i32) -> (i32, i32, i32) {
    %c0_i32 = arith.constant 0 : i32
    %c0_i32_0 = arith.constant 0 : i32
    %c0_i32_1 = arith.constant 0 : i32
    %c0_i32_2 = arith.constant 0 : i32
    return %c0_i32, %c0_i32_0, %c0_i32_1 : i32, i32, i32
  }
  func.func @transform_19(%arg0: i32) -> (i32, i32, i32) {
    %c0_i32 = arith.constant 0 : i32
    %c0_i32_0 = arith.constant 0 : i32
    %c0_i32_1 = arith.constant 0 : i32
    %c0_i32_2 = arith.constant 0 : i32
    return %c0_i32, %c0_i32_0, %c0_i32_1 : i32, i32, i32
  }
  func.func @transform_20(%arg0: i32) -> (i32, i32, i32) {
    %c0_i32 = arith.constant 0 : i32
    %c0_i32_0 = arith.constant 0 : i32
    %c0_i32_1 = arith.constant 0 : i32
    %c0_i32_2 = arith.constant 0 : i32
    return %c0_i32, %c0_i32_0, %c0_i32_1 : i32, i32, i32
  }
  func.func @transform_21(%arg0: i32) -> (i32, i32, i32) {
    %c0_i32 = arith.constant 0 : i32
    %c0_i32_0 = arith.constant 0 : i32
    %c0_i32_1 = arith.constant 0 : i32
    %c0_i32_2 = arith.constant 0 : i32
    return %c0_i32, %c0_i32_0, %c0_i32_1 : i32, i32, i32
  }
  func.func @transform_22(%arg0: i32) -> (i32, i32, i32) {
    %c0_i32 = arith.constant 0 : i32
    %c0_i32_0 = arith.constant 0 : i32
    %c0_i32_1 = arith.constant 0 : i32
    %c0_i32_2 = arith.constant 0 : i32
    return %c0_i32, %c0_i32_0, %c0_i32_1 : i32, i32, i32
  }
  func.func @transform_23(%arg0: i32) -> (i32, i32) {
    %c0_i32 = arith.constant 0 : i32
    %c0_i32_0 = arith.constant 0 : i32
    %c0_i32_1 = arith.constant 0 : i32
    return %c0_i32, %c0_i32_0 : i32, i32
  }
  func.func @transform_24(%arg0: i32) -> (i32, i32) {
    %c0_i32 = arith.constant 0 : i32
    %c0_i32_0 = arith.constant 0 : i32
    %c0_i32_1 = arith.constant 0 : i32
    return %c0_i32, %c0_i32_0 : i32, i32
  }
  func.func @transform_25(%arg0: i32) -> (i32, i32) {
    %c0_i32 = arith.constant 0 : i32
    %c0_i32_0 = arith.constant 0 : i32
    %c0_i32_1 = arith.constant 0 : i32
    return %c0_i32, %c0_i32_0 : i32, i32
  }
  func.func @transform_26(%arg0: i32) -> (i32, i32) {
    %c0_i32 = arith.constant 0 : i32
    %c0_i32_0 = arith.constant 0 : i32
    %c0_i32_1 = arith.constant 0 : i32
    return %c0_i32, %c0_i32_0 : i32, i32
  }
}

</mosaic_0001>

<llo_original>
// kernel: tpu_custom_call.1
$region0: #{tpu_custom_call.1}
  #allocation0 [shape = 'u32[]', space=smem, size = 0x4, offset = 0x4, fixed_abs, tag = 'smem constant byte address 0x4 - core index']
  #allocation1 [shape = 'u32[72,128]{1,0:T(1,128)}', space=vmem, size = 0x9000, scoped, tag = 'internal scratch']
  %s0 = inlined_call_operand.vmem [shape: s32[16,1], index: 0, kind: input, shape index: {}]
  %s1 = inlined_call_operand.vmem [shape: s32[16,1], index: 1, kind: input, shape index: {}]
  %s2 = inlined_call_operand.vmem [shape: s32[16,1], index: 2, kind: input, shape index: {}]
  %s3 = inlined_call_operand.vmem [shape: f32[2,8], index: 3, kind: input, shape index: {}]
  %s4 = inlined_call_operand.vmem [shape: f32[2,8], index: 4, kind: input, shape index: {}]
  %s5 = inlined_call_operand.vmem [shape: s32[16,1], index: 5, kind: input, shape index: {}]
  %s6 = inlined_call_operand.vmem [shape: f32[128,64], index: 6, kind: input, shape index: {}]
  %s7 = inlined_call_operand.vmem [shape: f32[128,32], index: 7, kind: input, shape index: {}]
  %s8 = inlined_call_operand.vmem [shape: f32[32,32], index: 8, kind: input, shape index: {}]
  %s9 = inlined_call_operand.vmem [shape: bf16[2,64,32], index: 9, kind: input, shape index: {}]
  %s10 = inlined_call_operand.vmem [shape: f32[2,1,32], index: 10, kind: input, shape index: {}]
  %s11 = inlined_call_operand.vmem [shape: bf16[2,64,256], index: 11, kind: input, shape index: {}]
  %s12 = inlined_call_operand.vmem [shape: f32[2,1,256], index: 12, kind: input, shape index: {}]
  %s13 = inlined_call_operand.vmem [shape: bf16[2,256,64], index: 13, kind: input, shape index: {}]
  %s14 = inlined_call_operand.vmem [shape: f32[2,1,64], index: 14, kind: input, shape index: {}]
  %s15 = inlined_call_operand.vmem [shape: bf16[2,32,48], index: 15, kind: input, shape index: {}]
  %s16 = inlined_call_operand.vmem [shape: f32[2,1,48], index: 16, kind: input, shape index: {}]
  %s17 = inlined_call_operand.vmem [shape: bf16[2,16,32], index: 17, kind: input, shape index: {}]
  %s18 = inlined_call_operand.vmem [shape: f32[2,1,32], index: 18, kind: input, shape index: {}]
  %s19 = inlined_call_operand.vmem [shape: bf16[2,32,128], index: 19, kind: input, shape index: {}]
  %s20 = inlined_call_operand.vmem [shape: f32[2,1,128], index: 20, kind: input, shape index: {}]
  %s21 = inlined_call_operand.vmem [shape: bf16[2,128,32], index: 21, kind: input, shape index: {}]
  %s22 = inlined_call_operand.vmem [shape: f32[2,1,32], index: 22, kind: input, shape index: {}]
  %s23 = inlined_call_operand.vmem [shape: bf16[32,128], index: 23, kind: input, shape index: {}]
  %s24 = inlined_call_operand.vmem [shape: f32[1,128], index: 24, kind: input, shape index: {}]
  %s25 = inlined_call_operand.hbm [shape: f32[16,128], index: 25, kind: output, shape index: {0}]
  %s26 = inlined_call_operand.hbm [shape: f32[1,1], index: 26, kind: output, shape index: {1}]
  %27 = xla_tuple %s25, %s26
  %s28 = sld [smem:[#allocation0]]
  $region118: #{tpu_custom_call.1} parent=0
    _
  %s30 = ssub.s32 1, %s28
  %s31 = scalar_select 0, %s30, %s28
  $region1: #{tpu_custom_call.1} parent=0
    #allocation2 [shape = 'u8[8192]{0}', space=vmem, size = 0x2000, scoped, tag = 'output window, operand 0, single buffered']
    #allocation3 [shape = 's32[1]{0}', space=sflag, size = 0x4, scoped, tag = 'scoped memory for tpu_custom_call.1']
    #allocation4 [shape = 'u8[512]{0}', space=vmem, size = 0x400, scoped, tag = 'output window, operand 1, single buffered']
    #allocation5 [shape = 's32[1]{0}', space=sflag, size = 0x4, scoped, tag = 'scoped memory for tpu_custom_call.1']
    %32 = vsyncpa [#allocation3], 0
    %33 = vsyncpa [#allocation5], 0
    // Predicated region
    $region2: #{tpu_custom_call.1} parent=1 // pred_check
      _
    $region3: #{tpu_custom_call.1} parent=1 // pred_check_branch
      %35 = sbr.rel (0) target = $region5
    $region4: #{tpu_custom_call.1} parent=1 // pred_region
      _
    $region5: #{tpu_custom_call.1} parent=1 // pred_fallthru
      _
    // Predicated region
    $region6: #{tpu_custom_call.1} parent=1 // pred_check
      _
    $region7: #{tpu_custom_call.1} parent=1 // pred_check_branch
      %37 = sbr.rel (0) target = $region9
    $region8: #{tpu_custom_call.1} parent=1 // pred_region
      _
    $region9: #{tpu_custom_call.1} parent=1 // pred_fallthru
      _
    // Predicated region
    $region10: #{tpu_custom_call.1} parent=1 // pred_check
      _
    $region11: #{tpu_custom_call.1} parent=1 // pred_check_branch
      %39 = sbr.rel (0) target = $region13
    $region12: #{tpu_custom_call.1} parent=1 // pred_region
      _
    $region13: #{tpu_custom_call.1} parent=1 // pred_fallthru
      _
    // Predicated region
    $region14: #{tpu_custom_call.1} parent=1 // pred_check
      _
    $region15: #{tpu_custom_call.1} parent=1 // pred_check_branch
      %41 = sbr.rel (0) target = $region17
    $region16: #{tpu_custom_call.1} parent=1 // pred_region
      _
    $region17: #{tpu_custom_call.1} parent=1 // pred_fallthru
      _
    // Predicated region
    $region18: #{tpu_custom_call.1} parent=1 // pred_check
      _
    $region19: #{tpu_custom_call.1} parent=1 // pred_check_branch
      %43 = sbr.rel (0) target = $region21
    $region20: #{tpu_custom_call.1} parent=1 // pred_region
      _
    $region21: #{tpu_custom_call.1} parent=1 // pred_fallthru
      _
    // Predicated region
    $region22: #{tpu_custom_call.1} parent=1 // pred_check
      _
    $region23: #{tpu_custom_call.1} parent=1 // pred_check_branch
      %45 = sbr.rel (0) target = $region25
    $region24: #{tpu_custom_call.1} parent=1 // pred_region
      _
    $region25: #{tpu_custom_call.1} parent=1 // pred_fallthru
      _
    // Predicated region
    $region26: #{tpu_custom_call.1} parent=1 // pred_check
      _
    $region27: #{tpu_custom_call.1} parent=1 // pred_check_branch
      %47 = sbr.rel (0) target = $region29
    $region28: #{tpu_custom_call.1} parent=1 // pred_region
      _
    $region29: #{tpu_custom_call.1} parent=1 // pred_fallthru
      _
    // Predicated region
    $region30: #{tpu_custom_call.1} parent=1 // pred_check
      _
    $region31: #{tpu_custom_call.1} parent=1 // pred_check_branch
      %49 = sbr.rel (0) target = $region33
    $region32: #{tpu_custom_call.1} parent=1 // pred_region
      _
    $region33: #{tpu_custom_call.1} parent=1 // pred_fallthru
      _
    // Predicated region
    $region34: #{tpu_custom_call.1} parent=1 // pred_check
      _
    $region35: #{tpu_custom_call.1} parent=1 // pred_check_branch
      %51 = sbr.rel (0) target = $region37
    $region36: #{tpu_custom_call.1} parent=1 // pred_region
      _
    $region37: #{tpu_custom_call.1} parent=1 // pred_fallthru
      _
    // Predicated region
    $region38: #{tpu_custom_call.1} parent=1 // pred_check
      _
    $region39: #{tpu_custom_call.1} parent=1 // pred_check_branch
      %53 = sbr.rel (0) target = $region41
    $region40: #{tpu_custom_call.1} parent=1 // pred_region
      _
    $region41: #{tpu_custom_call.1} parent=1 // pred_fallthru
      _
    // Predicated region
    $region42: #{tpu_custom_call.1} parent=1 // pred_check
      _
    $region43: #{tpu_custom_call.1} parent=1 // pred_check_branch
      %55 = sbr.rel (0) target = $region45
    $region44: #{tpu_custom_call.1} parent=1 // pred_region
      _
    $region45: #{tpu_custom_call.1} parent=1 // pred_fallthru
      _
    // Predicated region
    $region46: #{tpu_custom_call.1} parent=1 // pred_check
      _
    $region47: #{tpu_custom_call.1} parent=1 // pred_check_branch
      %57 = sbr.rel (0) target = $region49
    $region48: #{tpu_custom_call.1} parent=1 // pred_region
      _
    $region49: #{tpu_custom_call.1} parent=1 // pred_fallthru
      _
    // Predicated region
    $region50: #{tpu_custom_call.1} parent=1 // pred_check
      _
    $region51: #{tpu_custom_call.1} parent=1 // pred_check_branch
      %59 = sbr.rel (0) target = $region53
    $region52: #{tpu_custom_call.1} parent=1 // pred_region
      _
    $region53: #{tpu_custom_call.1} parent=1 // pred_fallthru
      _
    // Predicated region
    $region54: #{tpu_custom_call.1} parent=1 // pred_check
      _
    $region55: #{tpu_custom_call.1} parent=1 // pred_check_branch
      %61 = sbr.rel (0) target = $region57
    $region56: #{tpu_custom_call.1} parent=1 // pred_region
      _
    $region57: #{tpu_custom_call.1} parent=1 // pred_fallthru
      _
    // Predicated region
    $region58: #{tpu_custom_call.1} parent=1 // pred_check
      _
    $region59: #{tpu_custom_call.1} parent=1 // pred_check_branch
      %63 = sbr.rel (0) target = $region61
    $region60: #{tpu_custom_call.1} parent=1 // pred_region
      _
    $region61: #{tpu_custom_call.1} parent=1 // pred_fallthru
      _
    // Predicated region
    $region62: #{tpu_custom_call.1} parent=1 // pred_check
      _
    $region63: #{tpu_custom_call.1} parent=1 // pred_check_branch
      %65 = sbr.rel (0) target = $region65
    $region64: #{tpu_custom_call.1} parent=1 // pred_region
      _
    $region65: #{tpu_custom_call.1} parent=1 // pred_fallthru
      _
    // Predicated region
    $region66: #{tpu_custom_call.1} parent=1 // pred_check
      _
    $region67: #{tpu_custom_call.1} parent=1 // pred_check_branch
      %67 = sbr.rel (0) target = $region69
    $region68: #{tpu_custom_call.1} parent=1 // pred_region
      _
    $region69: #{tpu_custom_call.1} parent=1 // pred_fallthru
      _
    // Predicated region
    $region70: #{tpu_custom_call.1} parent=1 // pred_check
      _
    $region71: #{tpu_custom_call.1} parent=1 // pred_check_branch
      %69 = sbr.rel (0) target = $region73
    $region72: #{tpu_custom_call.1} parent=1 // pred_region
      _
    $region73: #{tpu_custom_call.1} parent=1 // pred_fallthru
      _
    // Predicated region
    $region74: #{tpu_custom_call.1} parent=1 // pred_check
      _
    $region75: #{tpu_custom_call.1} parent=1 // pred_check_branch
      %71 = sbr.rel (0) target = $region77
    $region76: #{tpu_custom_call.1} parent=1 // pred_region
      _
    $region77: #{tpu_custom_call.1} parent=1 // pred_fallthru
      _
    // Predicated region
    $region78: #{tpu_custom_call.1} parent=1 // pred_check
      _
    $region79: #{tpu_custom_call.1} parent=1 // pred_check_branch
      %73 = sbr.rel (0) target = $region81
    $region80: #{tpu_custom_call.1} parent=1 // pred_region
      _
    $region81: #{tpu_custom_call.1} parent=1 // pred_fallthru
      _
    // Predicated region
    $region82: #{tpu_custom_call.1} parent=1 // pred_check
      _
    $region83: #{tpu_custom_call.1} parent=1 // pred_check_branch
      %75 = sbr.rel (0) target = $region85
    $region84: #{tpu_custom_call.1} parent=1 // pred_region
      _
    $region85: #{tpu_custom_call.1} parent=1 // pred_fallthru
      _
    // Predicated region
    $region86: #{tpu_custom_call.1} parent=1 // pred_check
      _
    $region87: #{tpu_custom_call.1} parent=1 // pred_check_branch
      %77 = sbr.rel (0) target = $region89
    $region88: #{tpu_custom_call.1} parent=1 // pred_region
      _
    $region89: #{tpu_custom_call.1} parent=1 // pred_fallthru
      _
    // Predicated region
    $region90: #{tpu_custom_call.1} parent=1 // pred_check
      _
    $region91: #{tpu_custom_call.1} parent=1 // pred_check_branch
      %79 = sbr.rel (0) target = $region93
    $region92: #{tpu_custom_call.1} parent=1 // pred_region
      _
    $region93: #{tpu_custom_call.1} parent=1 // pred_fallthru
      _
    // Predicated region
    $region94: #{tpu_custom_call.1} parent=1 // pred_check
      _
    $region95: #{tpu_custom_call.1} parent=1 // pred_check_branch
      %81 = sbr.rel (0) target = $region97
    $region96: #{tpu_custom_call.1} parent=1 // pred_region
      _
    $region97: #{tpu_custom_call.1} parent=1 // pred_fallthru
      _
    // Predicated region
    $region98: #{tpu_custom_call.1} parent=1 // pred_check
      _
    $region99: #{tpu_custom_call.1} parent=1 // pred_check_branch
      %83 = sbr.rel (0) target = $region101
    $region100: #{tpu_custom_call.1} parent=1 // pred_region
      _
    $region101: #{tpu_custom_call.1} parent=1 // pred_fallthru
      _
    %v85 = vlaneseq
    %v86 = vand.u32 %v85, 127
    %v87 = vld [vmem:[%s0] sm:$0xff]
    %v88 = vld [vmem:[%s0 + $0x8] sm:$0xff]
    %89 = vset.pattern.permute.xlu0 0
    %90 = vperm.xlu0 %89, %v87
    %v91 = vpop.permute.xlu0 %90
    %92 = vset.pattern.permute.xlu0 0
    %93 = vperm.xlu0 %92, %v88
    %v94 = vpop.permute.xlu0 %93
    %vm95 = vcmp.eq.s32.totalorder %v86, %v91
    %vm96 = vcmp.eq.s32.totalorder %v86, %v94
    %v97 = vsel %vm95, 1, 0
    %v98 = vsel %vm96, 1, 0
    %v99 = vcvt.s32.f32 %v97
    %v100 = vcvt.s32.f32 %v98
    %v101 = vld [vmem:[%s6] sm:$0xff]
    %v102 = vld [vmem:[%s6 + $0x8] sm:$0xff]
    %v103 = vld [vmem:[%s6 + $0x10] sm:$0xff]
    %v104 = vld [vmem:[%s6 + $0x18] sm:$0xff]
    %v105 = vld [vmem:[%s6 + $0x20] sm:$0xff]
    %v106 = vld [vmem:[%s6 + $0x28] sm:$0xff]
    %v107 = vld [vmem:[%s6 + $0x30] sm:$0xff]
    %v108 = vld [vmem:[%s6 + $0x38] sm:$0xff]
    %v109 = vld [vmem:[%s6 + $0x40] sm:$0xff]
    %v110 = vld [vmem:[%s6 + $0x48] sm:$0xff]
    %v111 = vld [vmem:[%s6 + $0x50] sm:$0xff]
    %v112 = vld [vmem:[%s6 + $0x58] sm:$0xff]
    %v113 = vld [vmem:[%s6 + $0x60] sm:$0xff]
    %v114 = vld [vmem:[%s6 + $0x68] sm:$0xff]
    %v115 = vld [vmem:[%s6 + $0x70] sm:$0xff]
    %v116 = vld [vmem:[%s6 + $0x78] sm:$0xff]
    %117 = vmatpush.msra.mxu0 %v116
    %118 = vmatpush.msra.mxu0 %v115
    %119 = vmatpush.msra.mxu0 %v114
    %120 = vmatpush.msra.mxu0 %v113
    %121 = vmatpush.msra.mxu0 %v112
    %122 = vmatpush.msra.mxu0 %v111
    %123 = vmatpush.msra.mxu0 %v110
    %124 = vmatpush.msra.mxu0 %v109
    %125 = vmatpush.msra.mxu0 %v108
    %126 = vmatpush.msra.mxu0 %v107
    %127 = vmatpush.msra.mxu0 %v106
    %128 = vmatpush.msra.mxu0 %v105
    %129 = vmatpush.msra.mxu0 %v104
    %130 = vmatpush.msra.mxu0 %v103
    %131 = vmatpush.msra.mxu0 %v102
    %132 = vmatpush.msra.mxu0 %v101
    %133 = vmatmul.f32.gmra.mxu0 %v99
    %v134 = vpop.f32.mrf.mxu0
    %v135 = vadd.f32 0.0, %v134
    %136 = vmatmul.f32.gmra.mxu0 %v100
    %v137 = vpop.f32.mrf.mxu0
    %v138 = vadd.f32 0.0, %v137
    %139 = vdwg.mxu0
    %v140 = vpack.c.bf16 %v138, %v135
    %v141 = vld [vmem:[%s9] sm:$0xf]
    %v142 = vld [vmem:[%s9 + $0x4] sm:$0xf]
    %v143 = vld [vmem:[%s9 + $0x8] sm:$0xf]
    %v144 = vld [vmem:[%s9 + $0xc] sm:$0xf]
    %v145 = vld [vmem:[%s9 + $0x10] sm:$0xf]
    %v146 = vld [vmem:[%s9 + $0x14] sm:$0xf]
    %v147 = vld [vmem:[%s9 + $0x18] sm:$0xf]
    %v148 = vld [vmem:[%s9 + $0x1c] sm:$0xf]
    %v149 = vld [vmem:[%s10] sm:$0x1]
    %v151 = vperm.slane %v149, 0
    %v161 = vunpack.c.l.b16 %v141
    %v162 = vunpack.c.l.b16 %v142
    %v163 = vunpack.c.l.b16 %v143
    %v164 = vunpack.c.l.b16 %v144
    %v165 = vunpack.c.l.b16 %v145
    %v166 = vunpack.c.l.b16 %v146
    %v167 = vunpack.c.l.b16 %v147
    %v168 = vunpack.c.l.b16 %v148
    %v169 = vpack.c.b16 %v162, %v161
    %v170 = vpack.c.b16 %v164, %v163
    %v171 = vpack.c.b16 %v166, %v165
    %v172 = vpack.c.b16 %v168, %v167
    %vm177 = vcmask 523264
    %v179 = vsel %vm177, %v140, 0
    %181 = vmatpush.bf16.msra.mxu0 0
    %182 = vmatpush.bf16.msra.mxu0 0
    %183 = vmatpush.bf16.msra.mxu0 0
    %184 = vmatpush.bf16.msra.mxu0 0
    %185 = vmatpush.bf16.msra.mxu0 %v172
    %186 = vmatpush.bf16.msra.mxu0 %v171
    %187 = vmatpush.bf16.msra.mxu0 %v170
    %188 = vmatpush.bf16.msra.mxu0 %v169
    %189 = vmatmul.bf16.gmra.mxu0 %v179
    %v190 = vpop.f32.mrf.mxu0
    %v191 = vadd.f32 %v151, %v190
    %v192 = vpop.f32.mrf.mxu0
    %v193 = vadd.f32 %v151, %v192
    %194 = vdwg.mxu0
    %v195 = vpack.c.bf16 %v191, %v191
    %v196 = vpack.c.bf16 %v193, %v193
    %v197 = vld [vmem:[%s11] sm:$0xff]
    %v198 = vld [vmem:[%s11 + $0x8] sm:$0xff]
    %v199 = vld [vmem:[%s11 + $0x10] sm:$0xff]
    %v200 = vld [vmem:[%s11 + $0x18] sm:$0xff]
    %v201 = vld [vmem:[%s11 + $0x20] sm:$0xff]
    %v202 = vld [vmem:[%s11 + $0x28] sm:$0xff]
    %v203 = vld [vmem:[%s11 + $0x30] sm:$0xff]
    %v204 = vld [vmem:[%s11 + $0x38] sm:$0xff]
    %v205 = vld [vmem:[%s12] sm:$0x3]
    %v207 = vperm.slane %v205, 0
    %v208 = vperm.slane %v205, 1
    %v219 = vunpack.c.l.b16 %v197
    %v220 = vunpack.c.h.b16 %v197
    %v221 = vunpack.c.l.b16 %v198
    %v222 = vunpack.c.h.b16 %v198
    %v223 = vunpack.c.l.b16 %v199
    %v224 = vunpack.c.h.b16 %v199
    %v225 = vunpack.c.l.b16 %v200
    %v226 = vunpack.c.h.b16 %v200
    %v227 = vunpack.c.l.b16 %v201
    %v228 = vunpack.c.h.b16 %v201
    %v229 = vunpack.c.l.b16 %v202
    %v230 = vunpack.c.h.b16 %v202
    %v231 = vunpack.c.l.b16 %v203
    %v232 = vunpack.c.h.b16 %v203
    %v233 = vunpack.c.l.b16 %v204
    %v234 = vunpack.c.h.b16 %v204
    %v235 = vpack.c.b16 %v221, %v219
    %v236 = vpack.c.b16 %v222, %v220
    %v237 = vpack.c.b16 %v225, %v223
    %v238 = vpack.c.b16 %v226, %v224
    %v239 = vpack.c.b16 %v229, %v227
    %v240 = vpack.c.b16 %v230, %v228
    %v241 = vpack.c.b16 %v233, %v231
    %v242 = vpack.c.b16 %v234, %v232
    %251 = vmatpush.bf16.msra.mxu0 0
    %252 = vmatpush.bf16.msra.mxu0 0
    %253 = vmatpush.bf16.msra.mxu0 0
    %254 = vmatpush.bf16.msra.mxu0 0
    %255 = vmatpush.bf16.msra.mxu0 %v241
    %256 = vmatpush.bf16.msra.mxu0 %v239
    %257 = vmatpush.bf16.msra.mxu0 %v237
    %258 = vmatpush.bf16.msra.mxu0 %v235
    %259 = vmatmul.bf16.gmra.mxu0 %v179
    %v260 = vpop.f32.mrf.mxu0
    %v261 = vadd.f32 %v207, %v260
    %v262 = vpop.f32.mrf.mxu0
    %v263 = vadd.f32 %v207, %v262
    %264 = vdwg.mxu0
    %265 = vmatpush.bf16.msra.mxu0 0
    %266 = vmatpush.bf16.msra.mxu0 0
    %267 = vmatpush.bf16.msra.mxu0 0
    %268 = vmatpush.bf16.msra.mxu0 0
    %269 = vmatpush.bf16.msra.mxu0 %v242
    %270 = vmatpush.bf16.msra.mxu0 %v240
    %271 = vmatpush.bf16.msra.mxu0 %v238
    %272 = vmatpush.bf16.msra.mxu0 %v236
    %273 = vmatmul.bf16.gmra.mxu0 %v179
    %v274 = vpop.f32.mrf.mxu0
    %v275 = vadd.f32 %v208, %v274
    %v276 = vpop.f32.mrf.mxu0
    %v277 = vadd.f32 %v208, %v276
    %278 = vdwg.mxu0
    %v279 = vmul.f32 %v261, %v261
    %v280 = vmul.f32 %v275, %v275
    %v281 = vmul.f32 %v263, %v263
    %v282 = vmul.f32 %v277, %v277
    %v283 = vmul.f32 %v261, %v279
    %v284 = vmul.f32 %v275, %v280
    %v285 = vmul.f32 %v263, %v281
    %v286 = vmul.f32 %v277, %v282
    %v287 = vmul.f32 %v283, 0.044715
    %v288 = vmul.f32 %v284, 0.044715
    %v289 = vmul.f32 %v285, 0.044715
    %v290 = vmul.f32 %v286, 0.044715
    %v291 = vadd.f32 %v261, %v287
    %v292 = vadd.f32 %v275, %v288
    %v293 = vadd.f32 %v263, %v289
    %v294 = vadd.f32 %v277, %v290
    %v295 = vmul.f32 %v291, 0.7978846
    %v296 = vmul.f32 %v292, 0.7978846
    %v297 = vmul.f32 %v293, 0.7978846
    %v298 = vmul.f32 %v294, 0.7978846
    %v299 = vtanh.pop %v295
    %v300 = vtanh.pop %v296
    %v301 = vtanh.pop %v297
    %v302 = vtanh.pop %v298
    %v303 = vadd.f32 %v299, 1.0
    %v304 = vadd.f32 %v300, 1.0
    %v305 = vadd.f32 %v301, 1.0
    %v306 = vadd.f32 %v302, 1.0
    %v307 = vmul.f32 %v303, 0.5
    %v308 = vmul.f32 %v304, 0.5
    %v309 = vmul.f32 %v305, 0.5
    %v310 = vmul.f32 %v306, 0.5
    %v311 = vmul.f32 %v261, %v307
    %v312 = vmul.f32 %v275, %v308
    %v313 = vmul.f32 %v263, %v309
    %v314 = vmul.f32 %v277, %v310
    %v315 = vpack.c.bf16 %v313, %v311
    %v316 = vpack.c.bf16 %v314, %v312
    %v317 = vld [vmem:[%s13] sm:$0xf]
    %v318 = vld [vmem:[%s13 + $0x4] sm:$0xf]
    %v319 = vld [vmem:[%s13 + $0x8] sm:$0xf]
    %v320 = vld [vmem:[%s13 + $0xc] sm:$0xf]
    %v321 = vld [vmem:[%s13 + $0x10] sm:$0xf]
    %v322 = vld [vmem:[%s13 + $0x14] sm:$0xf]
    %v323 = vld [vmem:[%s13 + $0x18] sm:$0xf]
    %v324 = vld [vmem:[%s13 + $0x1c] sm:$0xf]
    %v325 = vld [vmem:[%s13 + $0x20] sm:$0xf]
    %v326 = vld [vmem:[%s13 + $0x24] sm:$0xf]
    %v327 = vld [vmem:[%s13 + $0x28] sm:$0xf]
    %v328 = vld [vmem:[%s13 + $0x2c] sm:$0xf]
    %v329 = vld [vmem:[%s13 + $0x30] sm:$0xf]
    %v330 = vld [vmem:[%s13 + $0x34] sm:$0xf]
    %v331 = vld [vmem:[%s13 + $0x38] sm:$0xf]
    %v332 = vld [vmem:[%s13 + $0x3c] sm:$0xf]
    %v333 = vld [vmem:[%s13 + $0x40] sm:$0xf]
    %v334 = vld [vmem:[%s13 + $0x44] sm:$0xf]
    %v335 = vld [vmem:[%s13 + $0x48] sm:$0xf]
    %v336 = vld [vmem:[%s13 + $0x4c] sm:$0xf]
    %v337 = vld [vmem:[%s13 + $0x50] sm:$0xf]
    %v338 = vld [vmem:[%s13 + $0x54] sm:$0xf]
    %v339 = vld [vmem:[%s13 + $0x58] sm:$0xf]
    %v340 = vld [vmem:[%s13 + $0x5c] sm:$0xf]
    %v341 = vld [vmem:[%s13 + $0x60] sm:$0xf]
    %v342 = vld [vmem:[%s13 + $0x64] sm:$0xf]
    %v343 = vld [vmem:[%s13 + $0x68] sm:$0xf]
    %v344 = vld [vmem:[%s13 + $0x6c] sm:$0xf]
    %v345 = vld [vmem:[%s13 + $0x70] sm:$0xf]
    %v346 = vld [vmem:[%s13 + $0x74] sm:$0xf]
    %v347 = vld [vmem:[%s13 + $0x78] sm:$0xf]
    %v348 = vld [vmem:[%s13 + $0x7c] sm:$0xf]
    %v381 = vunpack.c.l.b16 %v317
    %v382 = vunpack.c.l.b16 %v318
    %v383 = vunpack.c.l.b16 %v319
    %v384 = vunpack.c.l.b16 %v320
    %v385 = vunpack.c.l.b16 %v321
    %v386 = vunpack.c.l.b16 %v322
    %v387 = vunpack.c.l.b16 %v323
    %v388 = vunpack.c.l.b16 %v324
    %v389 = vunpack.c.l.b16 %v325
    %v390 = vunpack.c.l.b16 %v326
    %v391 = vunpack.c.l.b16 %v327
    %v392 = vunpack.c.l.b16 %v328
    %v393 = vunpack.c.l.b16 %v329
    %v394 = vunpack.c.l.b16 %v330
    %v395 = vunpack.c.l.b16 %v331
    %v396 = vunpack.c.l.b16 %v332
    %v397 = vunpack.c.l.b16 %v333
    %v398 = vunpack.c.l.b16 %v334
    %v399 = vunpack.c.l.b16 %v335
    %v400 = vunpack.c.l.b16 %v336
    %v401 = vunpack.c.l.b16 %v337
    %v402 = vunpack.c.l.b16 %v338
    %v403 = vunpack.c.l.b16 %v339
    %v404 = vunpack.c.l.b16 %v340
    %v405 = vunpack.c.l.b16 %v341
    %v406 = vunpack.c.l.b16 %v342
    %v407 = vunpack.c.l.b16 %v343
    %v408 = vunpack.c.l.b16 %v344
    %v409 = vunpack.c.l.b16 %v345
    %v410 = vunpack.c.l.b16 %v346
    %v411 = vunpack.c.l.b16 %v347
    %v412 = vunpack.c.l.b16 %v348
    %v413 = vpack.c.b16 %v382, %v381
    %v414 = vpack.c.b16 %v384, %v383
    %v415 = vpack.c.b16 %v386, %v385
    %v416 = vpack.c.b16 %v388, %v387
    %v417 = vpack.c.b16 %v390, %v389
    %v418 = vpack.c.b16 %v392, %v391
    %v419 = vpack.c.b16 %v394, %v393
    %v420 = vpack.c.b16 %v396, %v395
    %v421 = vpack.c.b16 %v398, %v397
    %v422 = vpack.c.b16 %v400, %v399
    %v423 = vpack.c.b16 %v402, %v401
    %v424 = vpack.c.b16 %v404, %v403
    %v425 = vpack.c.b16 %v406, %v405
    %v426 = vpack.c.b16 %v408, %v407
    %v427 = vpack.c.b16 %v410, %v409
    %v428 = vpack.c.b16 %v412, %v411
    %445 = vmatpush.bf16.msra.mxu0 %v420
    %446 = vmatpush.bf16.msra.mxu0 %v419
    %447 = vmatpush.bf16.msra.mxu0 %v418
    %448 = vmatpush.bf16.msra.mxu0 %v417
    %449 = vmatpush.bf16.msra.mxu0 %v416
    %450 = vmatpush.bf16.msra.mxu0 %v415
    %451 = vmatpush.bf16.msra.mxu0 %v414
    %452 = vmatpush.bf16.msra.mxu0 %v413
    %453 = vmatmul.bf16.gmra.mxu0 %v315
    %v454 = vpop.f32.mrf.mxu0
    %v455 = vadd.f32 0.0, %v454
    %v456 = vpop.f32.mrf.mxu0
    %v457 = vadd.f32 0.0, %v456
    %458 = vdwg.mxu0
    %459 = vmatpush.bf16.msra.mxu0 %v428
    %460 = vmatpush.bf16.msra.mxu0 %v427
    %461 = vmatpush.bf16.msra.mxu0 %v426
    %462 = vmatpush.bf16.msra.mxu0 %v425
    %463 = vmatpush.bf16.msra.mxu0 %v424
    %464 = vmatpush.bf16.msra.mxu0 %v423
    %465 = vmatpush.bf16.msra.mxu0 %v422
    %466 = vmatpush.bf16.msra.mxu0 %v421
    %467 = vmatmul.bf16.gmra.mxu0 %v316
    %v468 = vpop.f32.mrf.mxu0
    %v469 = vadd.f32 %v455, %v468
    %v470 = vpop.f32.mrf.mxu0
    %v471 = vadd.f32 %v457, %v470
    %472 = vdwg.mxu0
    %v473 = vadd.f32 %v135, %v469
    %v474 = vadd.f32 %v138, %v471
    %v475 = vld [vmem:[%s14] sm:$0x1]
    %v477 = vperm.slane %v475, 0
    %v479 = vadd.f32 %v473, %v477
    %v480 = vadd.f32 %v474, %v477
    %v481 = vpack.c.bf16 %v480, %v479
    %s482 = scalar_lea.vmem %s9, 32
    %v483 = vld [vmem:[%s482] sm:$0xf]
    %v484 = vld [vmem:[%s482 + $0x4] sm:$0xf]
    %v485 = vld [vmem:[%s482 + $0x8] sm:$0xf]
    %v486 = vld [vmem:[%s482 + $0xc] sm:$0xf]
    %v487 = vld [vmem:[%s482 + $0x10] sm:$0xf]
    %v488 = vld [vmem:[%s482 + $0x14] sm:$0xf]
    %v489 = vld [vmem:[%s482 + $0x18] sm:$0xf]
    %v490 = vld [vmem:[%s482 + $0x1c] sm:$0xf]
    %s491 = scalar_lea.vmem %s10, 1
    %v492 = vld [vmem:[%s491] sm:$0x1]
    %v494 = vperm.slane %v492, 0
    %v504 = vunpack.c.l.b16 %v483
    %v505 = vunpack.c.l.b16 %v484
    %v506 = vunpack.c.l.b16 %v485
    %v507 = vunpack.c.l.b16 %v486
    %v508 = vunpack.c.l.b16 %v487
    %v509 = vunpack.c.l.b16 %v488
    %v510 = vunpack.c.l.b16 %v489
    %v511 = vunpack.c.l.b16 %v490
    %v512 = vpack.c.b16 %v505, %v504
    %v513 = vpack.c.b16 %v507, %v506
    %v514 = vpack.c.b16 %v509, %v508
    %v515 = vpack.c.b16 %v511, %v510
    %v521 = vsel %vm177, %v481, 0
    %523 = vmatpush.bf16.msra.mxu0 0
    %524 = vmatpush.bf16.msra.mxu0 0
    %525 = vmatpush.bf16.msra.mxu0 0
    %526 = vmatpush.bf16.msra.mxu0 0
    %527 = vmatpush.bf16.msra.mxu0 %v515
    %528 = vmatpush.bf16.msra.mxu0 %v514
    %529 = vmatpush.bf16.msra.mxu0 %v513
    %530 = vmatpush.bf16.msra.mxu0 %v512
    %531 = vmatmul.bf16.gmra.mxu0 %v521
    %v532 = vpop.f32.mrf.mxu0
    %v533 = vadd.f32 %v494, %v532
    %v534 = vpop.f32.mrf.mxu0
    %v535 = vadd.f32 %v494, %v534
    %536 = vdwg.mxu0
    %v537 = vpack.c.bf16 %v533, %v533
    %v538 = vpack.c.bf16 %v535, %v535
    %v539 = vld [vmem:[%s1] sm:$0xff]
    %v540 = vld [vmem:[%s1 + $0x8] sm:$0xff]
    %541 = vset.pattern.permute.xlu0 0
    %542 = vperm.xlu0 %541, %v539
    %v543 = vpop.permute.xlu0 %542
    %544 = vset.pattern.permute.xlu0 0
    %545 = vperm.xlu0 %544, %v540
    %v546 = vpop.permute.xlu0 %545
    %vm547 = vcmp.eq.s32.totalorder %v86, %v543
    %vm548 = vcmp.eq.s32.totalorder %v86, %v546
    %v549 = vsel %vm547, 1, 0
    %v550 = vsel %vm548, 1, 0
    %v551 = vcvt.s32.f32 %v549
    %v552 = vcvt.s32.f32 %v550
    %v553 = vld [vmem:[%s7] sm:$0xff]
    %v554 = vld [vmem:[%s7 + $0x8] sm:$0xff]
    %v555 = vld [vmem:[%s7 + $0x10] sm:$0xff]
    %v556 = vld [vmem:[%s7 + $0x18] sm:$0xff]
    %v557 = vld [vmem:[%s7 + $0x20] sm:$0xff]
    %v558 = vld [vmem:[%s7 + $0x28] sm:$0xff]
    %v559 = vld [vmem:[%s7 + $0x30] sm:$0xff]
    %v560 = vld [vmem:[%s7 + $0x38] sm:$0xff]
    %v561 = vld [vmem:[%s7 + $0x40] sm:$0xff]
    %v562 = vld [vmem:[%s7 + $0x48] sm:$0xff]
    %v563 = vld [vmem:[%s7 + $0x50] sm:$0xff]
    %v564 = vld [vmem:[%s7 + $0x58] sm:$0xff]
    %v565 = vld [vmem:[%s7 + $0x60] sm:$0xff]
    %v566 = vld [vmem:[%s7 + $0x68] sm:$0xff]
    %v567 = vld [vmem:[%s7 + $0x70] sm:$0xff]
    %v568 = vld [vmem:[%s7 + $0x78] sm:$0xff]
    %v569 = vld [vmem:[%s2] sm:$0xff]
    %v570 = vld [vmem:[%s2 + $0x8] sm:$0xff]
    %571 = vset.pattern.permute.xlu0 0
    %572 = vperm.xlu0 %571, %v569
    %v573 = vpop.permute.xlu0 %572
    %574 = vset.pattern.permute.xlu0 0
    %575 = vperm.xlu0 %574, %v570
    %v576 = vpop.permute.xlu0 %575
    %vm577 = vcmp.eq.s32.totalorder %v86, %v573
    %vm578 = vcmp.eq.s32.totalorder %v86, %v576
    %v579 = vsel %vm577, 1, 0
    %v580 = vsel %vm578, 1, 0
    %v581 = vcvt.s32.f32 %v579
    %v582 = vcvt.s32.f32 %v580
    %v583 = vld [vmem:[%s8] sm:$0xff]
    %v584 = vld [vmem:[%s8 + $0x8] sm:$0xff]
    %v585 = vld [vmem:[%s8 + $0x10] sm:$0xff]
    %v586 = vld [vmem:[%s8 + $0x18] sm:$0xff]
    %vm587 = vcmask 261120
    %v589 = vsel %vm587, %v581, 0
    %v592 = vsel %vm587, %v582, 0
    %594 = vmatpush.msra.mxu0 0.0
    %595 = vmatpush.msra.mxu0 0.0
    %596 = vmatpush.msra.mxu0 0.0
    %597 = vmatpush.msra.mxu0 0.0
    %598 = vmatpush.msra.mxu0 0.0
    %599 = vmatpush.msra.mxu0 0.0
    %600 = vmatpush.msra.mxu0 0.0
    %601 = vmatpush.msra.mxu0 0.0
    %602 = vmatpush.msra.mxu0 0.0
    %603 = vmatpush.msra.mxu0 0.0
    %604 = vmatpush.msra.mxu0 0.0
    %605 = vmatpush.msra.mxu0 0.0
    %606 = vmatpush.msra.mxu0 %v586
    %607 = vmatpush.msra.mxu0 %v585
    %608 = vmatpush.msra.mxu0 %v584
    %609 = vmatpush.msra.mxu0 %v583
    %610 = vmatmul.f32.gmra.mxu0 %v589
    %v611 = vpop.f32.mrf.mxu0
    %v612 = vadd.f32 0.0, %v611
    %613 = vmatmul.f32.gmra.mxu0 %v592
    %v614 = vpop.f32.mrf.mxu0
    %v615 = vadd.f32 0.0, %v614
    %616 = vdwg.mxu0
    %617 = vmatpush.msra.mxu0 %v568
    %618 = vmatpush.msra.mxu0 %v567
    %619 = vmatpush.msra.mxu0 %v566
    %620 = vmatpush.msra.mxu0 %v565
    %621 = vmatpush.msra.mxu0 %v564
    %622 = vmatpush.msra.mxu0 %v563
    %623 = vmatpush.msra.mxu0 %v562
    %624 = vmatpush.msra.mxu0 %v561
    %625 = vmatpush.msra.mxu0 %v560
    %626 = vmatpush.msra.mxu0 %v559
    %627 = vmatpush.msra.mxu0 %v558
    %628 = vmatpush.msra.mxu0 %v557
    %629 = vmatpush.msra.mxu0 %v556
    %630 = vmatpush.msra.mxu0 %v555
    %631 = vmatpush.msra.mxu0 %v554
    %632 = vmatpush.msra.mxu0 %v553
    %633 = vmatmul.f32.gmra.mxu0 %v551
    %v634 = vpop.f32.mrf.mxu0
    %v635 = vadd.f32 %v612, %v634
    %636 = vmatmul.f32.gmra.mxu0 %v552
    %v637 = vpop.f32.mrf.mxu0
    %v638 = vadd.f32 %v615, %v637
    %639 = vdwg.mxu0
    %v640 = vlaneseq
    %v641 = vshrl.u32 %v640, 7
    %vm642 = vcmp.le.s32.totalorder %v86, %v641
    %v643 = vld [vmem:[%s3] sm:$0x3]
    %v644 = vld [vmem:[%s4] sm:$0x3]
    %vm645 = vcmp.gt.f32.partialorder %v643, 0.5
    %v646 = vsel %vm645, 0.0, -1e+09
    %vm647 = vcmp.gt.f32.partialorder %v644, 0.5
    %v648 = vsel %vm647, 1, 0
    %v649 = vperm.slane %v648, 0
    %vm650 = vcmp.eq.s32.totalorder %v649, 1
    %vm651 = vmand %vm642, %vm650
    %v652 = vsel %vm651, 0.0, -1e+09
    %v653 = vperm.slane %v648, 1
    %vm654 = vcmp.eq.s32.totalorder %v653, 1
    %vm655 = vmand %vm642, %vm654
    %v656 = vsel %vm655, 0.0, -1e+09
    %v657 = vpack.c.bf16 %v638, %v635
    %v658 = vld [vmem:[%s15] sm:$0xf]
    %v659 = vld [vmem:[%s15 + $0x4] sm:$0xf]
    %v660 = vld [vmem:[%s15 + $0x8] sm:$0xf]
    %v661 = vld [vmem:[%s15 + $0xc] sm:$0xf]
    %v662 = vld [vmem:[%s16] sm:$0x1]
    %v664 = vperm.slane %v662, 0
    %v670 = vunpack.c.l.b16 %v658
    %v671 = vunpack.c.l.b16 %v659
    %v672 = vunpack.c.l.b16 %v660
    %v673 = vunpack.c.l.b16 %v661
    %v674 = vpack.c.b16 %v671, %v670
    %v675 = vpack.c.b16 %v673, %v672
    %v679 = vsel %vm587, %v657, 0
    %681 = vmatpush.bf16.msra.mxu0 0
    %682 = vmatpush.bf16.msra.mxu0 0
    %683 = vmatpush.bf16.msra.mxu0 0
    %684 = vmatpush.bf16.msra.mxu0 0
    %685 = vmatpush.bf16.msra.mxu0 0
    %686 = vmatpush.bf16.msra.mxu0 0
    %687 = vmatpush.bf16.msra.mxu0 %v675
    %688 = vmatpush.bf16.msra.mxu0 %v674
    %689 = vmatmul.bf16.gmra.mxu0 %v679
    %v690 = vpop.f32.mrf.mxu0
    %v691 = vadd.f32 %v664, %v690
    %v692 = vpop.f32.mrf.mxu0
    %v693 = vadd.f32 %v664, %v692
    %694 = vdwg.mxu0
    %v695 = vpack.c.bf16 %v691, %v691
    %v696 = vpack.c.bf16 %v693, %v693
    %v697 = vperm.slane %v646, 0
    %vm698 = vcmask 64512
    %v700 = vsel %vm698, %v695, 0
    %v703 = vsel %vm698, %v195, 0
    %705 = vmatpush.bf16.xpose.msra.mxu0 0
    %706 = vmatpush.bf16.xpose.msra.mxu0 0
    %707 = vmatpush.bf16.xpose.msra.mxu0 0
    %708 = vmatpush.bf16.xpose.msra.mxu0 0
    %709 = vmatpush.bf16.xpose.msra.mxu0 0
    %710 = vmatpush.bf16.xpose.msra.mxu0 0
    %711 = vmatpush.bf16.xpose.msra.mxu0 0
    %712 = vmatpush.bf16.xpose.msra.mxu0 %v703
    %713 = vmatmul.bf16.gmra.mxu0 %v700
    %v714 = vpop.f32.mrf.mxu0
    %v715 = vadd.f32 %v697, %v714
    %v716 = vpop.f32.mrf.mxu0
    %717 = vdwg.mxu0
    %v719 = vunpack.c.l.b16 %v695
    %v720 = vpack.c.b16 %v719, %v719
    %721 = vrot.lane.b32.xlu0 %v720, 112
    %v722 = vpop.permute.xlu0 %721
    %v724 = vsel %vm698, %v722, 0
    %726 = vmatpush.bf16.xpose.msra.mxu0 0
    %727 = vmatpush.bf16.xpose.msra.mxu0 0
    %728 = vmatpush.bf16.xpose.msra.mxu0 0
    %729 = vmatpush.bf16.xpose.msra.mxu0 0
    %730 = vmatpush.bf16.xpose.msra.mxu0 0
    %731 = vmatpush.bf16.xpose.msra.mxu0 0
    %732 = vmatpush.bf16.xpose.msra.mxu0 0
    %733 = vmatpush.bf16.xpose.msra.mxu0 %v724
    %734 = vmatmul.bf16.gmra.mxu0 %v700
    %v735 = vpop.f32.mrf.mxu0
    %v736 = vadd.f32 %v652, %v735
    %v737 = vpop.f32.mrf.mxu0
    %738 = vdwg.mxu0
    %v739 = vsel %vm698, %v715, -inf
    %740 = vmax.xlane.f32.xlu0 %v739
    %v741 = vpop.xlane.xlu0 %740
    %v742 = vsel %vm698, %v736, -inf
    %743 = vmax.xlane.f32.xlu0 %v742
    %v744 = vpop.xlane.xlu0 %743
    %v745 = vmax.f32 %v741, %v744
    %v746 = vsub.f32 %v715, %v745
    %v747 = vmul.f32 %v746, 1.442695
    %v748 = vpow.pop %v747
    %v749 = vsub.f32 %v736, %v745
    %v750 = vmul.f32 %v749, 1.442695
    %v751 = vpow.pop %v750
    %v752 = vsel %vm698, %v748, 0.0
    %753 = vadd.xlane.f32.xlu0 %v752
    %v754 = vpop.xlane.xlu0 %753
    %v755 = vsel %vm698, %v751, 0.0
    %756 = vadd.xlane.f32.xlu0 %v755
    %v757 = vpop.xlane.xlu0 %756
    %v758 = vadd.f32 %v754, %v757
    %v759 = vpack.c.bf16 %v748, %v748
    %v760 = vpack.c.bf16 %v751, %v751
    %761 = vrot.lane.b32.xlu0 %v720, 96
    %v762 = vpop.permute.xlu0 %761
    %v764 = vsel %vm698, %v760, 0
    %vm766 = vcmask 1043456
    %v768 = vsel %vm766, %v762, 0
    %770 = vmatpush.bf16.msra.mxu0 0
    %771 = vmatpush.bf16.msra.mxu0 0
    %772 = vmatpush.bf16.msra.mxu0 0
    %773 = vmatpush.bf16.msra.mxu0 0
    %774 = vmatpush.bf16.msra.mxu0 0
    %775 = vmatpush.bf16.msra.mxu0 0
    %776 = vmatpush.bf16.msra.mxu0 0
    %777 = vmatpush.bf16.msra.mxu0 %v768
    %778 = vmatmul.bf16.gmra.mxu0 %v764
    %v779 = vpop.f32.mrf.mxu0
    %v780 = vadd.f32 0.0, %v779
    %v781 = vpop.f32.mrf.mxu0
    %782 = vdwg.mxu0
    %v784 = vunpack.c.l.b16 %v195
    %v785 = vpack.c.b16 %v784, %v784
    %786 = vrot.lane.b32.xlu0 %v785, 112
    %v787 = vpop.permute.xlu0 %786
    %v789 = vsel %vm698, %v759, 0
    %v792 = vsel %vm766, %v787, 0
    %794 = vmatpush.bf16.msra.mxu0 0
    %795 = vmatpush.bf16.msra.mxu0 0
    %796 = vmatpush.bf16.msra.mxu0 0
    %797 = vmatpush.bf16.msra.mxu0 0
    %798 = vmatpush.bf16.msra.mxu0 0
    %799 = vmatpush.bf16.msra.mxu0 0
    %800 = vmatpush.bf16.msra.mxu0 0
    %801 = vmatpush.bf16.msra.mxu0 %v792
    %802 = vmatmul.bf16.gmra.mxu0 %v789
    %v803 = vpop.f32.mrf.mxu0
    %v804 = vadd.f32 %v780, %v803
    %v805 = vpop.f32.mrf.mxu0
    %806 = vdwg.mxu0
    %v807 = vrcp.pop %v758
    %v808 = vmul.f32 %v804, %v807
    %809 = vrot.lane.b32.xlu0 %v720, 120
    %v810 = vpop.permute.xlu0 %809
    %811 = vrot.lane.b32.xlu0 %v785, 120
    %v812 = vpop.permute.xlu0 %811
    %v814 = vsel %vm698, %v810, 0
    %v817 = vsel %vm698, %v812, 0
    %819 = vmatpush.bf16.xpose.msra.mxu0 0
    %820 = vmatpush.bf16.xpose.msra.mxu0 0
    %821 = vmatpush.bf16.xpose.msra.mxu0 0
    %822 = vmatpush.bf16.xpose.msra.mxu0 0
    %823 = vmatpush.bf16.xpose.msra.mxu0 0
    %824 = vmatpush.bf16.xpose.msra.mxu0 0
    %825 = vmatpush.bf16.xpose.msra.mxu0 0
    %826 = vmatpush.bf16.xpose.msra.mxu0 %v817
    %827 = vmatmul.bf16.gmra.mxu0 %v814
    %v828 = vpop.f32.mrf.mxu0
    %v829 = vadd.f32 %v697, %v828
    %v830 = vpop.f32.mrf.mxu0
    %831 = vdwg.mxu0
    %832 = vrot.lane.b32.xlu0 %v720, 104
    %v833 = vpop.permute.xlu0 %832
    %v835 = vsel %vm698, %v833, 0
    %837 = vmatpush.bf16.xpose.msra.mxu0 0
    %838 = vmatpush.bf16.xpose.msra.mxu0 0
    %839 = vmatpush.bf16.xpose.msra.mxu0 0
    %840 = vmatpush.bf16.xpose.msra.mxu0 0
    %841 = vmatpush.bf16.xpose.msra.mxu0 0
    %842 = vmatpush.bf16.xpose.msra.mxu0 0
    %843 = vmatpush.bf16.xpose.msra.mxu0 0
    %844 = vmatpush.bf16.xpose.msra.mxu0 %v835
    %845 = vmatmul.bf16.gmra.mxu0 %v814
    %v846 = vpop.f32.mrf.mxu0
    %v847 = vadd.f32 %v652, %v846
    %v848 = vpop.f32.mrf.mxu0
    %849 = vdwg.mxu0
    %v850 = vsel %vm698, %v829, -inf
    %851 = vmax.xlane.f32.xlu0 %v850
    %v852 = vpop.xlane.xlu0 %851
    %v853 = vsel %vm698, %v847, -inf
    %854 = vmax.xlane.f32.xlu0 %v853
    %v855 = vpop.xlane.xlu0 %854
    %v856 = vmax.f32 %v852, %v855
    %v857 = vsub.f32 %v829, %v856
    %v858 = vmul.f32 %v857, 1.442695
    %v859 = vpow.pop %v858
    %v860 = vsub.f32 %v847, %v856
    %v861 = vmul.f32 %v860, 1.442695
    %v862 = vpow.pop %v861
    %v863 = vsel %vm698, %v859, 0.0
    %864 = vadd.xlane.f32.xlu0 %v863
    %v865 = vpop.xlane.xlu0 %864
    %v866 = vsel %vm698, %v862, 0.0
    %867 = vadd.xlane.f32.xlu0 %v866
    %v868 = vpop.xlane.xlu0 %867
    %v869 = vadd.f32 %v865, %v868
    %v870 = vpack.c.bf16 %v859, %v859
    %v871 = vpack.c.bf16 %v862, %v862
    %872 = vrot.lane.b32.xlu0 %v720, 88
    %v873 = vpop.permute.xlu0 %872
    %v875 = vsel %vm698, %v871, 0
    %v878 = vsel %vm766, %v873, 0
    %880 = vmatpush.bf16.msra.mxu0 0
    %881 = vmatpush.bf16.msra.mxu0 0
    %882 = vmatpush.bf16.msra.mxu0 0
    %883 = vmatpush.bf16.msra.mxu0 0
    %884 = vmatpush.bf16.msra.mxu0 0
    %885 = vmatpush.bf16.msra.mxu0 0
    %886 = vmatpush.bf16.msra.mxu0 0
    %887 = vmatpush.bf16.msra.mxu0 %v878
    %888 = vmatmul.bf16.gmra.mxu0 %v875
    %v889 = vpop.f32.mrf.mxu0
    %v890 = vadd.f32 0.0, %v889
    %v891 = vpop.f32.mrf.mxu0
    %892 = vdwg.mxu0
    %893 = vrot.lane.b32.xlu0 %v785, 104
    %v894 = vpop.permute.xlu0 %893
    %v896 = vsel %vm698, %v870, 0
    %v899 = vsel %vm766, %v894, 0
    %901 = vmatpush.bf16.msra.mxu0 0
    %902 = vmatpush.bf16.msra.mxu0 0
    %903 = vmatpush.bf16.msra.mxu0 0
    %904 = vmatpush.bf16.msra.mxu0 0
    %905 = vmatpush.bf16.msra.mxu0 0
    %906 = vmatpush.bf16.msra.mxu0 0
    %907 = vmatpush.bf16.msra.mxu0 0
    %908 = vmatpush.bf16.msra.mxu0 %v899
    %909 = vmatmul.bf16.gmra.mxu0 %v896
    %v910 = vpop.f32.mrf.mxu0
    %v911 = vadd.f32 %v890, %v910
    %v912 = vpop.f32.mrf.mxu0
    %913 = vdwg.mxu0
    %v914 = vrcp.pop %v869
    %v915 = vmul.f32 %v911, %v914
    %917 = vrot.lane.b32.xlu0 %v915, 8
    %v918 = vpop.permute.xlu0 %917
    %v920 = vsel %vm698, %v808, %v918
    %v921 = vperm.slane %v646, 1
    %v923 = vsel %vm698, %v696, 0
    %v926 = vsel %vm698, %v196, 0
    %928 = vmatpush.bf16.xpose.msra.mxu0 0
    %929 = vmatpush.bf16.xpose.msra.mxu0 0
    %930 = vmatpush.bf16.xpose.msra.mxu0 0
    %931 = vmatpush.bf16.xpose.msra.mxu0 0
    %932 = vmatpush.bf16.xpose.msra.mxu0 0
    %933 = vmatpush.bf16.xpose.msra.mxu0 0
    %934 = vmatpush.bf16.xpose.msra.mxu0 0
    %935 = vmatpush.bf16.xpose.msra.mxu0 %v926
    %936 = vmatmul.bf16.gmra.mxu0 %v923
    %v937 = vpop.f32.mrf.mxu0
    %v938 = vadd.f32 %v921, %v937
    %v939 = vpop.f32.mrf.mxu0
    %940 = vdwg.mxu0
    %v942 = vunpack.c.l.b16 %v696
    %v943 = vpack.c.b16 %v942, %v942
    %944 = vrot.lane.b32.xlu0 %v943, 112
    %v945 = vpop.permute.xlu0 %944
    %v947 = vsel %vm698, %v945, 0
    %949 = vmatpush.bf16.xpose.msra.mxu0 0
    %950 = vmatpush.bf16.xpose.msra.mxu0 0
    %951 = vmatpush.bf16.xpose.msra.mxu0 0
    %952 = vmatpush.bf16.xpose.msra.mxu0 0
    %953 = vmatpush.bf16.xpose.msra.mxu0 0
    %954 = vmatpush.bf16.xpose.msra.mxu0 0
    %955 = vmatpush.bf16.xpose.msra.mxu0 0
    %956 = vmatpush.bf16.xpose.msra.mxu0 %v947
    %957 = vmatmul.bf16.gmra.mxu0 %v923
    %v958 = vpop.f32.mrf.mxu0
    %v959 = vadd.f32 %v656, %v958
    %v960 = vpop.f32.mrf.mxu0
    %961 = vdwg.mxu0
    %v962 = vsel %vm698, %v938, -inf
    %963 = vmax.xlane.f32.xlu0 %v962
    %v964 = vpop.xlane.xlu0 %963
    %v965 = vsel %vm698, %v959, -inf
    %966 = vmax.xlane.f32.xlu0 %v965
    %v967 = vpop.xlane.xlu0 %966
    %v968 = vmax.f32 %v964, %v967
    %v969 = vsub.f32 %v938, %v968
    %v970 = vmul.f32 %v969, 1.442695
    %v971 = vpow.pop %v970
    %v972 = vsub.f32 %v959, %v968
    %v973 = vmul.f32 %v972, 1.442695
    %v974 = vpow.pop %v973
    %v975 = vsel %vm698, %v971, 0.0
    %976 = vadd.xlane.f32.xlu0 %v975
    %v977 = vpop.xlane.xlu0 %976
    %v978 = vsel %vm698, %v974, 0.0
    %979 = vadd.xlane.f32.xlu0 %v978
    %v980 = vpop.xlane.xlu0 %979
    %v981 = vadd.f32 %v977, %v980
    %v982 = vpack.c.bf16 %v971, %v971
    %v983 = vpack.c.bf16 %v974, %v974
    %984 = vrot.lane.b32.xlu0 %v943, 96
    %v985 = vpop.permute.xlu0 %984
    %v987 = vsel %vm698, %v983, 0
    %v990 = vsel %vm766, %v985, 0
    %992 = vmatpush.bf16.msra.mxu0 0
    %993 = vmatpush.bf16.msra.mxu0 0
    %994 = vmatpush.bf16.msra.mxu0 0
    %995 = vmatpush.bf16.msra.mxu0 0
    %996 = vmatpush.bf16.msra.mxu0 0
    %997 = vmatpush.bf16.msra.mxu0 0
    %998 = vmatpush.bf16.msra.mxu0 0
    %999 = vmatpush.bf16.msra.mxu0 %v990
    %1000 = vmatmul.bf16.gmra.mxu0 %v987
    %v1001 = vpop.f32.mrf.mxu0
    %v1002 = vadd.f32 0.0, %v1001
    %v1003 = vpop.f32.mrf.mxu0
    %1004 = vdwg.mxu0
    %v1006 = vunpack.c.l.b16 %v196
    %v1007 = vpack.c.b16 %v1006, %v1006
    %1008 = vrot.lane.b32.xlu0 %v1007, 112
    %v1009 = vpop.permute.xlu0 %1008
    %v1011 = vsel %vm698, %v982, 0
    %v1014 = vsel %vm766, %v1009, 0
    %1016 = vmatpush.bf16.msra.mxu0 0
    %1017 = vmatpush.bf16.msra.mxu0 0
    %1018 = vmatpush.bf16.msra.mxu0 0
    %1019 = vmatpush.bf16.msra.mxu0 0
    %1020 = vmatpush.bf16.msra.mxu0 0
    %1021 = vmatpush.bf16.msra.mxu0 0
    %1022 = vmatpush.bf16.msra.mxu0 0
    %1023 = vmatpush.bf16.msra.mxu0 %v1014
    %1024 = vmatmul.bf16.gmra.mxu0 %v1011
    %v1025 = vpop.f32.mrf.mxu0
    %v1026 = vadd.f32 %v1002, %v1025
    %v1027 = vpop.f32.mrf.mxu0
    %1028 = vdwg.mxu0
    %v1029 = vrcp.pop %v981
    %v1030 = vmul.f32 %v1026, %v1029
    %1031 = vrot.lane.b32.xlu0 %v943, 120
    %v1032 = vpop.permute.xlu0 %1031
    %1033 = vrot.lane.b32.xlu0 %v1007, 120
    %v1034 = vpop.permute.xlu0 %1033
    %v1036 = vsel %vm698, %v1032, 0
    %v1039 = vsel %vm698, %v1034, 0
    %1041 = vmatpush.bf16.xpose.msra.mxu0 0
    %1042 = vmatpush.bf16.xpose.msra.mxu0 0
    %1043 = vmatpush.bf16.xpose.msra.mxu0 0
    %1044 = vmatpush.bf16.xpose.msra.mxu0 0
    %1045 = vmatpush.bf16.xpose.msra.mxu0 0
    %1046 = vmatpush.bf16.xpose.msra.mxu0 0
    %1047 = vmatpush.bf16.xpose.msra.mxu0 0
    %1048 = vmatpush.bf16.xpose.msra.mxu0 %v1039
    %1049 = vmatmul.bf16.gmra.mxu0 %v1036
    %v1050 = vpop.f32.mrf.mxu0
    %v1051 = vadd.f32 %v921, %v1050
    %v1052 = vpop.f32.mrf.mxu0
    %1053 = vdwg.mxu0
    %1054 = vrot.lane.b32.xlu0 %v943, 104
    %v1055 = vpop.permute.xlu0 %1054
    %v1057 = vsel %vm698, %v1055, 0
    %1059 = vmatpush.bf16.xpose.msra.mxu0 0
    %1060 = vmatpush.bf16.xpose.msra.mxu0 0
    %1061 = vmatpush.bf16.xpose.msra.mxu0 0
    %1062 = vmatpush.bf16.xpose.msra.mxu0 0
    %1063 = vmatpush.bf16.xpose.msra.mxu0 0
    %1064 = vmatpush.bf16.xpose.msra.mxu0 0
    %1065 = vmatpush.bf16.xpose.msra.mxu0 0
    %1066 = vmatpush.bf16.xpose.msra.mxu0 %v1057
    %1067 = vmatmul.bf16.gmra.mxu0 %v1036
    %v1068 = vpop.f32.mrf.mxu0
    %v1069 = vadd.f32 %v656, %v1068
    %v1070 = vpop.f32.mrf.mxu0
    %1071 = vdwg.mxu0
    %v1072 = vsel %vm698, %v1051, -inf
    %1073 = vmax.xlane.f32.xlu0 %v1072
    %v1074 = vpop.xlane.xlu0 %1073
    %v1075 = vsel %vm698, %v1069, -inf
    %1076 = vmax.xlane.f32.xlu0 %v1075
    %v1077 = vpop.xlane.xlu0 %1076
    %v1078 = vmax.f32 %v1074, %v1077
    %v1079 = vsub.f32 %v1051, %v1078
    %v1080 = vmul.f32 %v1079, 1.442695
    %v1081 = vpow.pop %v1080
    %v1082 = vsub.f32 %v1069, %v1078
    %v1083 = vmul.f32 %v1082, 1.442695
    %v1084 = vpow.pop %v1083
    %v1085 = vsel %vm698, %v1081, 0.0
    %1086 = vadd.xlane.f32.xlu0 %v1085
    %v1087 = vpop.xlane.xlu0 %1086
    %v1088 = vsel %vm698, %v1084, 0.0
    %1089 = vadd.xlane.f32.xlu0 %v1088
    %v1090 = vpop.xlane.xlu0 %1089
    %v1091 = vadd.f32 %v1087, %v1090
    %v1092 = vpack.c.bf16 %v1081, %v1081
    %v1093 = vpack.c.bf16 %v1084, %v1084
    %1094 = vrot.lane.b32.xlu0 %v943, 88
    %v1095 = vpop.permute.xlu0 %1094
    %v1097 = vsel %vm698, %v1093, 0
    %v1100 = vsel %vm766, %v1095, 0
    %1102 = vmatpush.bf16.msra.mxu0 0
    %1103 = vmatpush.bf16.msra.mxu0 0
    %1104 = vmatpush.bf16.msra.mxu0 0
    %1105 = vmatpush.bf16.msra.mxu0 0
    %1106 = vmatpush.bf16.msra.mxu0 0
    %1107 = vmatpush.bf16.msra.mxu0 0
    %1108 = vmatpush.bf16.msra.mxu0 0
    %1109 = vmatpush.bf16.msra.mxu0 %v1100
    %1110 = vmatmul.bf16.gmra.mxu0 %v1097
    %v1111 = vpop.f32.mrf.mxu0
    %v1112 = vadd.f32 0.0, %v1111
    %v1113 = vpop.f32.mrf.mxu0
    %1114 = vdwg.mxu0
    %1115 = vrot.lane.b32.xlu0 %v1007, 104
    %v1116 = vpop.permute.xlu0 %1115
    %v1118 = vsel %vm698, %v1092, 0
    %v1121 = vsel %vm766, %v1116, 0
    %1123 = vmatpush.bf16.msra.mxu0 0
    %1124 = vmatpush.bf16.msra.mxu0 0
    %1125 = vmatpush.bf16.msra.mxu0 0
    %1126 = vmatpush.bf16.msra.mxu0 0
    %1127 = vmatpush.bf16.msra.mxu0 0
    %1128 = vmatpush.bf16.msra.mxu0 0
    %1129 = vmatpush.bf16.msra.mxu0 0
    %1130 = vmatpush.bf16.msra.mxu0 %v1121
    %1131 = vmatmul.bf16.gmra.mxu0 %v1118
    %v1132 = vpop.f32.mrf.mxu0
    %v1133 = vadd.f32 %v1112, %v1132
    %v1134 = vpop.f32.mrf.mxu0
    %1135 = vdwg.mxu0
    %v1136 = vrcp.pop %v1091
    %v1137 = vmul.f32 %v1133, %v1136
    %1139 = vrot.lane.b32.xlu0 %v1137, 8
    %v1140 = vpop.permute.xlu0 %1139
    %v1142 = vsel %vm698, %v1030, %v1140
    %v1143 = vpack.c.bf16 %v1142, %v920
    %v1144 = vld [vmem:[%s17] sm:$0xf]
    %v1145 = vld [vmem:[%s17 + $0x4] sm:$0xf]
    %v1148 = vunpack.c.l.b16 %v1144
    %v1149 = vunpack.c.l.b16 %v1145
    %v1150 = vpack.c.b16 %v1149, %v1148
    %vm1152 = vcmask 130048
    %v1154 = vsel %vm1152, %v1143, 0
    %1156 = vmatpush.bf16.msra.mxu0 0
    %1157 = vmatpush.bf16.msra.mxu0 0
    %1158 = vmatpush.bf16.msra.mxu0 0
    %1159 = vmatpush.bf16.msra.mxu0 0
    %1160 = vmatpush.bf16.msra.mxu0 0
    %1161 = vmatpush.bf16.msra.mxu0 0
    %1162 = vmatpush.bf16.msra.mxu0 0
    %1163 = vmatpush.bf16.msra.mxu0 %v1150
    %1164 = vmatmul.bf16.gmra.mxu0 %v1154
    %v1165 = vpop.f32.mrf.mxu0
    %v1166 = vadd.f32 0.0, %v1165
    %v1167 = vpop.f32.mrf.mxu0
    %v1168 = vadd.f32 0.0, %v1167
    %1169 = vdwg.mxu0
    %v1170 = vadd.f32 %v635, %v1166
    %v1171 = vadd.f32 %v638, %v1168
    %v1172 = vld [vmem:[%s18] sm:$0x1]
    %v1174 = vperm.slane %v1172, 0
    %v1176 = vadd.f32 %v1170, %v1174
    %v1177 = vadd.f32 %v1171, %v1174
    %v1178 = vpack.c.bf16 %v1177, %v1176
    %v1179 = vld [vmem:[%s19] sm:$0xf]
    %v1180 = vld [vmem:[%s19 + $0x4] sm:$0xf]
    %v1181 = vld [vmem:[%s19 + $0x8] sm:$0xf]
    %v1182 = vld [vmem:[%s19 + $0xc] sm:$0xf]
    %v1183 = vld [vmem:[%s20] sm:$0x1]
    %v1185 = vperm.slane %v1183, 0
    %v1191 = vunpack.c.l.b16 %v1179
    %v1192 = vunpack.c.l.b16 %v1180
    %v1193 = vunpack.c.l.b16 %v1181
    %v1194 = vunpack.c.l.b16 %v1182
    %v1195 = vpack.c.b16 %v1192, %v1191
    %v1196 = vpack.c.b16 %v1194, %v1193
    %v1200 = vsel %vm587, %v1178, 0
    %1202 = vmatpush.bf16.msra.mxu0 0
    %1203 = vmatpush.bf16.msra.mxu0 0
    %1204 = vmatpush.bf16.msra.mxu0 0
    %1205 = vmatpush.bf16.msra.mxu0 0
    %1206 = vmatpush.bf16.msra.mxu0 0
    %1207 = vmatpush.bf16.msra.mxu0 0
    %1208 = vmatpush.bf16.msra.mxu0 %v1196
    %1209 = vmatpush.bf16.msra.mxu0 %v1195
    %1210 = vmatmul.bf16.gmra.mxu0 %v1200
    %v1211 = vpop.f32.mrf.mxu0
    %v1212 = vadd.f32 %v1185, %v1211
    %v1213 = vpop.f32.mrf.mxu0
    %v1214 = vadd.f32 %v1185, %v1213
    %1215 = vdwg.mxu0
    %v1216 = vmul.f32 %v1212, %v1212
    %v1217 = vmul.f32 %v1214, %v1214
    %v1218 = vmul.f32 %v1212, %v1216
    %v1219 = vmul.f32 %v1214, %v1217
    %v1220 = vmul.f32 %v1218, 0.044715
    %v1221 = vmul.f32 %v1219, 0.044715
    %v1222 = vadd.f32 %v1212, %v1220
    %v1223 = vadd.f32 %v1214, %v1221
    %v1224 = vmul.f32 %v1222, 0.7978846
    %v1225 = vmul.f32 %v1223, 0.7978846
    %v1226 = vtanh.pop %v1224
    %v1227 = vtanh.pop %v1225
    %v1228 = vadd.f32 %v1226, 1.0
    %v1229 = vadd.f32 %v1227, 1.0
    %v1230 = vmul.f32 %v1228, 0.5
    %v1231 = vmul.f32 %v1229, 0.5
    %v1232 = vmul.f32 %v1212, %v1230
    %v1233 = vmul.f32 %v1214, %v1231
    %v1234 = vpack.c.bf16 %v1233, %v1232
    %v1235 = vld [vmem:[%s21] sm:$0xf]
    %v1236 = vld [vmem:[%s21 + $0x4] sm:$0xf]
    %v1237 = vld [vmem:[%s21 + $0x8] sm:$0xf]
    %v1238 = vld [vmem:[%s21 + $0xc] sm:$0xf]
    %v1239 = vld [vmem:[%s21 + $0x10] sm:$0xf]
    %v1240 = vld [vmem:[%s21 + $0x14] sm:$0xf]
    %v1241 = vld [vmem:[%s21 + $0x18] sm:$0xf]
    %v1242 = vld [vmem:[%s21 + $0x1c] sm:$0xf]
    %v1243 = vld [vmem:[%s21 + $0x20] sm:$0xf]
    %v1244 = vld [vmem:[%s21 + $0x24] sm:$0xf]
    %v1245 = vld [vmem:[%s21 + $0x28] sm:$0xf]
    %v1246 = vld [vmem:[%s21 + $0x2c] sm:$0xf]
    %v1247 = vld [vmem:[%s21 + $0x30] sm:$0xf]
    %v1248 = vld [vmem:[%s21 + $0x34] sm:$0xf]
    %v1249 = vld [vmem:[%s21 + $0x38] sm:$0xf]
    %v1250 = vld [vmem:[%s21 + $0x3c] sm:$0xf]
    %v1267 = vunpack.c.l.b16 %v1235
    %v1268 = vunpack.c.l.b16 %v1236
    %v1269 = vunpack.c.l.b16 %v1237
    %v1270 = vunpack.c.l.b16 %v1238
    %v1271 = vunpack.c.l.b16 %v1239
    %v1272 = vunpack.c.l.b16 %v1240
    %v1273 = vunpack.c.l.b16 %v1241
    %v1274 = vunpack.c.l.b16 %v1242
    %v1275 = vunpack.c.l.b16 %v1243
    %v1276 = vunpack.c.l.b16 %v1244
    %v1277 = vunpack.c.l.b16 %v1245
    %v1278 = vunpack.c.l.b16 %v1246
    %v1279 = vunpack.c.l.b16 %v1247
    %v1280 = vunpack.c.l.b16 %v1248
    %v1281 = vunpack.c.l.b16 %v1249
    %v1282 = vunpack.c.l.b16 %v1250
    %v1283 = vpack.c.b16 %v1268, %v1267
    %v1284 = vpack.c.b16 %v1270, %v1269
    %v1285 = vpack.c.b16 %v1272, %v1271
    %v1286 = vpack.c.b16 %v1274, %v1273
    %v1287 = vpack.c.b16 %v1276, %v1275
    %v1288 = vpack.c.b16 %v1278, %v1277
    %v1289 = vpack.c.b16 %v1280, %v1279
    %v1290 = vpack.c.b16 %v1282, %v1281
    %1299 = vmatpush.bf16.msra.mxu0 %v1290
    %1300 = vmatpush.bf16.msra.mxu0 %v1289
    %1301 = vmatpush.bf16.msra.mxu0 %v1288
    %1302 = vmatpush.bf16.msra.mxu0 %v1287
    %1303 = vmatpush.bf16.msra.mxu0 %v1286
    %1304 = vmatpush.bf16.msra.mxu0 %v1285
    %1305 = vmatpush.bf16.msra.mxu0 %v1284
    %1306 = vmatpush.bf16.msra.mxu0 %v1283
    %1307 = vmatmul.bf16.gmra.mxu0 %v1234
    %v1308 = vpop.f32.mrf.mxu0
    %v1309 = vadd.f32 0.0, %v1308
    %v1310 = vpop.f32.mrf.mxu0
    %v1311 = vadd.f32 0.0, %v1310
    %1312 = vdwg.mxu0
    %v1313 = vadd.f32 %v1176, %v1309
    %v1314 = vadd.f32 %v1177, %v1311
    %v1315 = vld [vmem:[%s22] sm:$0x1]
    %v1317 = vperm.slane %v1315, 0
    %v1319 = vadd.f32 %v1313, %v1317
    %v1320 = vadd.f32 %v1314, %v1317
    %v1321 = vpack.c.bf16 %v1320, %v1319
    %s1322 = scalar_lea.vmem %s15, 16
    %v1323 = vld [vmem:[%s1322] sm:$0xf]
    %v1324 = vld [vmem:[%s1322 + $0x4] sm:$0xf]
    %v1325 = vld [vmem:[%s1322 + $0x8] sm:$0xf]
    %v1326 = vld [vmem:[%s1322 + $0xc] sm:$0xf]
    %s1327 = scalar_lea.vmem %s16, 1
    %v1328 = vld [vmem:[%s1327] sm:$0x1]
    %v1330 = vperm.slane %v1328, 0
    %v1336 = vunpack.c.l.b16 %v1323
    %v1337 = vunpack.c.l.b16 %v1324
    %v1338 = vunpack.c.l.b16 %v1325
    %v1339 = vunpack.c.l.b16 %v1326
    %v1340 = vpack.c.b16 %v1337, %v1336
    %v1341 = vpack.c.b16 %v1339, %v1338
    %v1345 = vsel %vm587, %v1321, 0
    %1347 = vmatpush.bf16.msra.mxu0 0
    %1348 = vmatpush.bf16.msra.mxu0 0
    %1349 = vmatpush.bf16.msra.mxu0 0
    %1350 = vmatpush.bf16.msra.mxu0 0
    %1351 = vmatpush.bf16.msra.mxu0 0
    %1352 = vmatpush.bf16.msra.mxu0 0
    %1353 = vmatpush.bf16.msra.mxu0 %v1341
    %1354 = vmatpush.bf16.msra.mxu0 %v1340
    %1355 = vmatmul.bf16.gmra.mxu0 %v1345
    %v1356 = vpop.f32.mrf.mxu0
    %v1357 = vadd.f32 %v1330, %v1356
    %v1358 = vpop.f32.mrf.mxu0
    %v1359 = vadd.f32 %v1330, %v1358
    %1360 = vdwg.mxu0
    %v1361 = vpack.c.bf16 %v1357, %v1357
    %v1362 = vpack.c.bf16 %v1359, %v1359
    %v1364 = vsel %vm698, %v1361, 0
    %v1367 = vsel %vm698, %v537, 0
    %1369 = vmatpush.bf16.xpose.msra.mxu0 0
    %1370 = vmatpush.bf16.xpose.msra.mxu0 0
    %1371 = vmatpush.bf16.xpose.msra.mxu0 0
    %1372 = vmatpush.bf16.xpose.msra.mxu0 0
    %1373 = vmatpush.bf16.xpose.msra.mxu0 0
    %1374 = vmatpush.bf16.xpose.msra.mxu0 0
    %1375 = vmatpush.bf16.xpose.msra.mxu0 0
    %1376 = vmatpush.bf16.xpose.msra.mxu0 %v1367
    %1377 = vmatmul.bf16.gmra.mxu0 %v1364
    %v1378 = vpop.f32.mrf.mxu0
    %v1379 = vadd.f32 %v697, %v1378
    %v1380 = vpop.f32.mrf.mxu0
    %1381 = vdwg.mxu0
    %v1383 = vunpack.c.l.b16 %v1361
    %v1384 = vpack.c.b16 %v1383, %v1383
    %1385 = vrot.lane.b32.xlu0 %v1384, 112
    %v1386 = vpop.permute.xlu0 %1385
    %v1388 = vsel %vm698, %v1386, 0
    %1390 = vmatpush.bf16.xpose.msra.mxu0 0
    %1391 = vmatpush.bf16.xpose.msra.mxu0 0
    %1392 = vmatpush.bf16.xpose.msra.mxu0 0
    %1393 = vmatpush.bf16.xpose.msra.mxu0 0
    %1394 = vmatpush.bf16.xpose.msra.mxu0 0
    %1395 = vmatpush.bf16.xpose.msra.mxu0 0
    %1396 = vmatpush.bf16.xpose.msra.mxu0 0
    %1397 = vmatpush.bf16.xpose.msra.mxu0 %v1388
    %1398 = vmatmul.bf16.gmra.mxu0 %v1364
    %v1399 = vpop.f32.mrf.mxu0
    %v1400 = vadd.f32 %v652, %v1399
    %v1401 = vpop.f32.mrf.mxu0
    %1402 = vdwg.mxu0
    %v1403 = vsel %vm698, %v1379, -inf
    %1404 = vmax.xlane.f32.xlu0 %v1403
    %v1405 = vpop.xlane.xlu0 %1404
    %v1406 = vsel %vm698, %v1400, -inf
    %1407 = vmax.xlane.f32.xlu0 %v1406
    %v1408 = vpop.xlane.xlu0 %1407
    %v1409 = vmax.f32 %v1405, %v1408
    %v1410 = vsub.f32 %v1379, %v1409
    %v1411 = vmul.f32 %v1410, 1.442695
    %v1412 = vpow.pop %v1411
    %v1413 = vsub.f32 %v1400, %v1409
    %v1414 = vmul.f32 %v1413, 1.442695
    %v1415 = vpow.pop %v1414
    %v1416 = vsel %vm698, %v1412, 0.0
    %1417 = vadd.xlane.f32.xlu0 %v1416
    %v1418 = vpop.xlane.xlu0 %1417
    %v1419 = vsel %vm698, %v1415, 0.0
    %1420 = vadd.xlane.f32.xlu0 %v1419
    %v1421 = vpop.xlane.xlu0 %1420
    %v1422 = vadd.f32 %v1418, %v1421
    %v1423 = vpack.c.bf16 %v1412, %v1412
    %v1424 = vpack.c.bf16 %v1415, %v1415
    %1425 = vrot.lane.b32.xlu0 %v1384, 96
    %v1426 = vpop.permute.xlu0 %1425
    %v1428 = vsel %vm698, %v1424, 0
    %v1431 = vsel %vm766, %v1426, 0
    %1433 = vmatpush.bf16.msra.mxu0 0
    %1434 = vmatpush.bf16.msra.mxu0 0
    %1435 = vmatpush.bf16.msra.mxu0 0
    %1436 = vmatpush.bf16.msra.mxu0 0
    %1437 = vmatpush.bf16.msra.mxu0 0
    %1438 = vmatpush.bf16.msra.mxu0 0
    %1439 = vmatpush.bf16.msra.mxu0 0
    %1440 = vmatpush.bf16.msra.mxu0 %v1431
    %1441 = vmatmul.bf16.gmra.mxu0 %v1428
    %v1442 = vpop.f32.mrf.mxu0
    %v1443 = vadd.f32 0.0, %v1442
    %v1444 = vpop.f32.mrf.mxu0
    %1445 = vdwg.mxu0
    %v1447 = vunpack.c.l.b16 %v537
    %v1448 = vpack.c.b16 %v1447, %v1447
    %1449 = vrot.lane.b32.xlu0 %v1448, 112
    %v1450 = vpop.permute.xlu0 %1449
    %v1452 = vsel %vm698, %v1423, 0
    %v1455 = vsel %vm766, %v1450, 0
    %1457 = vmatpush.bf16.msra.mxu0 0
    %1458 = vmatpush.bf16.msra.mxu0 0
    %1459 = vmatpush.bf16.msra.mxu0 0
    %1460 = vmatpush.bf16.msra.mxu0 0
    %1461 = vmatpush.bf16.msra.mxu0 0
    %1462 = vmatpush.bf16.msra.mxu0 0
    %1463 = vmatpush.bf16.msra.mxu0 0
    %1464 = vmatpush.bf16.msra.mxu0 %v1455
    %1465 = vmatmul.bf16.gmra.mxu0 %v1452
    %v1466 = vpop.f32.mrf.mxu0
    %v1467 = vadd.f32 %v1443, %v1466
    %v1468 = vpop.f32.mrf.mxu0
    %1469 = vdwg.mxu0
    %v1470 = vrcp.pop %v1422
    %v1471 = vmul.f32 %v1467, %v1470
    %1472 = vrot.lane.b32.xlu0 %v1384, 120
    %v1473 = vpop.permute.xlu0 %1472
    %1474 = vrot.lane.b32.xlu0 %v1448, 120
    %v1475 = vpop.permute.xlu0 %1474
    %v1477 = vsel %vm698, %v1473, 0
    %v1480 = vsel %vm698, %v1475, 0
    %1482 = vmatpush.bf16.xpose.msra.mxu0 0
    %1483 = vmatpush.bf16.xpose.msra.mxu0 0
    %1484 = vmatpush.bf16.xpose.msra.mxu0 0
    %1485 = vmatpush.bf16.xpose.msra.mxu0 0
    %1486 = vmatpush.bf16.xpose.msra.mxu0 0
    %1487 = vmatpush.bf16.xpose.msra.mxu0 0
    %1488 = vmatpush.bf16.xpose.msra.mxu0 0
    %1489 = vmatpush.bf16.xpose.msra.mxu0 %v1480
    %1490 = vmatmul.bf16.gmra.mxu0 %v1477
    %v1491 = vpop.f32.mrf.mxu0
    %v1492 = vadd.f32 %v697, %v1491
    %v1493 = vpop.f32.mrf.mxu0
    %1494 = vdwg.mxu0
    %1495 = vrot.lane.b32.xlu0 %v1384, 104
    %v1496 = vpop.permute.xlu0 %1495
    %v1498 = vsel %vm698, %v1496, 0
    %1500 = vmatpush.bf16.xpose.msra.mxu0 0
    %1501 = vmatpush.bf16.xpose.msra.mxu0 0
    %1502 = vmatpush.bf16.xpose.msra.mxu0 0
    %1503 = vmatpush.bf16.xpose.msra.mxu0 0
    %1504 = vmatpush.bf16.xpose.msra.mxu0 0
    %1505 = vmatpush.bf16.xpose.msra.mxu0 0
    %1506 = vmatpush.bf16.xpose.msra.mxu0 0
    %1507 = vmatpush.bf16.xpose.msra.mxu0 %v1498
    %1508 = vmatmul.bf16.gmra.mxu0 %v1477
    %v1509 = vpop.f32.mrf.mxu0
    %v1510 = vadd.f32 %v652, %v1509
    %v1511 = vpop.f32.mrf.mxu0
    %1512 = vdwg.mxu0
    %v1513 = vsel %vm698, %v1492, -inf
    %1514 = vmax.xlane.f32.xlu0 %v1513
    %v1515 = vpop.xlane.xlu0 %1514
    %v1516 = vsel %vm698, %v1510, -inf
    %1517 = vmax.xlane.f32.xlu0 %v1516
    %v1518 = vpop.xlane.xlu0 %1517
    %v1519 = vmax.f32 %v1515, %v1518
    %v1520 = vsub.f32 %v1492, %v1519
    %v1521 = vmul.f32 %v1520, 1.442695
    %v1522 = vpow.pop %v1521
    %v1523 = vsub.f32 %v1510, %v1519
    %v1524 = vmul.f32 %v1523, 1.442695
    %v1525 = vpow.pop %v1524
    %v1526 = vsel %vm698, %v1522, 0.0
    %1527 = vadd.xlane.f32.xlu0 %v1526
    %v1528 = vpop.xlane.xlu0 %1527
    %v1529 = vsel %vm698, %v1525, 0.0
    %1530 = vadd.xlane.f32.xlu0 %v1529
    %v1531 = vpop.xlane.xlu0 %1530
    %v1532 = vadd.f32 %v1528, %v1531
    %v1533 = vpack.c.bf16 %v1522, %v1522
    %v1534 = vpack.c.bf16 %v1525, %v1525
    %1535 = vrot.lane.b32.xlu0 %v1384, 88
    %v1536 = vpop.permute.xlu0 %1535
    %v1538 = vsel %vm698, %v1534, 0
    %v1541 = vsel %vm766, %v1536, 0
    %1543 = vmatpush.bf16.msra.mxu0 0
    %1544 = vmatpush.bf16.msra.mxu0 0
    %1545 = vmatpush.bf16.msra.mxu0 0
    %1546 = vmatpush.bf16.msra.mxu0 0
    %1547 = vmatpush.bf16.msra.mxu0 0
    %1548 = vmatpush.bf16.msra.mxu0 0
    %1549 = vmatpush.bf16.msra.mxu0 0
    %1550 = vmatpush.bf16.msra.mxu0 %v1541
    %1551 = vmatmul.bf16.gmra.mxu0 %v1538
    %v1552 = vpop.f32.mrf.mxu0
    %v1553 = vadd.f32 0.0, %v1552
    %v1554 = vpop.f32.mrf.mxu0
    %1555 = vdwg.mxu0
    %1556 = vrot.lane.b32.xlu0 %v1448, 104
    %v1557 = vpop.permute.xlu0 %1556
    %v1559 = vsel %vm698, %v1533, 0
    %v1562 = vsel %vm766, %v1557, 0
    %1564 = vmatpush.bf16.msra.mxu0 0
    %1565 = vmatpush.bf16.msra.mxu0 0
    %1566 = vmatpush.bf16.msra.mxu0 0
    %1567 = vmatpush.bf16.msra.mxu0 0
    %1568 = vmatpush.bf16.msra.mxu0 0
    %1569 = vmatpush.bf16.msra.mxu0 0
    %1570 = vmatpush.bf16.msra.mxu0 0
    %1571 = vmatpush.bf16.msra.mxu0 %v1562
    %1572 = vmatmul.bf16.gmra.mxu0 %v1559
    %v1573 = vpop.f32.mrf.mxu0
    %v1574 = vadd.f32 %v1553, %v1573
    %v1575 = vpop.f32.mrf.mxu0
    %1576 = vdwg.mxu0
    %v1577 = vrcp.pop %v1532
    %v1578 = vmul.f32 %v1574, %v1577
    %1580 = vrot.lane.b32.xlu0 %v1578, 8
    %v1581 = vpop.permute.xlu0 %1580
    %v1583 = vsel %vm698, %v1471, %v1581
    %v1585 = vsel %vm698, %v1362, 0
    %v1588 = vsel %vm698, %v538, 0
    %1590 = vmatpush.bf16.xpose.msra.mxu0 0
    %1591 = vmatpush.bf16.xpose.msra.mxu0 0
    %1592 = vmatpush.bf16.xpose.msra.mxu0 0
    %1593 = vmatpush.bf16.xpose.msra.mxu0 0
    %1594 = vmatpush.bf16.xpose.msra.mxu0 0
    %1595 = vmatpush.bf16.xpose.msra.mxu0 0
    %1596 = vmatpush.bf16.xpose.msra.mxu0 0
    %1597 = vmatpush.bf16.xpose.msra.mxu0 %v1588
    %1598 = vmatmul.bf16.gmra.mxu0 %v1585
    %v1599 = vpop.f32.mrf.mxu0
    %v1600 = vadd.f32 %v921, %v1599
    %v1601 = vpop.f32.mrf.mxu0
    %1602 = vdwg.mxu0
    %v1604 = vunpack.c.l.b16 %v1362
    %v1605 = vpack.c.b16 %v1604, %v1604
    %1606 = vrot.lane.b32.xlu0 %v1605, 112
    %v1607 = vpop.permute.xlu0 %1606
    %v1609 = vsel %vm698, %v1607, 0
    %1611 = vmatpush.bf16.xpose.msra.mxu0 0
    %1612 = vmatpush.bf16.xpose.msra.mxu0 0
    %1613 = vmatpush.bf16.xpose.msra.mxu0 0
    %1614 = vmatpush.bf16.xpose.msra.mxu0 0
    %1615 = vmatpush.bf16.xpose.msra.mxu0 0
    %1616 = vmatpush.bf16.xpose.msra.mxu0 0
    %1617 = vmatpush.bf16.xpose.msra.mxu0 0
    %1618 = vmatpush.bf16.xpose.msra.mxu0 %v1609
    %1619 = vmatmul.bf16.gmra.mxu0 %v1585
    %v1620 = vpop.f32.mrf.mxu0
    %v1621 = vadd.f32 %v656, %v1620
    %v1622 = vpop.f32.mrf.mxu0
    %1623 = vdwg.mxu0
    %v1624 = vsel %vm698, %v1600, -inf
    %1625 = vmax.xlane.f32.xlu0 %v1624
    %v1626 = vpop.xlane.xlu0 %1625
    %v1627 = vsel %vm698, %v1621, -inf
    %1628 = vmax.xlane.f32.xlu0 %v1627
    %v1629 = vpop.xlane.xlu0 %1628
    %v1630 = vmax.f32 %v1626, %v1629
    %v1631 = vsub.f32 %v1600, %v1630
    %v1632 = vmul.f32 %v1631, 1.442695
    %v1633 = vpow.pop %v1632
    %v1634 = vsub.f32 %v1621, %v1630
    %v1635 = vmul.f32 %v1634, 1.442695
    %v1636 = vpow.pop %v1635
    %v1637 = vsel %vm698, %v1633, 0.0
    %1638 = vadd.xlane.f32.xlu0 %v1637
    %v1639 = vpop.xlane.xlu0 %1638
    %v1640 = vsel %vm698, %v1636, 0.0
    %1641 = vadd.xlane.f32.xlu0 %v1640
    %v1642 = vpop.xlane.xlu0 %1641
    %v1643 = vadd.f32 %v1639, %v1642
    %v1644 = vpack.c.bf16 %v1633, %v1633
    %v1645 = vpack.c.bf16 %v1636, %v1636
    %1646 = vrot.lane.b32.xlu0 %v1605, 96
    %v1647 = vpop.permute.xlu0 %1646
    %v1649 = vsel %vm698, %v1645, 0
    %v1652 = vsel %vm766, %v1647, 0
    %1654 = vmatpush.bf16.msra.mxu0 0
    %1655 = vmatpush.bf16.msra.mxu0 0
    %1656 = vmatpush.bf16.msra.mxu0 0
    %1657 = vmatpush.bf16.msra.mxu0 0
    %1658 = vmatpush.bf16.msra.mxu0 0
    %1659 = vmatpush.bf16.msra.mxu0 0
    %1660 = vmatpush.bf16.msra.mxu0 0
    %1661 = vmatpush.bf16.msra.mxu0 %v1652
    %1662 = vmatmul.bf16.gmra.mxu0 %v1649
    %v1663 = vpop.f32.mrf.mxu0
    %v1664 = vadd.f32 0.0, %v1663
    %v1665 = vpop.f32.mrf.mxu0
    %1666 = vdwg.mxu0
    %v1668 = vunpack.c.l.b16 %v538
    %v1669 = vpack.c.b16 %v1668, %v1668
    %1670 = vrot.lane.b32.xlu0 %v1669, 112
    %v1671 = vpop.permute.xlu0 %1670
    %v1673 = vsel %vm698, %v1644, 0
    %v1676 = vsel %vm766, %v1671, 0
    %1678 = vmatpush.bf16.msra.mxu0 0
    %1679 = vmatpush.bf16.msra.mxu0 0
    %1680 = vmatpush.bf16.msra.mxu0 0
    %1681 = vmatpush.bf16.msra.mxu0 0
    %1682 = vmatpush.bf16.msra.mxu0 0
    %1683 = vmatpush.bf16.msra.mxu0 0
    %1684 = vmatpush.bf16.msra.mxu0 0
    %1685 = vmatpush.bf16.msra.mxu0 %v1676
    %1686 = vmatmul.bf16.gmra.mxu0 %v1673
    %v1687 = vpop.f32.mrf.mxu0
    %v1688 = vadd.f32 %v1664, %v1687
    %v1689 = vpop.f32.mrf.mxu0
    %1690 = vdwg.mxu0
    %v1691 = vrcp.pop %v1643
    %v1692 = vmul.f32 %v1688, %v1691
    %1693 = vrot.lane.b32.xlu0 %v1605, 120
    %v1694 = vpop.permute.xlu0 %1693
    %1695 = vrot.lane.b32.xlu0 %v1669, 120
    %v1696 = vpop.permute.xlu0 %1695
    %v1698 = vsel %vm698, %v1694, 0
    %v1701 = vsel %vm698, %v1696, 0
    %1703 = vmatpush.bf16.xpose.msra.mxu0 0
    %1704 = vmatpush.bf16.xpose.msra.mxu0 0
    %1705 = vmatpush.bf16.xpose.msra.mxu0 0
    %1706 = vmatpush.bf16.xpose.msra.mxu0 0
    %1707 = vmatpush.bf16.xpose.msra.mxu0 0
    %1708 = vmatpush.bf16.xpose.msra.mxu0 0
    %1709 = vmatpush.bf16.xpose.msra.mxu0 0
    %1710 = vmatpush.bf16.xpose.msra.mxu0 %v1701
    %1711 = vmatmul.bf16.gmra.mxu0 %v1698
    %v1712 = vpop.f32.mrf.mxu0
    %v1713 = vadd.f32 %v921, %v1712
    %v1714 = vpop.f32.mrf.mxu0
    %1715 = vdwg.mxu0
    %1716 = vrot.lane.b32.xlu0 %v1605, 104
    %v1717 = vpop.permute.xlu0 %1716
    %v1719 = vsel %vm698, %v1717, 0
    %1721 = vmatpush.bf16.xpose.msra.mxu0 0
    %1722 = vmatpush.bf16.xpose.msra.mxu0 0
    %1723 = vmatpush.bf16.xpose.msra.mxu0 0
    %1724 = vmatpush.bf16.xpose.msra.mxu0 0
    %1725 = vmatpush.bf16.xpose.msra.mxu0 0
    %1726 = vmatpush.bf16.xpose.msra.mxu0 0
    %1727 = vmatpush.bf16.xpose.msra.mxu0 0
    %1728 = vmatpush.bf16.xpose.msra.mxu0 %v1719
    %1729 = vmatmul.bf16.gmra.mxu0 %v1698
    %v1730 = vpop.f32.mrf.mxu0
    %v1731 = vadd.f32 %v656, %v1730
    %v1732 = vpop.f32.mrf.mxu0
    %1733 = vdwg.mxu0
    %v1734 = vsel %vm698, %v1713, -inf
    %1735 = vmax.xlane.f32.xlu0 %v1734
    %v1736 = vpop.xlane.xlu0 %1735
    %v1737 = vsel %vm698, %v1731, -inf
    %1738 = vmax.xlane.f32.xlu0 %v1737
    %v1739 = vpop.xlane.xlu0 %1738
    %v1740 = vmax.f32 %v1736, %v1739
    %v1741 = vsub.f32 %v1713, %v1740
    %v1742 = vmul.f32 %v1741, 1.442695
    %v1743 = vpow.pop %v1742
    %v1744 = vsub.f32 %v1731, %v1740
    %v1745 = vmul.f32 %v1744, 1.442695
    %v1746 = vpow.pop %v1745
    %v1747 = vsel %vm698, %v1743, 0.0
    %1748 = vadd.xlane.f32.xlu0 %v1747
    %v1749 = vpop.xlane.xlu0 %1748
    %v1750 = vsel %vm698, %v1746, 0.0
    %1751 = vadd.xlane.f32.xlu0 %v1750
    %v1752 = vpop.xlane.xlu0 %1751
    %v1753 = vadd.f32 %v1749, %v1752
    %v1754 = vpack.c.bf16 %v1743, %v1743
    %v1755 = vpack.c.bf16 %v1746, %v1746
    %1756 = vrot.lane.b32.xlu0 %v1605, 88
    %v1757 = vpop.permute.xlu0 %1756
    %v1759 = vsel %vm698, %v1755, 0
    %v1762 = vsel %vm766, %v1757, 0
    %1764 = vmatpush.bf16.msra.mxu0 0
    %1765 = vmatpush.bf16.msra.mxu0 0
    %1766 = vmatpush.bf16.msra.mxu0 0
    %1767 = vmatpush.bf16.msra.mxu0 0
    %1768 = vmatpush.bf16.msra.mxu0 0
    %1769 = vmatpush.bf16.msra.mxu0 0
    %1770 = vmatpush.bf16.msra.mxu0 0
    %1771 = vmatpush.bf16.msra.mxu0 %v1762
    %1772 = vmatmul.bf16.gmra.mxu0 %v1759
    %v1773 = vpop.f32.mrf.mxu0
    %v1774 = vadd.f32 0.0, %v1773
    %v1775 = vpop.f32.mrf.mxu0
    %1776 = vdwg.mxu0
    %1777 = vrot.lane.b32.xlu0 %v1669, 104
    %v1778 = vpop.permute.xlu0 %1777
    %v1780 = vsel %vm698, %v1754, 0
    %v1783 = vsel %vm766, %v1778, 0
    %1785 = vmatpush.bf16.msra.mxu0 0
    %1786 = vmatpush.bf16.msra.mxu0 0
    %1787 = vmatpush.bf16.msra.mxu0 0
    %1788 = vmatpush.bf16.msra.mxu0 0
    %1789 = vmatpush.bf16.msra.mxu0 0
    %1790 = vmatpush.bf16.msra.mxu0 0
    %1791 = vmatpush.bf16.msra.mxu0 0
    %1792 = vmatpush.bf16.msra.mxu0 %v1783
    %1793 = vmatmul.bf16.gmra.mxu0 %v1780
    %v1794 = vpop.f32.mrf.mxu0
    %v1795 = vadd.f32 %v1774, %v1794
    %v1796 = vpop.f32.mrf.mxu0
    %1797 = vdwg.mxu0
    %v1798 = vrcp.pop %v1753
    %v1799 = vmul.f32 %v1795, %v1798
    %1801 = vrot.lane.b32.xlu0 %v1799, 8
    %v1802 = vpop.permute.xlu0 %1801
    %v1804 = vsel %vm698, %v1692, %v1802
    %v1805 = vpack.c.bf16 %v1804, %v1583
    %s1806 = scalar_lea.vmem %s17, 8
    %v1807 = vld [vmem:[%s1806] sm:$0xf]
    %v1808 = vld [vmem:[%s1806 + $0x4] sm:$0xf]
    %v1811 = vunpack.c.l.b16 %v1807
    %v1812 = vunpack.c.l.b16 %v1808
    %v1813 = vpack.c.b16 %v1812, %v1811
    %v1816 = vsel %vm1152, %v1805, 0
    %1818 = vmatpush.bf16.msra.mxu0 0
    %1819 = vmatpush.bf16.msra.mxu0 0
    %1820 = vmatpush.bf16.msra.mxu0 0
    %1821 = vmatpush.bf16.msra.mxu0 0
    %1822 = vmatpush.bf16.msra.mxu0 0
    %1823 = vmatpush.bf16.msra.mxu0 0
    %1824 = vmatpush.bf16.msra.mxu0 0
    %1825 = vmatpush.bf16.msra.mxu0 %v1813
    %1826 = vmatmul.bf16.gmra.mxu0 %v1816
    %v1827 = vpop.f32.mrf.mxu0
    %v1828 = vadd.f32 0.0, %v1827
    %v1829 = vpop.f32.mrf.mxu0
    %v1830 = vadd.f32 0.0, %v1829
    %1831 = vdwg.mxu0
    %v1832 = vadd.f32 %v1319, %v1828
    %v1833 = vadd.f32 %v1320, %v1830
    %s1834 = scalar_lea.vmem %s18, 1
    %v1835 = vld [vmem:[%s1834] sm:$0x1]
    %v1837 = vperm.slane %v1835, 0
    %v1839 = vadd.f32 %v1832, %v1837
    %v1840 = vadd.f32 %v1833, %v1837
    %v1841 = vpack.c.bf16 %v1840, %v1839
    %s1842 = scalar_lea.vmem %s19, 16
    %v1843 = vld [vmem:[%s1842] sm:$0xf]
    %v1844 = vld [vmem:[%s1842 + $0x4] sm:$0xf]
    %v1845 = vld [vmem:[%s1842 + $0x8] sm:$0xf]
    %v1846 = vld [vmem:[%s1842 + $0xc] sm:$0xf]
    %s1847 = scalar_lea.vmem %s20, 1
    %v1848 = vld [vmem:[%s1847] sm:$0x1]
    %v1850 = vperm.slane %v1848, 0
    %v1856 = vunpack.c.l.b16 %v1843
    %v1857 = vunpack.c.l.b16 %v1844
    %v1858 = vunpack.c.l.b16 %v1845
    %v1859 = vunpack.c.l.b16 %v1846
    %v1860 = vpack.c.b16 %v1857, %v1856
    %v1861 = vpack.c.b16 %v1859, %v1858
    %v1865 = vsel %vm587, %v1841, 0
    %1867 = vmatpush.bf16.msra.mxu0 0
    %1868 = vmatpush.bf16.msra.mxu0 0
    %1869 = vmatpush.bf16.msra.mxu0 0
    %1870 = vmatpush.bf16.msra.mxu0 0
    %1871 = vmatpush.bf16.msra.mxu0 0
    %1872 = vmatpush.bf16.msra.mxu0 0
    %1873 = vmatpush.bf16.msra.mxu0 %v1861
    %1874 = vmatpush.bf16.msra.mxu0 %v1860
    %1875 = vmatmul.bf16.gmra.mxu0 %v1865
    %v1876 = vpop.f32.mrf.mxu0
    %v1877 = vadd.f32 %v1850, %v1876
    %v1878 = vpop.f32.mrf.mxu0
    %v1879 = vadd.f32 %v1850, %v1878
    %1880 = vdwg.mxu0
    %v1881 = vmul.f32 %v1877, %v1877
    %v1882 = vmul.f32 %v1879, %v1879
    %v1883 = vmul.f32 %v1877, %v1881
    %v1884 = vmul.f32 %v1879, %v1882
    %v1885 = vmul.f32 %v1883, 0.044715
    %v1886 = vmul.f32 %v1884, 0.044715
    %v1887 = vadd.f32 %v1877, %v1885
    %v1888 = vadd.f32 %v1879, %v1886
    %v1889 = vmul.f32 %v1887, 0.7978846
    %v1890 = vmul.f32 %v1888, 0.7978846
    %v1891 = vtanh.pop %v1889
    %v1892 = vtanh.pop %v1890
    %v1893 = vadd.f32 %v1891, 1.0
    %v1894 = vadd.f32 %v1892, 1.0
    %v1895 = vmul.f32 %v1893, 0.5
    %v1896 = vmul.f32 %v1894, 0.5
    %v1897 = vmul.f32 %v1877, %v1895
    %v1898 = vmul.f32 %v1879, %v1896
    %v1899 = vpack.c.bf16 %v1898, %v1897
    %s1900 = scalar_lea.vmem %s21, 64
    %v1901 = vld [vmem:[%s1900] sm:$0xf]
    %v1902 = vld [vmem:[%s1900 + $0x4] sm:$0xf]
    %v1903 = vld [vmem:[%s1900 + $0x8] sm:$0xf]
    %v1904 = vld [vmem:[%s1900 + $0xc] sm:$0xf]
    %v1905 = vld [vmem:[%s1900 + $0x10] sm:$0xf]
    %v1906 = vld [vmem:[%s1900 + $0x14] sm:$0xf]
    %v1907 = vld [vmem:[%s1900 + $0x18] sm:$0xf]
    %v1908 = vld [vmem:[%s1900 + $0x1c] sm:$0xf]
    %v1909 = vld [vmem:[%s1900 + $0x20] sm:$0xf]
    %v1910 = vld [vmem:[%s1900 + $0x24] sm:$0xf]
    %v1911 = vld [vmem:[%s1900 + $0x28] sm:$0xf]
    %v1912 = vld [vmem:[%s1900 + $0x2c] sm:$0xf]
    %v1913 = vld [vmem:[%s1900 + $0x30] sm:$0xf]
    %v1914 = vld [vmem:[%s1900 + $0x34] sm:$0xf]
    %v1915 = vld [vmem:[%s1900 + $0x38] sm:$0xf]
    %v1916 = vld [vmem:[%s1900 + $0x3c] sm:$0xf]
    %v1933 = vunpack.c.l.b16 %v1901
    %v1934 = vunpack.c.l.b16 %v1902
    %v1935 = vunpack.c.l.b16 %v1903
    %v1936 = vunpack.c.l.b16 %v1904
    %v1937 = vunpack.c.l.b16 %v1905
    %v1938 = vunpack.c.l.b16 %v1906
    %v1939 = vunpack.c.l.b16 %v1907
    %v1940 = vunpack.c.l.b16 %v1908
    %v1941 = vunpack.c.l.b16 %v1909
    %v1942 = vunpack.c.l.b16 %v1910
    %v1943 = vunpack.c.l.b16 %v1911
    %v1944 = vunpack.c.l.b16 %v1912
    %v1945 = vunpack.c.l.b16 %v1913
    %v1946 = vunpack.c.l.b16 %v1914
    %v1947 = vunpack.c.l.b16 %v1915
    %v1948 = vunpack.c.l.b16 %v1916
    %v1949 = vpack.c.b16 %v1934, %v1933
    %v1950 = vpack.c.b16 %v1936, %v1935
    %v1951 = vpack.c.b16 %v1938, %v1937
    %v1952 = vpack.c.b16 %v1940, %v1939
    %v1953 = vpack.c.b16 %v1942, %v1941
    %v1954 = vpack.c.b16 %v1944, %v1943
    %v1955 = vpack.c.b16 %v1946, %v1945
    %v1956 = vpack.c.b16 %v1948, %v1947
    %1965 = vmatpush.bf16.msra.mxu0 %v1956
    %1966 = vmatpush.bf16.msra.mxu0 %v1955
    %1967 = vmatpush.bf16.msra.mxu0 %v1954
    %1968 = vmatpush.bf16.msra.mxu0 %v1953
    %1969 = vmatpush.bf16.msra.mxu0 %v1952
    %1970 = vmatpush.bf16.msra.mxu0 %v1951
    %1971 = vmatpush.bf16.msra.mxu0 %v1950
    %1972 = vmatpush.bf16.msra.mxu0 %v1949
    %1973 = vmatmul.bf16.gmra.mxu0 %v1899
    %v1974 = vpop.f32.mrf.mxu0
    %v1975 = vadd.f32 0.0, %v1974
    %v1976 = vpop.f32.mrf.mxu0
    %v1977 = vadd.f32 0.0, %v1976
    %1978 = vdwg.mxu0
    %v1979 = vadd.f32 %v1839, %v1975
    %v1980 = vadd.f32 %v1840, %v1977
    %s1981 = scalar_lea.vmem %s22, 1
    %v1982 = vld [vmem:[%s1981] sm:$0x1]
    %v1984 = vperm.slane %v1982, 0
    %v1986 = vadd.f32 %v1979, %v1984
    %v1987 = vadd.f32 %v1980, %v1984
    %v1988 = vpack.c.bf16 %v1987, %v1986
    %v1989 = vld [vmem:[%s23] sm:$0xf]
    %v1990 = vld [vmem:[%s23 + $0x4] sm:$0xf]
    %v1991 = vld [vmem:[%s23 + $0x8] sm:$0xf]
    %v1992 = vld [vmem:[%s23 + $0xc] sm:$0xf]
    %v1993 = vld [vmem:[%s24] sm:$0x1]
    %v1995 = vperm.slane %v1993, 0
    %v2001 = vunpack.c.l.b16 %v1989
    %v2002 = vunpack.c.l.b16 %v1990
    %v2003 = vunpack.c.l.b16 %v1991
    %v2004 = vunpack.c.l.b16 %v1992
    %v2005 = vpack.c.b16 %v2002, %v2001
    %v2006 = vpack.c.b16 %v2004, %v2003
    %v2010 = vsel %vm587, %v1988, 0
    %2012 = vmatpush.bf16.msra.mxu0 0
    %2013 = vmatpush.bf16.msra.mxu0 0
    %2014 = vmatpush.bf16.msra.mxu0 0
    %2015 = vmatpush.bf16.msra.mxu0 0
    %2016 = vmatpush.bf16.msra.mxu0 0
    %2017 = vmatpush.bf16.msra.mxu0 0
    %2018 = vmatpush.bf16.msra.mxu0 %v2006
    %2019 = vmatpush.bf16.msra.mxu0 %v2005
    %2020 = vmatmul.bf16.gmra.mxu0 %v2010
    %v2021 = vpop.f32.mrf.mxu0
    %v2022 = vadd.f32 %v1995, %v2021
    %v2023 = vpop.f32.mrf.mxu0
    %v2024 = vadd.f32 %v1995, %v2023
    %2025 = vdwg.mxu0
    %2026 = vst [vmem:[#allocation2] sm:$0xff] %v2022
    %2027 = vst [vmem:[#allocation2 + $0x8] sm:$0xff] %v2024
    %v2028 = vld [vmem:[%s5] sm:$0xff]
    %v2029 = vld [vmem:[%s5 + $0x8] sm:$0xff]
    %2030 = vmax.xlane.f32.xlu0 %v2022
    %v2031 = vpop.xlane.xlu0 %2030
    %2032 = vmax.xlane.f32.xlu0 %v2024
    %v2033 = vpop.xlane.xlu0 %2032
    %v2034 = vsub.f32 %v2022, %v2031
    %v2035 = vsub.f32 %v2024, %v2033
    %v2036 = vmul.f32 %v2034, 1.442695
    %v2037 = vpow.pop %v2036
    %v2038 = vmul.f32 %v2035, 1.442695
    %v2039 = vpow.pop %v2038
    %2040 = vadd.xlane.f32.xlu0 %v2037
    %v2041 = vpop.xlane.xlu0 %2040
    %2042 = vadd.xlane.f32.xlu0 %v2039
    %v2043 = vpop.xlane.xlu0 %2042
    %v2044 = vlog2.pop %v2041
    %v2045 = vmul.f32 %v2044, 0.6931472
    %v2046 = vlog2.pop %v2043
    %v2047 = vmul.f32 %v2046, 0.6931472
    %v2048 = vadd.f32 %v2045, %v2031
    %v2049 = vadd.f32 %v2047, %v2033
    %2050 = vset.pattern.permute.xlu0 0
    %2051 = vperm.xlu0 %2050, %v2028
    %v2052 = vpop.permute.xlu0 %2051
    %2053 = vset.pattern.permute.xlu0 0
    %2054 = vperm.xlu0 %2053, %v2029
    %v2055 = vpop.permute.xlu0 %2054
    %vm2056 = vcmp.eq.s32.totalorder %v86, %v2052
    %vm2057 = vcmp.eq.s32.totalorder %v86, %v2055
    %v2058 = vsel %vm2056, 1, 0
    %v2059 = vsel %vm2057, 1, 0
    %v2060 = vcvt.s32.f32 %v2058
    %v2061 = vcvt.s32.f32 %v2059
    %v2062 = vmul.f32 %v2060, %v2022
    %v2063 = vmul.f32 %v2061, %v2024
    %2064 = vadd.xlane.f32.xlu0 %v2062
    %v2065 = vpop.xlane.xlu0 %2064
    %2066 = vadd.xlane.f32.xlu0 %v2063
    %v2067 = vpop.xlane.xlu0 %2066
    %vm2068 = vcmp.ne.s32.totalorder %v2028, 4294967196
    %vm2069 = vcmp.ne.s32.totalorder %v2029, 4294967196
    %v2070 = vsel %vm2068, 1, 0
    %v2071 = vsel %vm2069, 1, 0
    %v2072 = vcvt.s32.f32 %v2070
    %v2073 = vcvt.s32.f32 %v2071
    %v2074 = vsub.f32 %v2048, %v2065
    %v2075 = vsub.f32 %v2049, %v2067
    %v2076 = vmul.f32 %v2074, %v2072
    %v2077 = vmul.f32 %v2075, %v2073
    %vm2078 = vcmask 7168
    %v2079 = vsel %vm2078, %v2076, 0.0
    %v2080 = vsel %vm2078, %v2077, 0.0
    %v2081 = vadd.f32 %v2079, %v2080
    %2082 = vadd.xlane.f32.xlu0 %v2081
    %v2083 = vpop.xlane.xlu0 %2082
    %v2084 = vrot.slane %v2083, 4
    %v2085 = vadd.f32 %v2083, %v2084
    %v2086 = vrot.slane %v2085, 2
    %v2087 = vadd.f32 %v2085, %v2086
    %v2088 = vrot.slane %v2087, 1
    %v2089 = vadd.f32 %v2087, %v2088
    %s2090 = vtos %v2089
    %v2091 = vstv %s2090
    %v2092 = vsel %vm2078, %v2072, 0.0
    %v2093 = vsel %vm2078, %v2073, 0.0
    %v2094 = vadd.f32 %v2092, %v2093
    %2095 = vadd.xlane.f32.xlu0 %v2094
    %v2096 = vpop.xlane.xlu0 %2095
    %v2097 = vrot.slane %v2096, 4
    %v2098 = vadd.f32 %v2096, %v2097
    %v2099 = vrot.slane %v2098, 2
    %v2100 = vadd.f32 %v2098, %v2099
    %v2101 = vrot.slane %v2100, 1
    %v2102 = vadd.f32 %v2100, %v2101
    %s2103 = vtos %v2102
    %v2104 = vstv %s2103
    %v2105 = vmax.f32 %v2104, 1.0
    %v2106 = vrcp.pop %v2105
    %v2107 = vmul.f32 %v2105, %v2106
    %v2108 = vsub.f32 1.0, %v2107
    %v2109 = vmul.f32 %v2106, %v2108
    %v2110 = vadd.f32 %v2106, %v2109
    %vm2111 = vweird.f32 %v2105
    %vm2112 = vweird.f32 %v2106
    %vm2113 = vmor %vm2111, %vm2112
    %v2114 = vsel %vm2113, %v2106, %v2110
    %v2115 = vand.u32 2147483647, %v2105
    %vm2116 = vcmp.eq.f32.partialorder %v2115, 8.507059e+37
    %v2117 = vand.u32 %v2105, 2147483648
    %v2118 = vor.u32 1.1754944e-38, %v2117
    %v2119 = vsel %vm2116, %v2118, %v2114
    %v2120 = vmul.f32 %v2091, %v2119
    %vm2121 = vcmask 0
    %2122 = vst.msk [vmem:[#allocation4] sm:$0x1] %vm2121, %v2120
    // Predicated region
    $region102: #{tpu_custom_call.1} parent=1 // pred_check
      _
    $region103: #{tpu_custom_call.1} parent=1 // pred_check_branch
      %2124 = sbr.rel (0) target = $region105
    $region104: #{tpu_custom_call.1} parent=1 // pred_region
      %2126 = vsyncadd [#allocation3], 0
      %s2127 = sshll.u32 [#allocation2], 4
      %s2128 = int_to_ptr.vmem [resolvable:$true] %s2127
      %s2129 = sshll.u32 %s25, 4
      %s2130 = int_to_ptr.hbm [resolvable:$true] %s2129
      %2135 = dma.vmem_to_hbm [thread:$0]  %s2128, 256, %s2130, [#allocation3], 128, 128, 8
    $region105: #{tpu_custom_call.1} parent=1 // pred_fallthru
      _
    // Predicated region
    $region106: #{tpu_custom_call.1} parent=1 // pred_check
      _
    $region107: #{tpu_custom_call.1} parent=1 // pred_check_branch
      %2137 = sbr.rel (0) target = $region109
    $region108: #{tpu_custom_call.1} parent=1 // pred_region
      %2139 = vsyncadd [#allocation5], 0
      %s2141 = sshll.u32 [#allocation4], 4
      %s2142 = int_to_ptr.vmem [resolvable:$true] %s2141
      %s2143 = sshll.u32 %s26, 4
      %s2144 = int_to_ptr.hbm [resolvable:$true] %s2143
      %2146 = dma.vmem_to_hbm [thread:$0]  %s2142, 16, %s2144, [#allocation5]
    $region109: #{tpu_custom_call.1} parent=1 // pred_fallthru
      _
    // Predicated region
    $region110: #{tpu_custom_call.1} parent=1 // pred_check
      _
    $region111: #{tpu_custom_call.1} parent=1 // pred_check_branch
      %2148 = sbr.rel (0) target = $region113
    $region112: #{tpu_custom_call.1} parent=1 // pred_region
      %2150 = dma.done [#allocation3], 256
    $region113: #{tpu_custom_call.1} parent=1 // pred_fallthru
      _
    // Predicated region
    $region114: #{tpu_custom_call.1} parent=1 // pred_check
      _
    $region115: #{tpu_custom_call.1} parent=1 // pred_check_branch
      %2152 = sbr.rel (0) target = $region117
    $region116: #{tpu_custom_call.1} parent=1 // pred_region
      %2154 = dma.done [#allocation5], 16
    $region117: #{tpu_custom_call.1} parent=1 // pred_fallthru
      _
    %2155 = vsyncpa [#allocation3], 1
    %2156 = vsyncpa [#allocation5], 1

</llo_original>
